<compile_context>
chip_gen: v7x
topology: tpu7x:2x2x1
jax: 0.10.0
libtpu: 0.0.40
codegen_flags: <defaults>
</compile_context>

<pallas_src>
import math

import jax
import jax.numpy as jnp
import numpy as np
from jax.experimental import pallas as pl
from jax.experimental.pallas import tpu as pltpu

# ----------------------------- tiny synthetic BERT config -----------------------------
# Lane-dense sizes (multiples of 128 where it matters) per the perf review.
VOCAB, TYPE_VOCAB = 100, 2
B, S, H, NH, INTER, LAYERS = 2, 128, 128, 2, 512, 2
MAX_POS = S
HEAD_DIM = H // NH          # 64  (half a vreg lane width)
EPS = 1e-12                 # BERT LayerNorm eps


# ----------------------------- shared math (used in-kernel) ---------------------------
def _layernorm(x, g, b):
    mu = jnp.mean(x, axis=-1, keepdims=True)
    var = jnp.mean((x - mu) ** 2, axis=-1, keepdims=True)
    return (x - mu) * jax.lax.rsqrt(var + EPS) * g + b


def _gelu(x):
    # tanh-approx GELU (lowers to EUP tanh); matches exact-erf GELU to <1e-3.
    c = math.sqrt(2.0 / math.pi)
    return 0.5 * x * (1.0 + jnp.tanh(c * (x + 0.044715 * x * x * x)))


# ----------------------------------- fused Pallas kernel ------------------------------
def fused_bert_kernel(emb_ref, bias_ref, eg_ref, eb_ref,
                      wqkv_ref, bqkv_ref, wo_ref, bo_ref, g1_ref, be1_ref,
                      wi_ref, bi_ref, w2_ref, b2_ref, g2_ref, be2_ref,
                      pw_ref, pb_ref,
                      pooled_ref, hid_ref):
    """Grid = (batch, layer).  hid_ref is the VMEM-resident hidden state (S, H) f32."""
    l = pl.program_id(1)

    # ---- layer 0: embedding LayerNorm initializes the resident hidden state ----------
    @pl.when(l == 0)
    def _init():
        hid_ref[...] = _layernorm(emb_ref[...], eg_ref[...], eb_ref[...])

    x = hid_ref[...]                         # (S, H) f32, never leaves VMEM
    x_bf = x.astype(jnp.bfloat16)
    bias = bias_ref[...]                     # (1, S) additive key mask (f32)

    # ---- fused Q|K|V projection: one lane-dense (S,H)x(H,3H) bf16 MXU pass ------------
    qkv = jnp.dot(x_bf, wqkv_ref[...],
                  preferred_element_type=jnp.float32) + bqkv_ref[...]
    q, k, v = qkv[:, :H], qkv[:, H:2 * H], qkv[:, 2 * H:]

    # ---- multi-head self-attention (static unroll over NH=2 half-vreg head slices) ----
    scale = 1.0 / math.sqrt(HEAD_DIM)
    ctx_parts = []
    for h in range(NH):
        sl = slice(h * HEAD_DIM, (h + 1) * HEAD_DIM)
        qh = q[:, sl].astype(jnp.bfloat16)
        kh = k[:, sl].astype(jnp.bfloat16)
        vh = v[:, sl].astype(jnp.bfloat16)
        s = jnp.einsum('qd,kd->qk', qh, kh,
                       preferred_element_type=jnp.float32) * scale + bias
        s = s - jnp.max(s, axis=-1, keepdims=True)
        p = jnp.exp(s)
        p = p * pl.reciprocal(jnp.sum(p, axis=-1, keepdims=True), approx=True)
        ctx_parts.append(jnp.dot(p.astype(jnp.bfloat16), vh,
                                 preferred_element_type=jnp.float32))
    ctx = jnp.concatenate(ctx_parts, axis=-1)            # (S, H) f32

    attn = jnp.dot(ctx.astype(jnp.bfloat16), wo_ref[...],
                   preferred_element_type=jnp.float32) + bo_ref[...]
    x1 = _layernorm(x + attn, g1_ref[...], be1_ref[...])

    # ---- FFN --------------------------------------------------------------------------
    inter = _gelu(jnp.dot(x1.astype(jnp.bfloat16), wi_ref[...],
                          preferred_element_type=jnp.float32) + bi_ref[...])
    ffn = jnp.dot(inter.astype(jnp.bfloat16), w2_ref[...],
                  preferred_element_type=jnp.float32) + b2_ref[...]
    x_out = _layernorm(x1 + ffn, g2_ref[...], be2_ref[...])
    hid_ref[...] = x_out

    # ---- pooler: tanh(CLS @ W + b), only on the last layer (hidden stays in VMEM) -----
    @pl.when(l == pl.num_programs(1) - 1)
    def _pool():
        cls = x_out[0:1, :].astype(jnp.bfloat16)         # (1, H) CLS row
        pooled_ref[...] = jnp.tanh(
            jnp.dot(cls, pw_ref[...], preferred_element_type=jnp.float32) + pb_ref[...])


# ------------------------------ parameters (deterministic) -----------------------------
def init_params(key):
    def normal(k, shape, scale=0.02):
        return scale * jax.random.normal(k, shape, dtype=jnp.float32)

    ks = jax.random.split(key, 16)
    return {
        'word_emb': normal(ks[0], (VOCAB, H)),
        'pos_emb': normal(ks[1], (MAX_POS, H)),
        'type_emb': normal(ks[2], (TYPE_VOCAB, H)),
        'emb_ln_g': jnp.ones((1, H), jnp.float32),
        'emb_ln_b': normal(ks[3], (1, H)),
        # stacked per-layer weights, bf16 (MXU-native), [LAYERS, in, out]
        'wqkv': normal(ks[4], (LAYERS, H, 3 * H)).astype(jnp.bfloat16),
        'bqkv': normal(ks[5], (LAYERS, 1, 3 * H)),
        'wo':   normal(ks[6], (LAYERS, H, H)).astype(jnp.bfloat16),
        'bo':   normal(ks[7], (LAYERS, 1, H)),
        'ln1_g': jnp.ones((LAYERS, 1, H), jnp.float32),
        'ln1_b': normal(ks[8], (LAYERS, 1, H)),
        'wi':   normal(ks[9], (LAYERS, H, INTER)).astype(jnp.bfloat16),
        'bi':   normal(ks[10], (LAYERS, 1, INTER)),
        'w2':   normal(ks[11], (LAYERS, INTER, H)).astype(jnp.bfloat16),
        'b2':   normal(ks[12], (LAYERS, 1, H)),
        'ln2_g': jnp.ones((LAYERS, 1, H), jnp.float32),
        'ln2_b': normal(ks[13], (LAYERS, 1, H)),
        'pool_w': normal(ks[14], (H, H)).astype(jnp.bfloat16),
        'pool_b': normal(ks[15], (1, H)),
    }


# ------------------------------------ forward pass -------------------------------------
@jax.jit
def sent_bert_forward(params, input_ids, attention_mask, token_type_ids):
    # Embedding gather is glue (plain JAX); everything else runs inside one fused kernel.
    pos_ids = jnp.arange(S, dtype=jnp.int32)
    emb = (params['word_emb'][input_ids]
           + params['pos_emb'][pos_ids][None, :, :]
           + params['type_emb'][token_type_ids])                       # (B, S, H) f32
    # HF-style extended attention mask: (B, 1, S) additive, -10000 on padding.
    bias = (1.0 - attention_mask.astype(jnp.float32))[:, None, :] * -10000.0

    def bspec(*rest):     # batch-indexed, constant across the layer axis (no re-DMA)
        z = (0,) * len(rest)
        return pl.BlockSpec((None,) + rest, lambda b, l, z=z: (b,) + z)

    def lspec(*rest):     # layer-indexed (double-buffered weight pipeline)
        z = (0,) * len(rest)
        return pl.BlockSpec((None,) + rest, lambda b, l, z=z: (l,) + z)

    def cspec(*shape):    # shared across all grid points
        z = (0,) * len(shape)
        return pl.BlockSpec(shape, lambda b, l, z=z: z)

    grid_spec = pltpu.PrefetchScalarGridSpec(
        num_scalar_prefetch=0,
        grid=(B, LAYERS),
        in_specs=[
            bspec(S, H),            # emb
            bspec(1, S),            # attention bias
            cspec(1, H), cspec(1, H),             # emb LN gamma/beta
            lspec(H, 3 * H), lspec(1, 3 * H),     # wqkv, bqkv
            lspec(H, H), lspec(1, H),             # wo, bo
            lspec(1, H), lspec(1, H),             # ln1 gamma/beta
            lspec(H, INTER), lspec(1, INTER),     # wi, bi
            lspec(INTER, H), lspec(1, H),         # w2, b2
            lspec(1, H), lspec(1, H),             # ln2 gamma/beta
            cspec(H, H), cspec(1, H),             # pooler w, b
        ],
        out_specs=pl.BlockSpec((None, 1, H), lambda b, l: (b, 0, 0)),
        scratch_shapes=[pltpu.VMEM((S, H), jnp.float32)],   # resident hidden state
    )

    pooled = pl.pallas_call(
        fused_bert_kernel,
        out_shape=jax.ShapeDtypeStruct((B, 1, H), jnp.float32),
        grid_spec=grid_spec,
        compiler_params=pltpu.CompilerParams(
            dimension_semantics=("parallel", "arbitrary"),   # batch parallel (v7x 2-TC)
            vmem_limit_bytes=32 * 1024 * 1024,
        ),
    )(emb, bias,
      params['emb_ln_g'], params['emb_ln_b'],
      params['wqkv'], params['bqkv'],
      params['wo'], params['bo'], params['ln1_g'], params['ln1_b'],
      params['wi'], params['bi'], params['w2'], params['b2'],
      params['ln2_g'], params['ln2_b'],
      params['pool_w'], params['pool_b'])
    return pooled[:, 0, :]                                  # (B, H) pooler_output


# ------------------------------- pure-JAX reference check ------------------------------
def sent_bert_reference(params, input_ids, attention_mask, token_type_ids):
    pos_ids = jnp.arange(S, dtype=jnp.int32)
    x = (params['word_emb'][input_ids]
         + params['pos_emb'][pos_ids][None, :, :]
         + params['type_emb'][token_type_ids])
    x = _layernorm(x, params['emb_ln_g'], params['emb_ln_b'])
    bias = (1.0 - attention_mask.astype(jnp.float32))[:, None, :] * -10000.0
    for li in range(LAYERS):
        xb = x.astype(jnp.bfloat16)
        qkv = jnp.einsum('bsh,hd->bsd', xb, params['wqkv'][li],
                         preferred_element_type=jnp.float32) + params['bqkv'][li]
        q, k, v = qkv[..., :H], qkv[..., H:2 * H], qkv[..., 2 * H:]
        parts = []
        for h in range(NH):
            sl = slice(h * HEAD_DIM, (h + 1) * HEAD_DIM)
            s = jnp.einsum('bqd,bkd->bqk',
                           q[..., sl].astype(jnp.bfloat16),
                           k[..., sl].astype(jnp.bfloat16),
                           preferred_element_type=jnp.float32) / math.sqrt(HEAD_DIM) + bias
            p = jax.nn.softmax(s, axis=-1)
            parts.append(jnp.einsum('bqk,bkd->bqd', p.astype(jnp.bfloat16),
                                    v[..., sl].astype(jnp.bfloat16),
                                    preferred_element_type=jnp.float32))
        ctx = jnp.concatenate(parts, axis=-1)
        attn = jnp.einsum('bsh,hd->bsd', ctx.astype(jnp.bfloat16), params['wo'][li],
                          preferred_element_type=jnp.float32) + params['bo'][li]
        x1 = _layernorm(x + attn, params['ln1_g'][li], params['ln1_b'][li])
        inter = _gelu(jnp.einsum('bsh,hi->bsi', x1.astype(jnp.bfloat16), params['wi'][li],
                                 preferred_element_type=jnp.float32) + params['bi'][li])
        ffn = jnp.einsum('bsi,ih->bsh', inter.astype(jnp.bfloat16), params['w2'][li],
                         preferred_element_type=jnp.float32) + params['b2'][li]
        x = _layernorm(x1 + ffn, params['ln2_g'][li], params['ln2_b'][li])
    cls = x[:, 0, :].astype(jnp.bfloat16)
    return jnp.tanh(jnp.dot(cls, params['pool_w'],
                            preferred_element_type=jnp.float32) + params['pool_b'])


# ----------------------------------------- main -----------------------------------------
if __name__ == "__main__":
    key = jax.random.PRNGKey(0)
    pkey, ikey = jax.random.split(key)
    params = init_params(pkey)

    # Deterministic "tokenized batch" (what text_to_batch_transformer would emit).
    input_ids = jax.random.randint(ikey, (B, S), 1, VOCAB, dtype=jnp.int32)
    lengths = jnp.array([S, S - 32], dtype=jnp.int32)          # second sequence is shorter
    attention_mask = (jnp.arange(S)[None, :] < lengths[:, None]).astype(jnp.int32)
    token_type_ids = jnp.zeros((B, S), dtype=jnp.int32)
    input_ids = input_ids * attention_mask                     # zero-pad ids where masked

    pooled = sent_bert_forward(params, input_ids, attention_mask, token_type_ids)
    pooled = jax.block_until_ready(pooled)

    ref = sent_bert_reference(params, input_ids, attention_mask, token_type_ids)
    # bf16 matmuls + approx softmax reciprocal -> slightly loosened tolerance.
    np.testing.assert_allclose(np.asarray(pooled), np.asarray(ref), rtol=2e-2, atol=5e-3)

    print("KERNEL_OK")
</pallas_src>

<mosaic_0001>
module attributes {stable_mosaic.version = 11 : i64} {
  func.func @fused_bert_kernel(%arg0: i32, %arg1: i32, %arg2: memref<1x128x128xf32, #tpu.memory_space<vmem>>, %arg3: memref<1x1x128xf32, #tpu.memory_space<vmem>>, %arg4: memref<1x128xf32, #tpu.memory_space<vmem>>, %arg5: memref<1x128xf32, #tpu.memory_space<vmem>>, %arg6: memref<1x128x384xbf16, #tpu.memory_space<vmem>>, %arg7: memref<1x1x384xf32, #tpu.memory_space<vmem>>, %arg8: memref<1x128x128xbf16, #tpu.memory_space<vmem>>, %arg9: memref<1x1x128xf32, #tpu.memory_space<vmem>>, %arg10: memref<1x1x128xf32, #tpu.memory_space<vmem>>, %arg11: memref<1x1x128xf32, #tpu.memory_space<vmem>>, %arg12: memref<1x128x512xbf16, #tpu.memory_space<vmem>>, %arg13: memref<1x1x512xf32, #tpu.memory_space<vmem>>, %arg14: memref<1x512x128xbf16, #tpu.memory_space<vmem>>, %arg15: memref<1x1x128xf32, #tpu.memory_space<vmem>>, %arg16: memref<1x1x128xf32, #tpu.memory_space<vmem>>, %arg17: memref<1x1x128xf32, #tpu.memory_space<vmem>>, %arg18: memref<128x128xbf16, #tpu.memory_space<vmem>>, %arg19: memref<1x128xf32, #tpu.memory_space<vmem>>, %arg20: memref<1x1x128xf32, #tpu.memory_space<vmem>>, %arg21: memref<128x128xf32, #tpu.memory_space<vmem>>) attributes {dimension_semantics = [#tpu.dimension_semantics<parallel>, #tpu.dimension_semantics<arbitrary>], iteration_bounds = array<i64: 2, 2>, scalar_prefetch = 0 : i64, scratch_operands = 1 : i64, tpu.core_type = #tpu.core_type<tc>, window_params = [{transform_indices = @transform_0, window_bounds = array<i64: 1, 128, 128>}, {transform_indices = @transform_1, window_bounds = array<i64: 1, 1, 128>}, {pipeline_mode = #tpu.pipeline_mode<synchronous>, transform_indices = @transform_2, window_bounds = array<i64: 1, 128>}, {pipeline_mode = #tpu.pipeline_mode<synchronous>, transform_indices = @transform_3, window_bounds = array<i64: 1, 128>}, {transform_indices = @transform_4, window_bounds = array<i64: 1, 128, 384>}, {transform_indices = @transform_5, window_bounds = array<i64: 1, 1, 384>}, {transform_indices = @transform_6, window_bounds = array<i64: 1, 128, 128>}, {transform_indices = @transform_7, window_bounds = array<i64: 1, 1, 128>}, {transform_indices = @transform_8, window_bounds = array<i64: 1, 1, 128>}, {transform_indices = @transform_9, window_bounds = array<i64: 1, 1, 128>}, {transform_indices = @transform_10, window_bounds = array<i64: 1, 128, 512>}, {transform_indices = @transform_11, window_bounds = array<i64: 1, 1, 512>}, {transform_indices = @transform_12, window_bounds = array<i64: 1, 512, 128>}, {transform_indices = @transform_13, window_bounds = array<i64: 1, 1, 128>}, {transform_indices = @transform_14, window_bounds = array<i64: 1, 1, 128>}, {transform_indices = @transform_15, window_bounds = array<i64: 1, 1, 128>}, {pipeline_mode = #tpu.pipeline_mode<synchronous>, transform_indices = @transform_16, window_bounds = array<i64: 128, 128>}, {pipeline_mode = #tpu.pipeline_mode<synchronous>, transform_indices = @transform_17, window_bounds = array<i64: 1, 128>}, {transform_indices = @transform_18, window_bounds = array<i64: 1, 1, 128>}]} {
    %c0_i32 = arith.constant 0 : i32
    %0 = arith.cmpi eq, %arg1, %c0_i32 : i32
    %1 = arith.extui %0 : i1 to i32
    %c0_i32_0 = arith.constant 0 : i32
    %2 = arith.cmpi ne, %1, %c0_i32_0 : i32
    scf.if %2 {
      %c0_71 = arith.constant 0 : index
      %c0_72 = arith.constant 0 : index
      %c0_73 = arith.constant 0 : index
      %159 = vector.load %arg2[%c0_71, %c0_72, %c0_73] : memref<1x128x128xf32, #tpu.memory_space<vmem>>, vector<1x128x128xf32>
      %160 = vector.shape_cast %159 : vector<1x128x128xf32> to vector<128x128xf32>
      %c0_74 = arith.constant 0 : index
      %c0_75 = arith.constant 0 : index
      %161 = vector.load %arg4[%c0_74, %c0_75] : memref<1x128xf32, #tpu.memory_space<vmem>>, vector<1x128xf32>
      %c0_76 = arith.constant 0 : index
      %c0_77 = arith.constant 0 : index
      %162 = vector.load %arg5[%c0_76, %c0_77] : memref<1x128xf32, #tpu.memory_space<vmem>>, vector<1x128xf32>
      %cst_78 = arith.constant dense<0.000000e+00> : vector<128xf32>
      %163 = vector.multi_reduction <add>, %160, %cst_78 [1] : vector<128x128xf32> to vector<128xf32>
      %164 = vector.shape_cast %163 : vector<128xf32> to vector<128x1xf32>
      %cst_79 = arith.constant 1.280000e+02 : f32
      %165 = vector.broadcast %cst_79 : f32 to vector<128x1xf32>
      %166 = arith.divf %164, %165 : vector<128x1xf32>
      %167 = vector.broadcast %166 : vector<128x1xf32> to vector<128x128xf32>
      %168 = arith.subf %160, %167 : vector<128x128xf32>
      %169 = arith.mulf %168, %168 : vector<128x128xf32>
      %cst_80 = arith.constant dense<0.000000e+00> : vector<128xf32>
      %170 = vector.multi_reduction <add>, %169, %cst_80 [1] : vector<128x128xf32> to vector<128xf32>
      %171 = vector.shape_cast %170 : vector<128xf32> to vector<128x1xf32>
      %cst_81 = arith.constant 1.280000e+02 : f32
      %172 = vector.broadcast %cst_81 : f32 to vector<128x1xf32>
      %173 = arith.divf %171, %172 : vector<128x1xf32>
      %174 = vector.broadcast %166 : vector<128x1xf32> to vector<128x128xf32>
      %175 = arith.subf %160, %174 : vector<128x128xf32>
      %cst_82 = arith.constant 9.99999996E-13 : f32
      %176 = vector.broadcast %cst_82 : f32 to vector<128x1xf32>
      %177 = arith.addf %173, %176 : vector<128x1xf32>
      %178 = math.rsqrt %177 : vector<128x1xf32>
      %179 = vector.broadcast %178 : vector<128x1xf32> to vector<128x128xf32>
      %180 = arith.mulf %175, %179 : vector<128x128xf32>
      %181 = vector.broadcast %161 : vector<1x128xf32> to vector<128x128xf32>
      %182 = arith.mulf %180, %181 : vector<128x128xf32>
      %183 = vector.broadcast %162 : vector<1x128xf32> to vector<128x128xf32>
      %184 = arith.addf %182, %183 : vector<128x128xf32>
      %c0_83 = arith.constant 0 : index
      %c0_84 = arith.constant 0 : index
      %185 = vector.load %arg21[%c0_83, %c0_84] : memref<128x128xf32, #tpu.memory_space<vmem>>, vector<128x128xf32>
      tpu.vector_store %arg21[%c0_83, %c0_84], %184 {strides = array<i32>} : memref<128x128xf32, #tpu.memory_space<vmem>>, vector<128x128xf32>,
    } else {
    }
    %c0 = arith.constant 0 : index
    %c0_1 = arith.constant 0 : index
    %3 = vector.load %arg21[%c0, %c0_1] : memref<128x128xf32, #tpu.memory_space<vmem>>, vector<128x128xf32>
    %4 = arith.truncf %3 : vector<128x128xf32> to vector<128x128xbf16>
    %c0_2 = arith.constant 0 : index
    %c0_3 = arith.constant 0 : index
    %c0_4 = arith.constant 0 : index
    %5 = vector.load %arg3[%c0_2, %c0_3, %c0_4] : memref<1x1x128xf32, #tpu.memory_space<vmem>>, vector<1x1x128xf32>
    %6 = vector.shape_cast %5 : vector<1x1x128xf32> to vector<1x128xf32>
    %c0_5 = arith.constant 0 : index
    %c0_6 = arith.constant 0 : index
    %c0_7 = arith.constant 0 : index
    %7 = vector.load %arg6[%c0_5, %c0_6, %c0_7] : memref<1x128x384xbf16, #tpu.memory_space<vmem>>, vector<1x128x384xbf16>
    %8 = vector.shape_cast %7 : vector<1x128x384xbf16> to vector<128x384xbf16>
    %cst = arith.constant dense<0.000000e+00> : vector<128x384xf32>
    %9 = tpu.matmul %4, %8, %cst {dimension_numbers = #tpu.dot_dimension_numbers<[1], [0], [0], [1], [0, 0, 1, 1], [], []>} : vector<128x128xbf16>, vector<128x384xbf16>, vector<128x384xf32> -> vector<128x384xf32>
    %c0_8 = arith.constant 0 : index
    %c0_9 = arith.constant 0 : index
    %c0_10 = arith.constant 0 : index
    %10 = vector.load %arg7[%c0_8, %c0_9, %c0_10] : memref<1x1x384xf32, #tpu.memory_space<vmem>>, vector<1x1x384xf32>
    %11 = vector.shape_cast %10 : vector<1x1x384xf32> to vector<1x384xf32>
    %12 = vector.broadcast %11 : vector<1x384xf32> to vector<128x384xf32>
    %13 = arith.addf %9, %12 : vector<128x384xf32>
    %14 = vector.extract_strided_slice %13 {offsets = [0, 0], sizes = [128, 128], strides = [1, 1]} : vector<128x384xf32> to vector<128x128xf32>
    %15 = vector.extract_strided_slice %13 {offsets = [0, 128], sizes = [128, 128], strides = [1, 1]} : vector<128x384xf32> to vector<128x128xf32>
    %16 = vector.extract_strided_slice %13 {offsets = [0, 256], sizes = [128, 128], strides = [1, 1]} : vector<128x384xf32> to vector<128x128xf32>
    %17 = vector.extract_strided_slice %14 {offsets = [0, 0], sizes = [128, 64], strides = [1, 1]} : vector<128x128xf32> to vector<128x64xf32>
    %18 = arith.truncf %17 : vector<128x64xf32> to vector<128x64xbf16>
    %19 = vector.extract_strided_slice %15 {offsets = [0, 0], sizes = [128, 64], strides = [1, 1]} : vector<128x128xf32> to vector<128x64xf32>
    %20 = arith.truncf %19 : vector<128x64xf32> to vector<128x64xbf16>
    %21 = vector.extract_strided_slice %16 {offsets = [0, 0], sizes = [128, 64], strides = [1, 1]} : vector<128x128xf32> to vector<128x64xf32>
    %22 = arith.truncf %21 : vector<128x64xf32> to vector<128x64xbf16>
    "tpu.trace_start"() <{level = 10 : i32, message = "qd,kd->qk"}> : () -> ()
    %cst_11 = arith.constant dense<0.000000e+00> : vector<128x128xf32>
    %23 = tpu.matmul %18, %20, %cst_11 {dimension_numbers = #tpu.dot_dimension_numbers<[1], [1], [0], [0], [0, 0, 1, 0], [], []>} : vector<128x64xbf16>, vector<128x64xbf16>, vector<128x128xf32> -> vector<128x128xf32>
    "tpu.trace_stop"() : () -> ()
    %cst_12 = arith.constant 1.250000e-01 : f32
    %24 = vector.broadcast %cst_12 : f32 to vector<128x128xf32>
    %25 = arith.mulf %23, %24 : vector<128x128xf32>
    %26 = vector.broadcast %6 : vector<1x128xf32> to vector<128x128xf32>
    %27 = arith.addf %25, %26 : vector<128x128xf32>
    %cst_13 = arith.constant dense<0xFF800000> : vector<128xf32>
    %28 = vector.multi_reduction <maximumf>, %27, %cst_13 [1] : vector<128x128xf32> to vector<128xf32>
    %29 = vector.shape_cast %28 : vector<128xf32> to vector<128x1xf32>
    %30 = vector.broadcast %29 : vector<128x1xf32> to vector<128x128xf32>
    %31 = arith.subf %27, %30 : vector<128x128xf32>
    %32 = math.exp %31 : vector<128x128xf32>
    %cst_14 = arith.constant dense<0.000000e+00> : vector<128xf32>
    %33 = vector.multi_reduction <add>, %32, %cst_14 [1] : vector<128x128xf32> to vector<128xf32>
    %34 = vector.shape_cast %33 : vector<128xf32> to vector<128x1xf32>
    %35 = tpu.reciprocal %34 {approx = true} : vector<128x1xf32> -> vector<128x1xf32>
    %36 = vector.broadcast %35 : vector<128x1xf32> to vector<128x128xf32>
    %37 = arith.mulf %32, %36 : vector<128x128xf32>
    %38 = arith.truncf %37 : vector<128x128xf32> to vector<128x128xbf16>
    %cst_15 = arith.constant dense<0.000000e+00> : vector<128x64xf32>
    %39 = tpu.matmul %38, %22, %cst_15 {dimension_numbers = #tpu.dot_dimension_numbers<[1], [0], [0], [1], [0, 0, 1, 1], [], []>} : vector<128x128xbf16>, vector<128x64xbf16>, vector<128x64xf32> -> vector<128x64xf32>
    %40 = vector.extract_strided_slice %14 {offsets = [0, 64], sizes = [128, 64], strides = [1, 1]} : vector<128x128xf32> to vector<128x64xf32>
    %41 = arith.truncf %40 : vector<128x64xf32> to vector<128x64xbf16>
    %42 = vector.extract_strided_slice %15 {offsets = [0, 64], sizes = [128, 64], strides = [1, 1]} : vector<128x128xf32> to vector<128x64xf32>
    %43 = arith.truncf %42 : vector<128x64xf32> to vector<128x64xbf16>
    %44 = vector.extract_strided_slice %16 {offsets = [0, 64], sizes = [128, 64], strides = [1, 1]} : vector<128x128xf32> to vector<128x64xf32>
    %45 = arith.truncf %44 : vector<128x64xf32> to vector<128x64xbf16>
    "tpu.trace_start"() <{level = 10 : i32, message = "qd,kd->qk"}> : () -> ()
    %cst_16 = arith.constant dense<0.000000e+00> : vector<128x128xf32>
    %46 = tpu.matmul %41, %43, %cst_16 {dimension_numbers = #tpu.dot_dimension_numbers<[1], [1], [0], [0], [0, 0, 1, 0], [], []>} : vector<128x64xbf16>, vector<128x64xbf16>, vector<128x128xf32> -> vector<128x128xf32>
    "tpu.trace_stop"() : () -> ()
    %cst_17 = arith.constant 1.250000e-01 : f32
    %47 = vector.broadcast %cst_17 : f32 to vector<128x128xf32>
    %48 = arith.mulf %46, %47 : vector<128x128xf32>
    %49 = vector.broadcast %6 : vector<1x128xf32> to vector<128x128xf32>
    %50 = arith.addf %48, %49 : vector<128x128xf32>
    %cst_18 = arith.constant dense<0xFF800000> : vector<128xf32>
    %51 = vector.multi_reduction <maximumf>, %50, %cst_18 [1] : vector<128x128xf32> to vector<128xf32>
    %52 = vector.shape_cast %51 : vector<128xf32> to vector<128x1xf32>
    %53 = vector.broadcast %52 : vector<128x1xf32> to vector<128x128xf32>
    %54 = arith.subf %50, %53 : vector<128x128xf32>
    %55 = math.exp %54 : vector<128x128xf32>
    %cst_19 = arith.constant dense<0.000000e+00> : vector<128xf32>
    %56 = vector.multi_reduction <add>, %55, %cst_19 [1] : vector<128x128xf32> to vector<128xf32>
    %57 = vector.shape_cast %56 : vector<128xf32> to vector<128x1xf32>
    %58 = tpu.reciprocal %57 {approx = true} : vector<128x1xf32> -> vector<128x1xf32>
    %59 = vector.broadcast %58 : vector<128x1xf32> to vector<128x128xf32>
    %60 = arith.mulf %55, %59 : vector<128x128xf32>
    %61 = arith.truncf %60 : vector<128x128xf32> to vector<128x128xbf16>
    %cst_20 = arith.constant dense<0.000000e+00> : vector<128x64xf32>
    %62 = tpu.matmul %61, %45, %cst_20 {dimension_numbers = #tpu.dot_dimension_numbers<[1], [0], [0], [1], [0, 0, 1, 1], [], []>} : vector<128x128xbf16>, vector<128x64xbf16>, vector<128x64xf32> -> vector<128x64xf32>
    %63 = tpu.concatenate %39, %62 in 1 : vector<128x64xf32>, vector<128x64xf32> -> vector<128x128xf32>
    %64 = arith.truncf %63 : vector<128x128xf32> to vector<128x128xbf16>
    %c0_21 = arith.constant 0 : index
    %c0_22 = arith.constant 0 : index
    %c0_23 = arith.constant 0 : index
    %65 = vector.load %arg8[%c0_21, %c0_22, %c0_23] : memref<1x128x128xbf16, #tpu.memory_space<vmem>>, vector<1x128x128xbf16>
    %66 = vector.shape_cast %65 : vector<1x128x128xbf16> to vector<128x128xbf16>
    %cst_24 = arith.constant dense<0.000000e+00> : vector<128x128xf32>
    %67 = tpu.matmul %64, %66, %cst_24 {dimension_numbers = #tpu.dot_dimension_numbers<[1], [0], [0], [1], [0, 0, 1, 1], [], []>} : vector<128x128xbf16>, vector<128x128xbf16>, vector<128x128xf32> -> vector<128x128xf32>
    %c0_25 = arith.constant 0 : index
    %c0_26 = arith.constant 0 : index
    %c0_27 = arith.constant 0 : index
    %68 = vector.load %arg9[%c0_25, %c0_26, %c0_27] : memref<1x1x128xf32, #tpu.memory_space<vmem>>, vector<1x1x128xf32>
    %69 = vector.shape_cast %68 : vector<1x1x128xf32> to vector<1x128xf32>
    %70 = vector.broadcast %69 : vector<1x128xf32> to vector<128x128xf32>
    %71 = arith.addf %67, %70 : vector<128x128xf32>
    %72 = arith.addf %3, %71 : vector<128x128xf32>
    %c0_28 = arith.constant 0 : index
    %c0_29 = arith.constant 0 : index
    %c0_30 = arith.constant 0 : index
    %73 = vector.load %arg10[%c0_28, %c0_29, %c0_30] : memref<1x1x128xf32, #tpu.memory_space<vmem>>, vector<1x1x128xf32>
    %74 = vector.shape_cast %73 : vector<1x1x128xf32> to vector<1x128xf32>
    %c0_31 = arith.constant 0 : index
    %c0_32 = arith.constant 0 : index
    %c0_33 = arith.constant 0 : index
    %75 = vector.load %arg11[%c0_31, %c0_32, %c0_33] : memref<1x1x128xf32, #tpu.memory_space<vmem>>, vector<1x1x128xf32>
    %76 = vector.shape_cast %75 : vector<1x1x128xf32> to vector<1x128xf32>
    %cst_34 = arith.constant dense<0.000000e+00> : vector<128xf32>
    %77 = vector.multi_reduction <add>, %72, %cst_34 [1] : vector<128x128xf32> to vector<128xf32>
    %78 = vector.shape_cast %77 : vector<128xf32> to vector<128x1xf32>
    %cst_35 = arith.constant 1.280000e+02 : f32
    %79 = vector.broadcast %cst_35 : f32 to vector<128x1xf32>
    %80 = arith.divf %78, %79 : vector<128x1xf32>
    %81 = vector.broadcast %80 : vector<128x1xf32> to vector<128x128xf32>
    %82 = arith.subf %72, %81 : vector<128x128xf32>
    %83 = arith.mulf %82, %82 : vector<128x128xf32>
    %cst_36 = arith.constant dense<0.000000e+00> : vector<128xf32>
    %84 = vector.multi_reduction <add>, %83, %cst_36 [1] : vector<128x128xf32> to vector<128xf32>
    %85 = vector.shape_cast %84 : vector<128xf32> to vector<128x1xf32>
    %cst_37 = arith.constant 1.280000e+02 : f32
    %86 = vector.broadcast %cst_37 : f32 to vector<128x1xf32>
    %87 = arith.divf %85, %86 : vector<128x1xf32>
    %88 = vector.broadcast %80 : vector<128x1xf32> to vector<128x128xf32>
    %89 = arith.subf %72, %88 : vector<128x128xf32>
    %cst_38 = arith.constant 9.99999996E-13 : f32
    %90 = vector.broadcast %cst_38 : f32 to vector<128x1xf32>
    %91 = arith.addf %87, %90 : vector<128x1xf32>
    %92 = math.rsqrt %91 : vector<128x1xf32>
    %93 = vector.broadcast %92 : vector<128x1xf32> to vector<128x128xf32>
    %94 = arith.mulf %89, %93 : vector<128x128xf32>
    %95 = vector.broadcast %74 : vector<1x128xf32> to vector<128x128xf32>
    %96 = arith.mulf %94, %95 : vector<128x128xf32>
    %97 = vector.broadcast %76 : vector<1x128xf32> to vector<128x128xf32>
    %98 = arith.addf %96, %97 : vector<128x128xf32>
    %99 = arith.truncf %98 : vector<128x128xf32> to vector<128x128xbf16>
    %c0_39 = arith.constant 0 : index
    %c0_40 = arith.constant 0 : index
    %c0_41 = arith.constant 0 : index
    %100 = vector.load %arg12[%c0_39, %c0_40, %c0_41] : memref<1x128x512xbf16, #tpu.memory_space<vmem>>, vector<1x128x512xbf16>
    %101 = vector.shape_cast %100 : vector<1x128x512xbf16> to vector<128x512xbf16>
    %cst_42 = arith.constant dense<0.000000e+00> : vector<128x512xf32>
    %102 = tpu.matmul %99, %101, %cst_42 {dimension_numbers = #tpu.dot_dimension_numbers<[1], [0], [0], [1], [0, 0, 1, 1], [], []>} : vector<128x128xbf16>, vector<128x512xbf16>, vector<128x512xf32> -> vector<128x512xf32>
    %c0_43 = arith.constant 0 : index
    %c0_44 = arith.constant 0 : index
    %c0_45 = arith.constant 0 : index
    %103 = vector.load %arg13[%c0_43, %c0_44, %c0_45] : memref<1x1x512xf32, #tpu.memory_space<vmem>>, vector<1x1x512xf32>
    %104 = vector.shape_cast %103 : vector<1x1x512xf32> to vector<1x512xf32>
    %105 = vector.broadcast %104 : vector<1x512xf32> to vector<128x512xf32>
    %106 = arith.addf %102, %105 : vector<128x512xf32>
    %cst_46 = arith.constant 5.000000e-01 : f32
    %107 = vector.broadcast %cst_46 : f32 to vector<128x512xf32>
    %108 = arith.mulf %107, %106 : vector<128x512xf32>
    %cst_47 = arith.constant 4.471500e-02 : f32
    %109 = vector.broadcast %cst_47 : f32 to vector<128x512xf32>
    %110 = arith.mulf %109, %106 : vector<128x512xf32>
    %111 = arith.mulf %110, %106 : vector<128x512xf32>
    %112 = arith.mulf %111, %106 : vector<128x512xf32>
    %113 = arith.addf %106, %112 : vector<128x512xf32>
    %cst_48 = arith.constant 0.797884583 : f32
    %114 = vector.broadcast %cst_48 : f32 to vector<128x512xf32>
    %115 = arith.mulf %114, %113 : vector<128x512xf32>
    %116 = math.tanh %115 : vector<128x512xf32>
    %cst_49 = arith.constant 1.000000e+00 : f32
    %117 = vector.broadcast %cst_49 : f32 to vector<128x512xf32>
    %118 = arith.addf %117, %116 : vector<128x512xf32>
    %119 = arith.mulf %108, %118 : vector<128x512xf32>
    %120 = arith.truncf %119 : vector<128x512xf32> to vector<128x512xbf16>
    %c0_50 = arith.constant 0 : index
    %c0_51 = arith.constant 0 : index
    %c0_52 = arith.constant 0 : index
    %121 = vector.load %arg14[%c0_50, %c0_51, %c0_52] : memref<1x512x128xbf16, #tpu.memory_space<vmem>>, vector<1x512x128xbf16>
    %122 = vector.shape_cast %121 : vector<1x512x128xbf16> to vector<512x128xbf16>
    %cst_53 = arith.constant dense<0.000000e+00> : vector<128x128xf32>
    %123 = tpu.matmul %120, %122, %cst_53 {dimension_numbers = #tpu.dot_dimension_numbers<[1], [0], [0], [1], [0, 0, 1, 1], [], []>} : vector<128x512xbf16>, vector<512x128xbf16>, vector<128x128xf32> -> vector<128x128xf32>
    %c0_54 = arith.constant 0 : index
    %c0_55 = arith.constant 0 : index
    %c0_56 = arith.constant 0 : index
    %124 = vector.load %arg15[%c0_54, %c0_55, %c0_56] : memref<1x1x128xf32, #tpu.memory_space<vmem>>, vector<1x1x128xf32>
    %125 = vector.shape_cast %124 : vector<1x1x128xf32> to vector<1x128xf32>
    %126 = vector.broadcast %125 : vector<1x128xf32> to vector<128x128xf32>
    %127 = arith.addf %123, %126 : vector<128x128xf32>
    %128 = arith.addf %98, %127 : vector<128x128xf32>
    %c0_57 = arith.constant 0 : index
    %c0_58 = arith.constant 0 : index
    %c0_59 = arith.constant 0 : index
    %129 = vector.load %arg16[%c0_57, %c0_58, %c0_59] : memref<1x1x128xf32, #tpu.memory_space<vmem>>, vector<1x1x128xf32>
    %130 = vector.shape_cast %129 : vector<1x1x128xf32> to vector<1x128xf32>
    %c0_60 = arith.constant 0 : index
    %c0_61 = arith.constant 0 : index
    %c0_62 = arith.constant 0 : index
    %131 = vector.load %arg17[%c0_60, %c0_61, %c0_62] : memref<1x1x128xf32, #tpu.memory_space<vmem>>, vector<1x1x128xf32>
    %132 = vector.shape_cast %131 : vector<1x1x128xf32> to vector<1x128xf32>
    %cst_63 = arith.constant dense<0.000000e+00> : vector<128xf32>
    %133 = vector.multi_reduction <add>, %128, %cst_63 [1] : vector<128x128xf32> to vector<128xf32>
    %134 = vector.shape_cast %133 : vector<128xf32> to vector<128x1xf32>
    %cst_64 = arith.constant 1.280000e+02 : f32
    %135 = vector.broadcast %cst_64 : f32 to vector<128x1xf32>
    %136 = arith.divf %134, %135 : vector<128x1xf32>
    %137 = vector.broadcast %136 : vector<128x1xf32> to vector<128x128xf32>
    %138 = arith.subf %128, %137 : vector<128x128xf32>
    %139 = arith.mulf %138, %138 : vector<128x128xf32>
    %cst_65 = arith.constant dense<0.000000e+00> : vector<128xf32>
    %140 = vector.multi_reduction <add>, %139, %cst_65 [1] : vector<128x128xf32> to vector<128xf32>
    %141 = vector.shape_cast %140 : vector<128xf32> to vector<128x1xf32>
    %cst_66 = arith.constant 1.280000e+02 : f32
    %142 = vector.broadcast %cst_66 : f32 to vector<128x1xf32>
    %143 = arith.divf %141, %142 : vector<128x1xf32>
    %144 = vector.broadcast %136 : vector<128x1xf32> to vector<128x128xf32>
    %145 = arith.subf %128, %144 : vector<128x128xf32>
    %cst_67 = arith.constant 9.99999996E-13 : f32
    %146 = vector.broadcast %cst_67 : f32 to vector<128x1xf32>
    %147 = arith.addf %143, %146 : vector<128x1xf32>
    %148 = math.rsqrt %147 : vector<128x1xf32>
    %149 = vector.broadcast %148 : vector<128x1xf32> to vector<128x128xf32>
    %150 = arith.mulf %145, %149 : vector<128x128xf32>
    %151 = vector.broadcast %130 : vector<1x128xf32> to vector<128x128xf32>
    %152 = arith.mulf %150, %151 : vector<128x128xf32>
    %153 = vector.broadcast %132 : vector<1x128xf32> to vector<128x128xf32>
    %154 = arith.addf %152, %153 : vector<128x128xf32>
    %c0_68 = arith.constant 0 : index
    %c0_69 = arith.constant 0 : index
    %155 = vector.load %arg21[%c0_68, %c0_69] : memref<128x128xf32, #tpu.memory_space<vmem>>, vector<128x128xf32>
    tpu.vector_store %arg21[%c0_68, %c0_69], %154 {strides = array<i32>} : memref<128x128xf32, #tpu.memory_space<vmem>>, vector<128x128xf32>,
    %c1_i32 = arith.constant 1 : i32
    %156 = arith.cmpi eq, %arg1, %c1_i32 : i32
    %157 = arith.extui %156 : i1 to i32
    %c0_i32_70 = arith.constant 0 : i32
    %158 = arith.cmpi ne, %157, %c0_i32_70 : i32
    scf.if %158 {
      %159 = vector.extract_strided_slice %154 {offsets = [0, 0], sizes = [1, 128], strides = [1, 1]} : vector<128x128xf32> to vector<1x128xf32>
      %160 = arith.truncf %159 : vector<1x128xf32> to vector<1x128xbf16>
      %c0_71 = arith.constant 0 : index
      %c0_72 = arith.constant 0 : index
      %161 = vector.load %arg18[%c0_71, %c0_72] : memref<128x128xbf16, #tpu.memory_space<vmem>>, vector<128x128xbf16>
      %cst_73 = arith.constant dense<0.000000e+00> : vector<1x128xf32>
      %162 = tpu.matmul %160, %161, %cst_73 {dimension_numbers = #tpu.dot_dimension_numbers<[1], [0], [0], [1], [0, 0, 1, 1], [], []>} : vector<1x128xbf16>, vector<128x128xbf16>, vector<1x128xf32> -> vector<1x128xf32>
      %c0_74 = arith.constant 0 : index
      %c0_75 = arith.constant 0 : index
      %163 = vector.load %arg19[%c0_74, %c0_75] : memref<1x128xf32, #tpu.memory_space<vmem>>, vector<1x128xf32>
      %164 = arith.addf %162, %163 : vector<1x128xf32>
      %165 = math.tanh %164 : vector<1x128xf32>
      %c0_76 = arith.constant 0 : index
      %c0_77 = arith.constant 0 : index
      %c0_78 = arith.constant 0 : index
      %166 = vector.load %arg20[%c0_76, %c0_77, %c0_78] : memref<1x1x128xf32, #tpu.memory_space<vmem>>, vector<1x1x128xf32>
      %167 = vector.shape_cast %166 : vector<1x1x128xf32> to vector<1x128xf32>
      %168 = vector.shape_cast %165 : vector<1x128xf32> to vector<1x1x128xf32>
      tpu.vector_store %arg20[%c0_76, %c0_77, %c0_78], %168 {strides = array<i32>} : memref<1x1x128xf32, #tpu.memory_space<vmem>>, vector<1x1x128xf32>,
    } else {
    }
    return
  }
  func.func @transform_0(%arg0: i32, %arg1: i32) -> (i32, i32, i32) {
    %c0_i32 = arith.constant 0 : i32
    %c0_i32_0 = arith.constant 0 : i32
    %c0_i32_1 = arith.constant 0 : i32
    return %arg0, %c0_i32, %c0_i32_0 : i32, i32, i32
  }
  func.func @transform_1(%arg0: i32, %arg1: i32) -> (i32, i32, i32) {
    %c0_i32 = arith.constant 0 : i32
    %c0_i32_0 = arith.constant 0 : i32
    %c0_i32_1 = arith.constant 0 : i32
    return %arg0, %c0_i32, %c0_i32_0 : i32, i32, i32
  }
  func.func @transform_2(%arg0: i32, %arg1: i32) -> (i32, i32) {
    %c0_i32 = arith.constant 0 : i32
    %c0_i32_0 = arith.constant 0 : i32
    %c0_i32_1 = arith.constant 0 : i32
    return %c0_i32, %c0_i32_0 : i32, i32
  }
  func.func @transform_3(%arg0: i32, %arg1: i32) -> (i32, i32) {
    %c0_i32 = arith.constant 0 : i32
    %c0_i32_0 = arith.constant 0 : i32
    %c0_i32_1 = arith.constant 0 : i32
    return %c0_i32, %c0_i32_0 : i32, i32
  }
  func.func @transform_4(%arg0: i32, %arg1: i32) -> (i32, i32, i32) {
    %c0_i32 = arith.constant 0 : i32
    %c0_i32_0 = arith.constant 0 : i32
    %c0_i32_1 = arith.constant 0 : i32
    return %arg1, %c0_i32, %c0_i32_0 : i32, i32, i32
  }
  func.func @transform_5(%arg0: i32, %arg1: i32) -> (i32, i32, i32) {
    %c0_i32 = arith.constant 0 : i32
    %c0_i32_0 = arith.constant 0 : i32
    %c0_i32_1 = arith.constant 0 : i32
    return %arg1, %c0_i32, %c0_i32_0 : i32, i32, i32
  }
  func.func @transform_6(%arg0: i32, %arg1: i32) -> (i32, i32, i32) {
    %c0_i32 = arith.constant 0 : i32
    %c0_i32_0 = arith.constant 0 : i32
    %c0_i32_1 = arith.constant 0 : i32
    return %arg1, %c0_i32, %c0_i32_0 : i32, i32, i32
  }
  func.func @transform_7(%arg0: i32, %arg1: i32) -> (i32, i32, i32) {
    %c0_i32 = arith.constant 0 : i32
    %c0_i32_0 = arith.constant 0 : i32
    %c0_i32_1 = arith.constant 0 : i32
    return %arg1, %c0_i32, %c0_i32_0 : i32, i32, i32
  }
  func.func @transform_8(%arg0: i32, %arg1: i32) -> (i32, i32, i32) {
    %c0_i32 = arith.constant 0 : i32
    %c0_i32_0 = arith.constant 0 : i32
    %c0_i32_1 = arith.constant 0 : i32
    return %arg1, %c0_i32, %c0_i32_0 : i32, i32, i32
  }
  func.func @transform_9(%arg0: i32, %arg1: i32) -> (i32, i32, i32) {
    %c0_i32 = arith.constant 0 : i32
    %c0_i32_0 = arith.constant 0 : i32
    %c0_i32_1 = arith.constant 0 : i32
    return %arg1, %c0_i32, %c0_i32_0 : i32, i32, i32
  }
  func.func @transform_10(%arg0: i32, %arg1: i32) -> (i32, i32, i32) {
    %c0_i32 = arith.constant 0 : i32
    %c0_i32_0 = arith.constant 0 : i32
    %c0_i32_1 = arith.constant 0 : i32
    return %arg1, %c0_i32, %c0_i32_0 : i32, i32, i32
  }
  func.func @transform_11(%arg0: i32, %arg1: i32) -> (i32, i32, i32) {
    %c0_i32 = arith.constant 0 : i32
    %c0_i32_0 = arith.constant 0 : i32
    %c0_i32_1 = arith.constant 0 : i32
    return %arg1, %c0_i32, %c0_i32_0 : i32, i32, i32
  }
  func.func @transform_12(%arg0: i32, %arg1: i32) -> (i32, i32, i32) {
    %c0_i32 = arith.constant 0 : i32
    %c0_i32_0 = arith.constant 0 : i32
    %c0_i32_1 = arith.constant 0 : i32
    return %arg1, %c0_i32, %c0_i32_0 : i32, i32, i32
  }
  func.func @transform_13(%arg0: i32, %arg1: i32) -> (i32, i32, i32) {
    %c0_i32 = arith.constant 0 : i32
    %c0_i32_0 = arith.constant 0 : i32
    %c0_i32_1 = arith.constant 0 : i32
    return %arg1, %c0_i32, %c0_i32_0 : i32, i32, i32
  }
  func.func @transform_14(%arg0: i32, %arg1: i32) -> (i32, i32, i32) {
    %c0_i32 = arith.constant 0 : i32
    %c0_i32_0 = arith.constant 0 : i32
    %c0_i32_1 = arith.constant 0 : i32
    return %arg1, %c0_i32, %c0_i32_0 : i32, i32, i32
  }
  func.func @transform_15(%arg0: i32, %arg1: i32) -> (i32, i32, i32) {
    %c0_i32 = arith.constant 0 : i32
    %c0_i32_0 = arith.constant 0 : i32
    %c0_i32_1 = arith.constant 0 : i32
    return %arg1, %c0_i32, %c0_i32_0 : i32, i32, i32
  }
  func.func @transform_16(%arg0: i32, %arg1: i32) -> (i32, i32) {
    %c0_i32 = arith.constant 0 : i32
    %c0_i32_0 = arith.constant 0 : i32
    %c0_i32_1 = arith.constant 0 : i32
    return %c0_i32, %c0_i32_0 : i32, i32
  }
  func.func @transform_17(%arg0: i32, %arg1: i32) -> (i32, i32) {
    %c0_i32 = arith.constant 0 : i32
    %c0_i32_0 = arith.constant 0 : i32
    %c0_i32_1 = arith.constant 0 : i32
    return %c0_i32, %c0_i32_0 : i32, i32
  }
  func.func @transform_18(%arg0: i32, %arg1: i32) -> (i32, i32, i32) {
    %c0_i32 = arith.constant 0 : i32
    %c0_i32_0 = arith.constant 0 : i32
    %c0_i32_1 = arith.constant 0 : i32
    return %arg0, %c0_i32, %c0_i32_0 : i32, i32, i32
  }
}

</mosaic_0001>

<llo_original>
// kernel: sent_bert_forward.1
$region0: #{sent_bert_forward.1}
  #allocation0 [shape = 'u32[]', space=smem, size = 0x4, offset = 0x4, fixed_abs, tag = 'smem constant byte address 0x4 - core index']
  #allocation1 [shape = 'u32[144,128]{1,0:T(1,128)}', space=vmem, size = 0x12000, scoped, tag = 'internal scratch']
  #allocation2 [shape = 'f32[128,128]{1,0:T(8,128)}', space=vmem, size = 0x10000, scoped, tag = 'scratch operand']
  %s0 = inlined_call_operand.vmem [shape: f32[2,128,128], index: 0, kind: input, shape index: {}]
  %s1 = inlined_call_operand.vmem [shape: f32[2,1,128], index: 1, kind: input, shape index: {}]
  %s2 = inlined_call_operand.vmem [shape: f32[1,128], index: 2, kind: input, shape index: {}]
  %s3 = inlined_call_operand.vmem [shape: f32[1,128], index: 3, kind: input, shape index: {}]
  %s4 = inlined_call_operand.vmem [shape: bf16[2,128,384], index: 4, kind: input, shape index: {}]
  %s5 = inlined_call_operand.vmem [shape: f32[2,1,384], index: 5, kind: input, shape index: {}]
  %s6 = inlined_call_operand.vmem [shape: bf16[2,128,128], index: 6, kind: input, shape index: {}]
  %s7 = inlined_call_operand.vmem [shape: f32[2,1,128], index: 7, kind: input, shape index: {}]
  %s8 = inlined_call_operand.vmem [shape: f32[2,1,128], index: 8, kind: input, shape index: {}]
  %s9 = inlined_call_operand.vmem [shape: f32[2,1,128], index: 9, kind: input, shape index: {}]
  %s10 = inlined_call_operand.vmem [shape: bf16[2,128,512], index: 10, kind: input, shape index: {}]
  %s11 = inlined_call_operand.vmem [shape: f32[2,1,512], index: 11, kind: input, shape index: {}]
  %s12 = inlined_call_operand.vmem [shape: bf16[2,512,128], index: 12, kind: input, shape index: {}]
  %s13 = inlined_call_operand.vmem [shape: f32[2,1,128], index: 13, kind: input, shape index: {}]
  %s14 = inlined_call_operand.vmem [shape: f32[2,1,128], index: 14, kind: input, shape index: {}]
  %s15 = inlined_call_operand.vmem [shape: f32[2,1,128], index: 15, kind: input, shape index: {}]
  %s16 = inlined_call_operand.vmem [shape: bf16[128,128], index: 16, kind: input, shape index: {}]
  %s17 = inlined_call_operand.vmem [shape: f32[1,128], index: 17, kind: input, shape index: {}]
  %s18 = inlined_call_operand.hbm [shape: f32[2,1,128], index: 18, kind: output, shape index: {}]
  %s19 = sld [smem:[#allocation0]]
  $region113: #{sent_bert_forward.1} parent=0
    _
  %s21 = ssub.s32 1, %s19
  %s22 = scalar_select 0, %s21, %s19
  $region1: #{sent_bert_forward.1} parent=0
    #allocation3 [shape = 'u8[1024]{0}', space=vmem, size = 0x400, scoped, tag = 'output window, operand 0']
    #allocation4 [shape = 's32[2]{0}', space=sflag, size = 0x8, scoped, tag = 'scoped memory for sent_bert_forward.1']
    %23 = vsyncpa [#allocation4], 0
    %s24 = scalar_lea.sflag [#allocation4], 1
    %25 = vsyncpa %s24, 0
    loop: start=0, step=1, limit=6
    $region2: #{sent_bert_forward.1} parent=1 // loop_pre_header
      _
    $region3: #{sent_bert_forward.1} parent=1 // loop_header
      %s27 = sphi 0, %s31
      %p28 = scmp.ge.s32.totalorder %s27, 6
      %s34 = sphi 0, %s46
      %s35 = sphi 0, %s42
      %s36 = sphi 0, %s34
      %s37 = sphi 0, %s35
      %s38 = sphi 0, %s36
      %s39 = sphi 0, %s37
      %s49 = sphi 0, %s51
      %s52 = sphi 0, %s49
      %s53 = sphi 0, %s52
      %s69 = sphi 0, %s53
      %s75 = sphi 0, %s77
      %s78 = sphi 0, %s75
      %s79 = sphi 0, %s78
      %s95 = sphi 0, %s79
      %s99 = sphi 0, %s99
      %s101 = sphi 0, %s99
      %s102 = sphi 0, %s101
      %s116 = sphi 0, %s102
      %s120 = sphi 0, %s120
      %s122 = sphi 0, %s120
      %s123 = sphi 0, %s122
      %s137 = sphi 0, %s123
      %s143 = sphi 0, %s145
      %s146 = sphi 0, %s143
      %s147 = sphi 0, %s146
      %s163 = sphi 0, %s147
      %s169 = sphi 0, %s171
      %s172 = sphi 0, %s169
      %s173 = sphi 0, %s172
      %s189 = sphi 0, %s173
      %s195 = sphi 0, %s197
      %s198 = sphi 0, %s195
      %s199 = sphi 0, %s198
      %s215 = sphi 0, %s199
      %s221 = sphi 0, %s223
      %s224 = sphi 0, %s221
      %s225 = sphi 0, %s224
      %s241 = sphi 0, %s225
      %s247 = sphi 0, %s249
      %s250 = sphi 0, %s247
      %s251 = sphi 0, %s250
      %s267 = sphi 0, %s251
      %s273 = sphi 0, %s275
      %s276 = sphi 0, %s273
      %s277 = sphi 0, %s276
      %s293 = sphi 0, %s277
      %s299 = sphi 0, %s301
      %s302 = sphi 0, %s299
      %s303 = sphi 0, %s302
      %s319 = sphi 0, %s303
      %s325 = sphi 0, %s327
      %s328 = sphi 0, %s325
      %s329 = sphi 0, %s328
      %s345 = sphi 0, %s329
      %s351 = sphi 0, %s353
      %s354 = sphi 0, %s351
      %s355 = sphi 0, %s354
      %s371 = sphi 0, %s355
      %s377 = sphi 0, %s379
      %s380 = sphi 0, %s377
      %s381 = sphi 0, %s380
      %s397 = sphi 0, %s381
      %s403 = sphi 0, %s405
      %s406 = sphi 0, %s403
      %s407 = sphi 0, %s406
      %s423 = sphi 0, %s407
      %s429 = sphi 0, %s431
      %s432 = sphi 0, %s429
      %s433 = sphi 0, %s432
      %s449 = sphi 0, %s433
      %s453 = sphi 0, %s453
      %s455 = sphi 0, %s453
      %s456 = sphi 0, %s455
      %s470 = sphi 0, %s456
      %s474 = sphi 0, %s474
      %s476 = sphi 0, %s474
      %s477 = sphi 0, %s476
      %s491 = sphi 0, %s477
      %s497 = sphi 0, %s499
      %s500 = sphi 0, %s497
      %s501 = sphi 0, %s500
      %s517 = sphi 0, %s501
    $region4: #{sent_bert_forward.1} parent=1 // loop_header_branch
      %30 = sbr.rel (%p28) target = $region8
    $region5: #{sent_bert_forward.1} parent=1 // loop_body
      %s32 = ssub.s32 %s27, 1
      %s33 = ssub.s32 %s27, 2
      %s40 = sadd.s32 1, %s35
      %p41 = scmp.ge.s32.totalorder %s40, 2
      %s42 = scalar_select %p41, 0, %s40
      %s43 = sadd.s32 1, %s34
      %s44 = scalar_select %p41, %s43, %s34
      %p45 = scmp.ge.s32.totalorder %s44, 2
      %s46 = scalar_select %p45, 0, %s44
      %s47 = ssub.s32 %s34, %s46
      %p48 = scmp.eq.s32.totalorder %s47, 0
      %s50 = sadd.s32 %s49, 1
      %s51 = scalar_select %p48, %s49, %s50
      %p54 = pneg %p48
      %p55 = scmp.eq.s32.totalorder %s27, 3
      %p56 = por %p54, %p55
      %p57 = scmp.ne.s32.totalorder %s49, %s52
      %p58 = scmp.eq.s32.totalorder %s27, 0
      %p59 = por %p57, %p58
      %p60 = scmp.ne.s32.totalorder %s49, %s52
      %p61 = scmp.eq.s32.totalorder %s32, 3
      %p62 = por %p60, %p61
      %p63 = scmp.ne.s32.totalorder %s52, %s53
      %p64 = scmp.eq.s32.totalorder %s32, 0
      %p65 = por %p63, %p64
      %p66 = scmp.ne.s32.totalorder %s52, %s53
      %p67 = scmp.eq.s32.totalorder %s33, 3
      %p68 = por %p66, %p67
      %p70 = scmp.ne.s32.totalorder %s53, %s69
      %p71 = scmp.eq.s32.totalorder %s33, 0
      %p72 = por %p70, %p71
      %s73 = ssub.s32 %s34, %s46
      %p74 = scmp.eq.s32.totalorder %s73, 0
      %s76 = sadd.s32 %s75, 1
      %s77 = scalar_select %p74, %s75, %s76
      %p80 = pneg %p74
      %p81 = scmp.eq.s32.totalorder %s27, 3
      %p82 = por %p80, %p81
      %p83 = scmp.ne.s32.totalorder %s75, %s78
      %p84 = scmp.eq.s32.totalorder %s27, 0
      %p85 = por %p83, %p84
      %p86 = scmp.ne.s32.totalorder %s75, %s78
      %p87 = scmp.eq.s32.totalorder %s32, 3
      %p88 = por %p86, %p87
      %p89 = scmp.ne.s32.totalorder %s78, %s79
      %p90 = scmp.eq.s32.totalorder %s32, 0
      %p91 = por %p89, %p90
      %p92 = scmp.ne.s32.totalorder %s78, %s79
      %p93 = scmp.eq.s32.totalorder %s33, 3
      %p94 = por %p92, %p93
      %p96 = scmp.ne.s32.totalorder %s79, %s95
      %p97 = scmp.eq.s32.totalorder %s33, 0
      %p98 = por %p96, %p97
      %s100 = sadd.s32 %s99, 1
      %p103 = scmp.eq.s32.totalorder %s27, 3
      %p104 = scmp.ne.s32.totalorder %s99, %s101
      %p105 = scmp.eq.s32.totalorder %s27, 0
      %p106 = por %p104, %p105
      %p107 = scmp.ne.s32.totalorder %s99, %s101
      %p108 = scmp.eq.s32.totalorder %s32, 3
      %p109 = por %p107, %p108
      %p110 = scmp.ne.s32.totalorder %s101, %s102
      %p111 = scmp.eq.s32.totalorder %s32, 0
      %p112 = por %p110, %p111
      %p113 = scmp.ne.s32.totalorder %s101, %s102
      %p114 = scmp.eq.s32.totalorder %s33, 3
      %p115 = por %p113, %p114
      %p117 = scmp.ne.s32.totalorder %s102, %s116
      %p118 = scmp.eq.s32.totalorder %s33, 0
      %p119 = por %p117, %p118
      %s121 = sadd.s32 %s120, 1
      %p124 = scmp.eq.s32.totalorder %s27, 3
      %p125 = scmp.ne.s32.totalorder %s120, %s122
      %p126 = scmp.eq.s32.totalorder %s27, 0
      %p127 = por %p125, %p126
      %p128 = scmp.ne.s32.totalorder %s120, %s122
      %p129 = scmp.eq.s32.totalorder %s32, 3
      %p130 = por %p128, %p129
      %p131 = scmp.ne.s32.totalorder %s122, %s123
      %p132 = scmp.eq.s32.totalorder %s32, 0
      %p133 = por %p131, %p132
      %p134 = scmp.ne.s32.totalorder %s122, %s123
      %p135 = scmp.eq.s32.totalorder %s33, 3
      %p136 = por %p134, %p135
      %p138 = scmp.ne.s32.totalorder %s123, %s137
      %p139 = scmp.eq.s32.totalorder %s33, 0
      %p140 = por %p138, %p139
      %s141 = ssub.s32 %s35, %s42
      %p142 = scmp.eq.s32.totalorder %s141, 0
      %s144 = sadd.s32 %s143, 1
      %s145 = scalar_select %p142, %s143, %s144
      %p148 = pneg %p142
      %p149 = scmp.eq.s32.totalorder %s27, 3
      %p150 = por %p148, %p149
      %p151 = scmp.ne.s32.totalorder %s143, %s146
      %p152 = scmp.eq.s32.totalorder %s27, 0
      %p153 = por %p151, %p152
      %p154 = scmp.ne.s32.totalorder %s143, %s146
      %p155 = scmp.eq.s32.totalorder %s32, 3
      %p156 = por %p154, %p155
      %p157 = scmp.ne.s32.totalorder %s146, %s147
      %p158 = scmp.eq.s32.totalorder %s32, 0
      %p159 = por %p157, %p158
      %p160 = scmp.ne.s32.totalorder %s146, %s147
      %p161 = scmp.eq.s32.totalorder %s33, 3
      %p162 = por %p160, %p161
      %p164 = scmp.ne.s32.totalorder %s147, %s163
      %p165 = scmp.eq.s32.totalorder %s33, 0
      %p166 = por %p164, %p165
      %s167 = ssub.s32 %s35, %s42
      %p168 = scmp.eq.s32.totalorder %s167, 0
      %s170 = sadd.s32 %s169, 1
      %s171 = scalar_select %p168, %s169, %s170
      %p174 = pneg %p168
      %p175 = scmp.eq.s32.totalorder %s27, 3
      %p176 = por %p174, %p175
      %p177 = scmp.ne.s32.totalorder %s169, %s172
      %p178 = scmp.eq.s32.totalorder %s27, 0
      %p179 = por %p177, %p178
      %p180 = scmp.ne.s32.totalorder %s169, %s172
      %p181 = scmp.eq.s32.totalorder %s32, 3
      %p182 = por %p180, %p181
      %p183 = scmp.ne.s32.totalorder %s172, %s173
      %p184 = scmp.eq.s32.totalorder %s32, 0
      %p185 = por %p183, %p184
      %p186 = scmp.ne.s32.totalorder %s172, %s173
      %p187 = scmp.eq.s32.totalorder %s33, 3
      %p188 = por %p186, %p187
      %p190 = scmp.ne.s32.totalorder %s173, %s189
      %p191 = scmp.eq.s32.totalorder %s33, 0
      %p192 = por %p190, %p191
      %s193 = ssub.s32 %s35, %s42
      %p194 = scmp.eq.s32.totalorder %s193, 0
      %s196 = sadd.s32 %s195, 1
      %s197 = scalar_select %p194, %s195, %s196
      %p200 = pneg %p194
      %p201 = scmp.eq.s32.totalorder %s27, 3
      %p202 = por %p200, %p201
      %p203 = scmp.ne.s32.totalorder %s195, %s198
      %p204 = scmp.eq.s32.totalorder %s27, 0
      %p205 = por %p203, %p204
      %p206 = scmp.ne.s32.totalorder %s195, %s198
      %p207 = scmp.eq.s32.totalorder %s32, 3
      %p208 = por %p206, %p207
      %p209 = scmp.ne.s32.totalorder %s198, %s199
      %p210 = scmp.eq.s32.totalorder %s32, 0
      %p211 = por %p209, %p210
      %p212 = scmp.ne.s32.totalorder %s198, %s199
      %p213 = scmp.eq.s32.totalorder %s33, 3
      %p214 = por %p212, %p213
      %p216 = scmp.ne.s32.totalorder %s199, %s215
      %p217 = scmp.eq.s32.totalorder %s33, 0
      %p218 = por %p216, %p217
      %s219 = ssub.s32 %s35, %s42
      %p220 = scmp.eq.s32.totalorder %s219, 0
      %s222 = sadd.s32 %s221, 1
      %s223 = scalar_select %p220, %s221, %s222
      %p226 = pneg %p220
      %p227 = scmp.eq.s32.totalorder %s27, 3
      %p228 = por %p226, %p227
      %p229 = scmp.ne.s32.totalorder %s221, %s224
      %p230 = scmp.eq.s32.totalorder %s27, 0
      %p231 = por %p229, %p230
      %p232 = scmp.ne.s32.totalorder %s221, %s224
      %p233 = scmp.eq.s32.totalorder %s32, 3
      %p234 = por %p232, %p233
      %p235 = scmp.ne.s32.totalorder %s224, %s225
      %p236 = scmp.eq.s32.totalorder %s32, 0
      %p237 = por %p235, %p236
      %p238 = scmp.ne.s32.totalorder %s224, %s225
      %p239 = scmp.eq.s32.totalorder %s33, 3
      %p240 = por %p238, %p239
      %p242 = scmp.ne.s32.totalorder %s225, %s241
      %p243 = scmp.eq.s32.totalorder %s33, 0
      %p244 = por %p242, %p243
      %s245 = ssub.s32 %s35, %s42
      %p246 = scmp.eq.s32.totalorder %s245, 0
      %s248 = sadd.s32 %s247, 1
      %s249 = scalar_select %p246, %s247, %s248
      %p252 = pneg %p246
      %p253 = scmp.eq.s32.totalorder %s27, 3
      %p254 = por %p252, %p253
      %p255 = scmp.ne.s32.totalorder %s247, %s250
      %p256 = scmp.eq.s32.totalorder %s27, 0
      %p257 = por %p255, %p256
      %p258 = scmp.ne.s32.totalorder %s247, %s250
      %p259 = scmp.eq.s32.totalorder %s32, 3
      %p260 = por %p258, %p259
      %p261 = scmp.ne.s32.totalorder %s250, %s251
      %p262 = scmp.eq.s32.totalorder %s32, 0
      %p263 = por %p261, %p262
      %p264 = scmp.ne.s32.totalorder %s250, %s251
      %p265 = scmp.eq.s32.totalorder %s33, 3
      %p266 = por %p264, %p265
      %p268 = scmp.ne.s32.totalorder %s251, %s267
      %p269 = scmp.eq.s32.totalorder %s33, 0
      %p270 = por %p268, %p269
      %s271 = ssub.s32 %s35, %s42
      %p272 = scmp.eq.s32.totalorder %s271, 0
      %s274 = sadd.s32 %s273, 1
      %s275 = scalar_select %p272, %s273, %s274
      %p278 = pneg %p272
      %p279 = scmp.eq.s32.totalorder %s27, 3
      %p280 = por %p278, %p279
      %p281 = scmp.ne.s32.totalorder %s273, %s276
      %p282 = scmp.eq.s32.totalorder %s27, 0
      %p283 = por %p281, %p282
      %p284 = scmp.ne.s32.totalorder %s273, %s276
      %p285 = scmp.eq.s32.totalorder %s32, 3
      %p286 = por %p284, %p285
      %p287 = scmp.ne.s32.totalorder %s276, %s277
      %p288 = scmp.eq.s32.totalorder %s32, 0
      %p289 = por %p287, %p288
      %p290 = scmp.ne.s32.totalorder %s276, %s277
      %p291 = scmp.eq.s32.totalorder %s33, 3
      %p292 = por %p290, %p291
      %p294 = scmp.ne.s32.totalorder %s277, %s293
      %p295 = scmp.eq.s32.totalorder %s33, 0
      %p296 = por %p294, %p295
      %s297 = ssub.s32 %s35, %s42
      %p298 = scmp.eq.s32.totalorder %s297, 0
      %s300 = sadd.s32 %s299, 1
      %s301 = scalar_select %p298, %s299, %s300
      %p304 = pneg %p298
      %p305 = scmp.eq.s32.totalorder %s27, 3
      %p306 = por %p304, %p305
      %p307 = scmp.ne.s32.totalorder %s299, %s302
      %p308 = scmp.eq.s32.totalorder %s27, 0
      %p309 = por %p307, %p308
      %p310 = scmp.ne.s32.totalorder %s299, %s302
      %p311 = scmp.eq.s32.totalorder %s32, 3
      %p312 = por %p310, %p311
      %p313 = scmp.ne.s32.totalorder %s302, %s303
      %p314 = scmp.eq.s32.totalorder %s32, 0
      %p315 = por %p313, %p314
      %p316 = scmp.ne.s32.totalorder %s302, %s303
      %p317 = scmp.eq.s32.totalorder %s33, 3
      %p318 = por %p316, %p317
      %p320 = scmp.ne.s32.totalorder %s303, %s319
      %p321 = scmp.eq.s32.totalorder %s33, 0
      %p322 = por %p320, %p321
      %s323 = ssub.s32 %s35, %s42
      %p324 = scmp.eq.s32.totalorder %s323, 0
      %s326 = sadd.s32 %s325, 1
      %s327 = scalar_select %p324, %s325, %s326
      %p330 = pneg %p324
      %p331 = scmp.eq.s32.totalorder %s27, 3
      %p332 = por %p330, %p331
      %p333 = scmp.ne.s32.totalorder %s325, %s328
      %p334 = scmp.eq.s32.totalorder %s27, 0
      %p335 = por %p333, %p334
      %p336 = scmp.ne.s32.totalorder %s325, %s328
      %p337 = scmp.eq.s32.totalorder %s32, 3
      %p338 = por %p336, %p337
      %p339 = scmp.ne.s32.totalorder %s328, %s329
      %p340 = scmp.eq.s32.totalorder %s32, 0
      %p341 = por %p339, %p340
      %p342 = scmp.ne.s32.totalorder %s328, %s329
      %p343 = scmp.eq.s32.totalorder %s33, 3
      %p344 = por %p342, %p343
      %p346 = scmp.ne.s32.totalorder %s329, %s345
      %p347 = scmp.eq.s32.totalorder %s33, 0
      %p348 = por %p346, %p347
      %s349 = ssub.s32 %s35, %s42
      %p350 = scmp.eq.s32.totalorder %s349, 0
      %s352 = sadd.s32 %s351, 1
      %s353 = scalar_select %p350, %s351, %s352
      %p356 = pneg %p350
      %p357 = scmp.eq.s32.totalorder %s27, 3
      %p358 = por %p356, %p357
      %p359 = scmp.ne.s32.totalorder %s351, %s354
      %p360 = scmp.eq.s32.totalorder %s27, 0
      %p361 = por %p359, %p360
      %p362 = scmp.ne.s32.totalorder %s351, %s354
      %p363 = scmp.eq.s32.totalorder %s32, 3
      %p364 = por %p362, %p363
      %p365 = scmp.ne.s32.totalorder %s354, %s355
      %p366 = scmp.eq.s32.totalorder %s32, 0
      %p367 = por %p365, %p366
      %p368 = scmp.ne.s32.totalorder %s354, %s355
      %p369 = scmp.eq.s32.totalorder %s33, 3
      %p370 = por %p368, %p369
      %p372 = scmp.ne.s32.totalorder %s355, %s371
      %p373 = scmp.eq.s32.totalorder %s33, 0
      %p374 = por %p372, %p373
      %s375 = ssub.s32 %s35, %s42
      %p376 = scmp.eq.s32.totalorder %s375, 0
      %s378 = sadd.s32 %s377, 1
      %s379 = scalar_select %p376, %s377, %s378
      %p382 = pneg %p376
      %p383 = scmp.eq.s32.totalorder %s27, 3
      %p384 = por %p382, %p383
      %p385 = scmp.ne.s32.totalorder %s377, %s380
      %p386 = scmp.eq.s32.totalorder %s27, 0
      %p387 = por %p385, %p386
      %p388 = scmp.ne.s32.totalorder %s377, %s380
      %p389 = scmp.eq.s32.totalorder %s32, 3
      %p390 = por %p388, %p389
      %p391 = scmp.ne.s32.totalorder %s380, %s381
      %p392 = scmp.eq.s32.totalorder %s32, 0
      %p393 = por %p391, %p392
      %p394 = scmp.ne.s32.totalorder %s380, %s381
      %p395 = scmp.eq.s32.totalorder %s33, 3
      %p396 = por %p394, %p395
      %p398 = scmp.ne.s32.totalorder %s381, %s397
      %p399 = scmp.eq.s32.totalorder %s33, 0
      %p400 = por %p398, %p399
      %s401 = ssub.s32 %s35, %s42
      %p402 = scmp.eq.s32.totalorder %s401, 0
      %s404 = sadd.s32 %s403, 1
      %s405 = scalar_select %p402, %s403, %s404
      %p408 = pneg %p402
      %p409 = scmp.eq.s32.totalorder %s27, 3
      %p410 = por %p408, %p409
      %p411 = scmp.ne.s32.totalorder %s403, %s406
      %p412 = scmp.eq.s32.totalorder %s27, 0
      %p413 = por %p411, %p412
      %p414 = scmp.ne.s32.totalorder %s403, %s406
      %p415 = scmp.eq.s32.totalorder %s32, 3
      %p416 = por %p414, %p415
      %p417 = scmp.ne.s32.totalorder %s406, %s407
      %p418 = scmp.eq.s32.totalorder %s32, 0
      %p419 = por %p417, %p418
      %p420 = scmp.ne.s32.totalorder %s406, %s407
      %p421 = scmp.eq.s32.totalorder %s33, 3
      %p422 = por %p420, %p421
      %p424 = scmp.ne.s32.totalorder %s407, %s423
      %p425 = scmp.eq.s32.totalorder %s33, 0
      %p426 = por %p424, %p425
      %s427 = ssub.s32 %s35, %s42
      %p428 = scmp.eq.s32.totalorder %s427, 0
      %s430 = sadd.s32 %s429, 1
      %s431 = scalar_select %p428, %s429, %s430
      %p434 = pneg %p428
      %p435 = scmp.eq.s32.totalorder %s27, 3
      %p436 = por %p434, %p435
      %p437 = scmp.ne.s32.totalorder %s429, %s432
      %p438 = scmp.eq.s32.totalorder %s27, 0
      %p439 = por %p437, %p438
      %p440 = scmp.ne.s32.totalorder %s429, %s432
      %p441 = scmp.eq.s32.totalorder %s32, 3
      %p442 = por %p440, %p441
      %p443 = scmp.ne.s32.totalorder %s432, %s433
      %p444 = scmp.eq.s32.totalorder %s32, 0
      %p445 = por %p443, %p444
      %p446 = scmp.ne.s32.totalorder %s432, %s433
      %p447 = scmp.eq.s32.totalorder %s33, 3
      %p448 = por %p446, %p447
      %p450 = scmp.ne.s32.totalorder %s433, %s449
      %p451 = scmp.eq.s32.totalorder %s33, 0
      %p452 = por %p450, %p451
      %s454 = sadd.s32 %s453, 1
      %p457 = scmp.eq.s32.totalorder %s27, 3
      %p458 = scmp.ne.s32.totalorder %s453, %s455
      %p459 = scmp.eq.s32.totalorder %s27, 0
      %p460 = por %p458, %p459
      %p461 = scmp.ne.s32.totalorder %s453, %s455
      %p462 = scmp.eq.s32.totalorder %s32, 3
      %p463 = por %p461, %p462
      %p464 = scmp.ne.s32.totalorder %s455, %s456
      %p465 = scmp.eq.s32.totalorder %s32, 0
      %p466 = por %p464, %p465
      %p467 = scmp.ne.s32.totalorder %s455, %s456
      %p468 = scmp.eq.s32.totalorder %s33, 3
      %p469 = por %p467, %p468
      %p471 = scmp.ne.s32.totalorder %s456, %s470
      %p472 = scmp.eq.s32.totalorder %s33, 0
      %p473 = por %p471, %p472
      %s475 = sadd.s32 %s474, 1
      %p478 = scmp.eq.s32.totalorder %s27, 3
      %p479 = scmp.ne.s32.totalorder %s474, %s476
      %p480 = scmp.eq.s32.totalorder %s27, 0
      %p481 = por %p479, %p480
      %p482 = scmp.ne.s32.totalorder %s474, %s476
      %p483 = scmp.eq.s32.totalorder %s32, 3
      %p484 = por %p482, %p483
      %p485 = scmp.ne.s32.totalorder %s476, %s477
      %p486 = scmp.eq.s32.totalorder %s32, 0
      %p487 = por %p485, %p486
      %p488 = scmp.ne.s32.totalorder %s476, %s477
      %p489 = scmp.eq.s32.totalorder %s33, 3
      %p490 = por %p488, %p489
      %p492 = scmp.ne.s32.totalorder %s477, %s491
      %p493 = scmp.eq.s32.totalorder %s33, 0
      %p494 = por %p492, %p493
      %s495 = ssub.s32 %s34, %s46
      %p496 = scmp.eq.s32.totalorder %s495, 0
      %s498 = sadd.s32 %s497, 1
      %s499 = scalar_select %p496, %s497, %s498
      %p502 = pneg %p496
      %p503 = scmp.eq.s32.totalorder %s27, 3
      %p504 = por %p502, %p503
      %p505 = scmp.ne.s32.totalorder %s497, %s500
      %p506 = scmp.eq.s32.totalorder %s27, 0
      %p507 = por %p505, %p506
      %p508 = scmp.ne.s32.totalorder %s497, %s500
      %p509 = scmp.eq.s32.totalorder %s32, 3
      %p510 = por %p508, %p509
      %p511 = scmp.ne.s32.totalorder %s500, %s501
      %p512 = scmp.eq.s32.totalorder %s32, 0
      %p513 = por %p511, %p512
      %p514 = scmp.ne.s32.totalorder %s500, %s501
      %p515 = scmp.eq.s32.totalorder %s33, 3
      %p516 = por %p514, %p515
      %p518 = scmp.ne.s32.totalorder %s501, %s517
      %p519 = scmp.eq.s32.totalorder %s33, 0
      %p520 = por %p518, %p519
      %p521 = scmp.le.s32.totalorder 1, %s27
      %p522 = scmp.lt.s32.totalorder %s27, 5
      %p523 = pnand %p521, %p522
      %p524 = pneg %p523
      // Predicated region
      $region9: #{sent_bert_forward.1} parent=5 // pred_check
        _
      $region10: #{sent_bert_forward.1} parent=5 // pred_check_branch
        %526 = sbr.rel (%p523) target = $region12
      $region11: #{sent_bert_forward.1} parent=5 // pred_region
        %s527 = ssub.s32 %s27, 1
        // Predicated region
        $region13: #{sent_bert_forward.1} parent=11 // pred_check
          %p528 = pneg %p112
        $region14: #{sent_bert_forward.1} parent=11 // pred_check_branch
          %530 = sbr.rel (%p528) target = $region16
        $region15: #{sent_bert_forward.1} parent=11 // pred_region
          _
        $region16: #{sent_bert_forward.1} parent=11 // pred_fallthru
          _
        // Predicated region
        $region17: #{sent_bert_forward.1} parent=11 // pred_check
          %p531 = pneg %p133
        $region18: #{sent_bert_forward.1} parent=11 // pred_check_branch
          %533 = sbr.rel (%p531) target = $region20
        $region19: #{sent_bert_forward.1} parent=11 // pred_region
          _
        $region20: #{sent_bert_forward.1} parent=11 // pred_fallthru
          _
        // Predicated region
        $region21: #{sent_bert_forward.1} parent=11 // pred_check
          %p534 = pneg %p466
        $region22: #{sent_bert_forward.1} parent=11 // pred_check_branch
          %536 = sbr.rel (%p534) target = $region24
        $region23: #{sent_bert_forward.1} parent=11 // pred_region
          _
        $region24: #{sent_bert_forward.1} parent=11 // pred_fallthru
          _
        // Predicated region
        $region25: #{sent_bert_forward.1} parent=11 // pred_check
          %p537 = pneg %p487
        $region26: #{sent_bert_forward.1} parent=11 // pred_check_branch
          %539 = sbr.rel (%p537) target = $region28
        $region27: #{sent_bert_forward.1} parent=11 // pred_region
          _
        $region28: #{sent_bert_forward.1} parent=11 // pred_fallthru
          _
      $region12: #{sent_bert_forward.1} parent=5 // pred_fallthru
        _
      %p540 = scmp.lt.s32.totalorder %s27, 4
      // Predicated region
      $region29: #{sent_bert_forward.1} parent=5 // pred_check
        %p541 = pneg %p540
      $region30: #{sent_bert_forward.1} parent=5 // pred_check_branch
        %543 = sbr.rel (%p541) target = $region32
      $region31: #{sent_bert_forward.1} parent=5 // pred_region
        // Predicated region
        $region33: #{sent_bert_forward.1} parent=31 // pred_check
          %p544 = pneg %p59
        $region34: #{sent_bert_forward.1} parent=31 // pred_check_branch
          %546 = sbr.rel (%p544) target = $region36
        $region35: #{sent_bert_forward.1} parent=31 // pred_region
          %p547 = scmp.lt.s32.totalorder %s34, 1
          %s548 = scalar_select %p547, %s34, 1
          %s549 = smul.addr %s548, 16
          %s550 = smul.addr %s549, 8
          %s551 = scalar_lea.vmem %s0, %s550
        $region36: #{sent_bert_forward.1} parent=31 // pred_fallthru
          _
        // Predicated region
        $region37: #{sent_bert_forward.1} parent=31 // pred_check
          %p552 = pneg %p85
        $region38: #{sent_bert_forward.1} parent=31 // pred_check_branch
          %554 = sbr.rel (%p552) target = $region40
        $region39: #{sent_bert_forward.1} parent=31 // pred_region
          %p555 = scmp.lt.s32.totalorder %s34, 1
          %s556 = scalar_select %p555, %s34, 1
          %s557 = scalar_lea.vmem %s1, %s556
        $region40: #{sent_bert_forward.1} parent=31 // pred_fallthru
          _
        // Predicated region
        $region41: #{sent_bert_forward.1} parent=31 // pred_check
          %p558 = pneg %p153
        $region42: #{sent_bert_forward.1} parent=31 // pred_check_branch
          %560 = sbr.rel (%p558) target = $region44
        $region43: #{sent_bert_forward.1} parent=31 // pred_region
          %p561 = scmp.lt.s32.totalorder %s35, 1
          %s562 = scalar_select %p561, %s35, 1
          %s563 = smul.addr %s562, 48
          %s564 = smul.addr %s563, 4
          %s565 = scalar_lea.vmem %s4, %s564
        $region44: #{sent_bert_forward.1} parent=31 // pred_fallthru
          _
        // Predicated region
        $region45: #{sent_bert_forward.1} parent=31 // pred_check
          %p566 = pneg %p179
        $region46: #{sent_bert_forward.1} parent=31 // pred_check_branch
          %568 = sbr.rel (%p566) target = $region48
        $region47: #{sent_bert_forward.1} parent=31 // pred_region
          %p569 = scmp.lt.s32.totalorder %s35, 1
          %s570 = scalar_select %p569, %s35, 1
          %s571 = smul.addr %s570, 3
          %s572 = scalar_lea.vmem %s5, %s571
        $region48: #{sent_bert_forward.1} parent=31 // pred_fallthru
          _
        // Predicated region
        $region49: #{sent_bert_forward.1} parent=31 // pred_check
          %p573 = pneg %p205
        $region50: #{sent_bert_forward.1} parent=31 // pred_check_branch
          %575 = sbr.rel (%p573) target = $region52
        $region51: #{sent_bert_forward.1} parent=31 // pred_region
          %p576 = scmp.lt.s32.totalorder %s35, 1
          %s577 = scalar_select %p576, %s35, 1
          %s578 = smul.addr %s577, 16
          %s579 = smul.addr %s578, 4
          %s580 = scalar_lea.vmem %s6, %s579
        $region52: #{sent_bert_forward.1} parent=31 // pred_fallthru
          _
        // Predicated region
        $region53: #{sent_bert_forward.1} parent=31 // pred_check
          %p581 = pneg %p231
        $region54: #{sent_bert_forward.1} parent=31 // pred_check_branch
          %583 = sbr.rel (%p581) target = $region56
        $region55: #{sent_bert_forward.1} parent=31 // pred_region
          %p584 = scmp.lt.s32.totalorder %s35, 1
          %s585 = scalar_select %p584, %s35, 1
          %s586 = scalar_lea.vmem %s7, %s585
        $region56: #{sent_bert_forward.1} parent=31 // pred_fallthru
          _
        // Predicated region
        $region57: #{sent_bert_forward.1} parent=31 // pred_check
          %p587 = pneg %p257
        $region58: #{sent_bert_forward.1} parent=31 // pred_check_branch
          %589 = sbr.rel (%p587) target = $region60
        $region59: #{sent_bert_forward.1} parent=31 // pred_region
          %p590 = scmp.lt.s32.totalorder %s35, 1
          %s591 = scalar_select %p590, %s35, 1
          %s592 = scalar_lea.vmem %s8, %s591
        $region60: #{sent_bert_forward.1} parent=31 // pred_fallthru
          _
        // Predicated region
        $region61: #{sent_bert_forward.1} parent=31 // pred_check
          %p593 = pneg %p283
        $region62: #{sent_bert_forward.1} parent=31 // pred_check_branch
          %595 = sbr.rel (%p593) target = $region64
        $region63: #{sent_bert_forward.1} parent=31 // pred_region
          %p596 = scmp.lt.s32.totalorder %s35, 1
          %s597 = scalar_select %p596, %s35, 1
          %s598 = scalar_lea.vmem %s9, %s597
        $region64: #{sent_bert_forward.1} parent=31 // pred_fallthru
          _
        // Predicated region
        $region65: #{sent_bert_forward.1} parent=31 // pred_check
          %p599 = pneg %p309
        $region66: #{sent_bert_forward.1} parent=31 // pred_check_branch
          %601 = sbr.rel (%p599) target = $region68
        $region67: #{sent_bert_forward.1} parent=31 // pred_region
          %p602 = scmp.lt.s32.totalorder %s35, 1
          %s603 = scalar_select %p602, %s35, 1
          %s604 = smul.addr %s603, 64
          %s605 = smul.addr %s604, 4
          %s606 = scalar_lea.vmem %s10, %s605
        $region68: #{sent_bert_forward.1} parent=31 // pred_fallthru
          _
        // Predicated region
        $region69: #{sent_bert_forward.1} parent=31 // pred_check
          %p607 = pneg %p335
        $region70: #{sent_bert_forward.1} parent=31 // pred_check_branch
          %609 = sbr.rel (%p607) target = $region72
        $region71: #{sent_bert_forward.1} parent=31 // pred_region
          %p610 = scmp.lt.s32.totalorder %s35, 1
          %s611 = scalar_select %p610, %s35, 1
          %s612 = smul.addr %s611, 4
          %s613 = scalar_lea.vmem %s11, %s612
        $region72: #{sent_bert_forward.1} parent=31 // pred_fallthru
          _
        // Predicated region
        $region73: #{sent_bert_forward.1} parent=31 // pred_check
          %p614 = pneg %p361
        $region74: #{sent_bert_forward.1} parent=31 // pred_check_branch
          %616 = sbr.rel (%p614) target = $region76
        $region75: #{sent_bert_forward.1} parent=31 // pred_region
          %p617 = scmp.lt.s32.totalorder %s35, 1
          %s618 = scalar_select %p617, %s35, 1
          %s619 = smul.addr %s618, 64
          %s620 = smul.addr %s619, 4
          %s621 = scalar_lea.vmem %s12, %s620
        $region76: #{sent_bert_forward.1} parent=31 // pred_fallthru
          _
        // Predicated region
        $region77: #{sent_bert_forward.1} parent=31 // pred_check
          %p622 = pneg %p387
        $region78: #{sent_bert_forward.1} parent=31 // pred_check_branch
          %624 = sbr.rel (%p622) target = $region80
        $region79: #{sent_bert_forward.1} parent=31 // pred_region
          %p625 = scmp.lt.s32.totalorder %s35, 1
          %s626 = scalar_select %p625, %s35, 1
          %s627 = scalar_lea.vmem %s13, %s626
        $region80: #{sent_bert_forward.1} parent=31 // pred_fallthru
          _
        // Predicated region
        $region81: #{sent_bert_forward.1} parent=31 // pred_check
          %p628 = pneg %p413
        $region82: #{sent_bert_forward.1} parent=31 // pred_check_branch
          %630 = sbr.rel (%p628) target = $region84
        $region83: #{sent_bert_forward.1} parent=31 // pred_region
          %p631 = scmp.lt.s32.totalorder %s35, 1
          %s632 = scalar_select %p631, %s35, 1
          %s633 = scalar_lea.vmem %s14, %s632
        $region84: #{sent_bert_forward.1} parent=31 // pred_fallthru
          _
        // Predicated region
        $region85: #{sent_bert_forward.1} parent=31 // pred_check
          %p634 = pneg %p439
        $region86: #{sent_bert_forward.1} parent=31 // pred_check_branch
          %636 = sbr.rel (%p634) target = $region88
        $region87: #{sent_bert_forward.1} parent=31 // pred_region
          %p637 = scmp.lt.s32.totalorder %s35, 1
          %s638 = scalar_select %p637, %s35, 1
          %s639 = scalar_lea.vmem %s15, %s638
        $region88: #{sent_bert_forward.1} parent=31 // pred_fallthru
          _
      $region32: #{sent_bert_forward.1} parent=5 // pred_fallthru
        _
      %p640 = scmp.le.s32.totalorder 1, %s27
      %p641 = scmp.lt.s32.totalorder %s27, 5
      %p642 = pnand %p640, %p641
      %p643 = pneg %p642
      // Predicated region
      $region89: #{sent_bert_forward.1} parent=5 // pred_check
        _
      $region90: #{sent_bert_forward.1} parent=5 // pred_check_branch
        %645 = sbr.rel (%p642) target = $region92
      $region91: #{sent_bert_forward.1} parent=5 // pred_region
        %s646 = ssub.s32 %s27, 1
        %p647 = scmp.lt.s32.totalorder %s36, 1
        %s648 = scalar_select %p647, %s36, 1
        %s649 = smul.addr %s648, 16
        %s650 = smul.addr %s649, 8
        %s651 = scalar_lea.vmem %s0, %s650
        %p652 = pneg %p65
        %p653 = pneg %p62
        %p654 = scmp.lt.s32.totalorder %s36, 1
        %s655 = scalar_select %p654, %s36, 1
        %s656 = scalar_lea.vmem %s1, %s655
        %p657 = pneg %p91
        %p658 = pneg %p88
        %p659 = pneg %p112
        %p660 = pneg %p109
        %p661 = pneg %p133
        %p662 = pneg %p130
        %p663 = scmp.lt.s32.totalorder %s37, 1
        %s664 = scalar_select %p663, %s37, 1
        %s665 = smul.addr %s664, 48
        %s666 = smul.addr %s665, 4
        %s667 = scalar_lea.vmem %s4, %s666
        %p668 = pneg %p159
        %p669 = pneg %p156
        %p670 = scmp.lt.s32.totalorder %s37, 1
        %s671 = scalar_select %p670, %s37, 1
        %s672 = smul.addr %s671, 3
        %s673 = scalar_lea.vmem %s5, %s672
        %p674 = pneg %p185
        %p675 = pneg %p182
        %p676 = scmp.lt.s32.totalorder %s37, 1
        %s677 = scalar_select %p676, %s37, 1
        %s678 = smul.addr %s677, 16
        %s679 = smul.addr %s678, 4
        %s680 = scalar_lea.vmem %s6, %s679
        %p681 = pneg %p211
        %p682 = pneg %p208
        %p683 = scmp.lt.s32.totalorder %s37, 1
        %s684 = scalar_select %p683, %s37, 1
        %s685 = scalar_lea.vmem %s7, %s684
        %p686 = pneg %p237
        %p687 = pneg %p234
        %p688 = scmp.lt.s32.totalorder %s37, 1
        %s689 = scalar_select %p688, %s37, 1
        %s690 = scalar_lea.vmem %s8, %s689
        %p691 = pneg %p263
        %p692 = pneg %p260
        %p693 = scmp.lt.s32.totalorder %s37, 1
        %s694 = scalar_select %p693, %s37, 1
        %s695 = scalar_lea.vmem %s9, %s694
        %p696 = pneg %p289
        %p697 = pneg %p286
        %p698 = scmp.lt.s32.totalorder %s37, 1
        %s699 = scalar_select %p698, %s37, 1
        %s700 = smul.addr %s699, 64
        %s701 = smul.addr %s700, 4
        %s702 = scalar_lea.vmem %s10, %s701
        %p703 = pneg %p315
        %p704 = pneg %p312
        %p705 = scmp.lt.s32.totalorder %s37, 1
        %s706 = scalar_select %p705, %s37, 1
        %s707 = smul.addr %s706, 4
        %s708 = scalar_lea.vmem %s11, %s707
        %p709 = pneg %p341
        %p710 = pneg %p338
        %p711 = scmp.lt.s32.totalorder %s37, 1
        %s712 = scalar_select %p711, %s37, 1
        %s713 = smul.addr %s712, 64
        %s714 = smul.addr %s713, 4
        %s715 = scalar_lea.vmem %s12, %s714
        %p716 = pneg %p367
        %p717 = pneg %p364
        %p718 = scmp.lt.s32.totalorder %s37, 1
        %s719 = scalar_select %p718, %s37, 1
        %s720 = scalar_lea.vmem %s13, %s719
        %p721 = pneg %p393
        %p722 = pneg %p390
        %p723 = scmp.lt.s32.totalorder %s37, 1
        %s724 = scalar_select %p723, %s37, 1
        %s725 = scalar_lea.vmem %s14, %s724
        %p726 = pneg %p419
        %p727 = pneg %p416
        %p728 = scmp.lt.s32.totalorder %s37, 1
        %s729 = scalar_select %p728, %s37, 1
        %s730 = scalar_lea.vmem %s15, %s729
        %p731 = pneg %p445
        %p732 = pneg %p442
        %p733 = pneg %p466
        %p734 = pneg %p463
        %p735 = pneg %p487
        %p736 = pneg %p484
        %p737 = pneg %p513
        %p738 = pneg %p510
        %s739 = sand.u32 %s500, 1
        %s740 = scalar_lea.sflag [#allocation4], %s739
        %s741 = sand.u32 %s500, 1
        %s742 = scalar_lea.vmem [#allocation3], %s741
        %p743 = scmp.lt.s32.totalorder %s36, 1
        %s744 = scalar_select %p743, %s36, 1
        %s745 = smul.addr %s744, 16
        %s746 = smul.addr %s745, 8
        %s747 = scalar_lea.vmem %s0, %s746
        %p748 = scmp.lt.s32.totalorder %s36, 1
        %s749 = scalar_select %p748, %s36, 1
        %s750 = scalar_lea.vmem %s1, %s749
        %p751 = scmp.lt.s32.totalorder %s37, 1
        %s752 = scalar_select %p751, %s37, 1
        %s753 = smul.addr %s752, 48
        %s754 = smul.addr %s753, 4
        %s755 = scalar_lea.vmem %s4, %s754
        %p756 = scmp.lt.s32.totalorder %s37, 1
        %s757 = scalar_select %p756, %s37, 1
        %s758 = smul.addr %s757, 3
        %s759 = scalar_lea.vmem %s5, %s758
        %p760 = scmp.lt.s32.totalorder %s37, 1
        %s761 = scalar_select %p760, %s37, 1
        %s762 = smul.addr %s761, 16
        %s763 = smul.addr %s762, 4
        %s764 = scalar_lea.vmem %s6, %s763
        %p765 = scmp.lt.s32.totalorder %s37, 1
        %s766 = scalar_select %p765, %s37, 1
        %s767 = scalar_lea.vmem %s7, %s766
        %p768 = scmp.lt.s32.totalorder %s37, 1
        %s769 = scalar_select %p768, %s37, 1
        %s770 = scalar_lea.vmem %s8, %s769
        %p771 = scmp.lt.s32.totalorder %s37, 1
        %s772 = scalar_select %p771, %s37, 1
        %s773 = scalar_lea.vmem %s9, %s772
        %p774 = scmp.lt.s32.totalorder %s37, 1
        %s775 = scalar_select %p774, %s37, 1
        %s776 = smul.addr %s775, 64
        %s777 = smul.addr %s776, 4
        %s778 = scalar_lea.vmem %s10, %s777
        %p779 = scmp.lt.s32.totalorder %s37, 1
        %s780 = scalar_select %p779, %s37, 1
        %s781 = smul.addr %s780, 4
        %s782 = scalar_lea.vmem %s11, %s781
        %p783 = scmp.lt.s32.totalorder %s37, 1
        %s784 = scalar_select %p783, %s37, 1
        %s785 = smul.addr %s784, 64
        %s786 = smul.addr %s785, 4
        %s787 = scalar_lea.vmem %s12, %s786
        %p788 = scmp.lt.s32.totalorder %s37, 1
        %s789 = scalar_select %p788, %s37, 1
        %s790 = scalar_lea.vmem %s13, %s789
        %p791 = scmp.lt.s32.totalorder %s37, 1
        %s792 = scalar_select %p791, %s37, 1
        %s793 = scalar_lea.vmem %s14, %s792
        %p794 = scmp.lt.s32.totalorder %s37, 1
        %s795 = scalar_select %p794, %s37, 1
        %s796 = scalar_lea.vmem %s15, %s795
        %p798 = scmp.eq.s32.totalorder %s37, 0
        // Predicated region
        $region93: #{sent_bert_forward.1} parent=91 // pred_check
          %p799 = pneg %p798
        $region94: #{sent_bert_forward.1} parent=91 // pred_check_branch
          %801 = sbr.rel (%p799) target = $region96
        $region95: #{sent_bert_forward.1} parent=91 // pred_region
          %v802 = vld [vmem:[%s747] sm:$0xff]
          %v803 = vld [vmem:[%s747 + $0x8] sm:$0xff]
          %v804 = vld [vmem:[%s747 + $0x10] sm:$0xff]
          %v805 = vld [vmem:[%s747 + $0x18] sm:$0xff]
          %v806 = vld [vmem:[%s747 + $0x20] sm:$0xff]
          %v807 = vld [vmem:[%s747 + $0x28] sm:$0xff]
          %v808 = vld [vmem:[%s747 + $0x30] sm:$0xff]
          %v809 = vld [vmem:[%s747 + $0x38] sm:$0xff]
          %v810 = vld [vmem:[%s747 + $0x40] sm:$0xff]
          %v811 = vld [vmem:[%s747 + $0x48] sm:$0xff]
          %v812 = vld [vmem:[%s747 + $0x50] sm:$0xff]
          %v813 = vld [vmem:[%s747 + $0x58] sm:$0xff]
          %v814 = vld [vmem:[%s747 + $0x60] sm:$0xff]
          %v815 = vld [vmem:[%s747 + $0x68] sm:$0xff]
          %v816 = vld [vmem:[%s747 + $0x70] sm:$0xff]
          %v817 = vld [vmem:[%s747 + $0x78] sm:$0xff]
          %v818 = vld [vmem:[%s2] sm:$0x1]
          %v819 = vld [vmem:[%s3] sm:$0x1]
          %820 = vadd.xlane.f32.xlu0 %v802
          %v821 = vpop.xlane.xlu0 %820
          %822 = vadd.xlane.f32.xlu0 %v803
          %v823 = vpop.xlane.xlu0 %822
          %824 = vadd.xlane.f32.xlu0 %v804
          %v825 = vpop.xlane.xlu0 %824
          %826 = vadd.xlane.f32.xlu0 %v805
          %v827 = vpop.xlane.xlu0 %826
          %828 = vadd.xlane.f32.xlu0 %v806
          %v829 = vpop.xlane.xlu0 %828
          %830 = vadd.xlane.f32.xlu0 %v807
          %v831 = vpop.xlane.xlu0 %830
          %832 = vadd.xlane.f32.xlu0 %v808
          %v833 = vpop.xlane.xlu0 %832
          %834 = vadd.xlane.f32.xlu0 %v809
          %v835 = vpop.xlane.xlu0 %834
          %836 = vadd.xlane.f32.xlu0 %v810
          %v837 = vpop.xlane.xlu0 %836
          %838 = vadd.xlane.f32.xlu0 %v811
          %v839 = vpop.xlane.xlu0 %838
          %840 = vadd.xlane.f32.xlu0 %v812
          %v841 = vpop.xlane.xlu0 %840
          %842 = vadd.xlane.f32.xlu0 %v813
          %v843 = vpop.xlane.xlu0 %842
          %844 = vadd.xlane.f32.xlu0 %v814
          %v845 = vpop.xlane.xlu0 %844
          %846 = vadd.xlane.f32.xlu0 %v815
          %v847 = vpop.xlane.xlu0 %846
          %848 = vadd.xlane.f32.xlu0 %v816
          %v849 = vpop.xlane.xlu0 %848
          %850 = vadd.xlane.f32.xlu0 %v817
          %v851 = vpop.xlane.xlu0 %850
          %v852 = vrcp.pop 128.0
          %v853 = vmul.f32 %v821, %v852
          %v854 = vmul.f32 %v823, %v852
          %v855 = vmul.f32 %v825, %v852
          %v856 = vmul.f32 %v827, %v852
          %v857 = vmul.f32 %v829, %v852
          %v858 = vmul.f32 %v831, %v852
          %v859 = vmul.f32 %v833, %v852
          %v860 = vmul.f32 %v835, %v852
          %v861 = vmul.f32 %v837, %v852
          %v862 = vmul.f32 %v839, %v852
          %v863 = vmul.f32 %v841, %v852
          %v864 = vmul.f32 %v843, %v852
          %v865 = vmul.f32 %v845, %v852
          %v866 = vmul.f32 %v847, %v852
          %v867 = vmul.f32 %v849, %v852
          %v868 = vmul.f32 %v851, %v852
          %v869 = vsub.f32 %v802, %v853
          %v870 = vsub.f32 %v803, %v854
          %v871 = vsub.f32 %v804, %v855
          %v872 = vsub.f32 %v805, %v856
          %v873 = vsub.f32 %v806, %v857
          %v874 = vsub.f32 %v807, %v858
          %v875 = vsub.f32 %v808, %v859
          %v876 = vsub.f32 %v809, %v860
          %v877 = vsub.f32 %v810, %v861
          %v878 = vsub.f32 %v811, %v862
          %v879 = vsub.f32 %v812, %v863
          %v880 = vsub.f32 %v813, %v864
          %v881 = vsub.f32 %v814, %v865
          %v882 = vsub.f32 %v815, %v866
          %v883 = vsub.f32 %v816, %v867
          %v884 = vsub.f32 %v817, %v868
          %v885 = vmul.f32 %v869, %v869
          %v886 = vmul.f32 %v870, %v870
          %v887 = vmul.f32 %v871, %v871
          %v888 = vmul.f32 %v872, %v872
          %v889 = vmul.f32 %v873, %v873
          %v890 = vmul.f32 %v874, %v874
          %v891 = vmul.f32 %v875, %v875
          %v892 = vmul.f32 %v876, %v876
          %v893 = vmul.f32 %v877, %v877
          %v894 = vmul.f32 %v878, %v878
          %v895 = vmul.f32 %v879, %v879
          %v896 = vmul.f32 %v880, %v880
          %v897 = vmul.f32 %v881, %v881
          %v898 = vmul.f32 %v882, %v882
          %v899 = vmul.f32 %v883, %v883
          %v900 = vmul.f32 %v884, %v884
          %901 = vadd.xlane.f32.xlu0 %v885
          %v902 = vpop.xlane.xlu0 %901
          %903 = vadd.xlane.f32.xlu0 %v886
          %v904 = vpop.xlane.xlu0 %903
          %905 = vadd.xlane.f32.xlu0 %v887
          %v906 = vpop.xlane.xlu0 %905
          %907 = vadd.xlane.f32.xlu0 %v888
          %v908 = vpop.xlane.xlu0 %907
          %909 = vadd.xlane.f32.xlu0 %v889
          %v910 = vpop.xlane.xlu0 %909
          %911 = vadd.xlane.f32.xlu0 %v890
          %v912 = vpop.xlane.xlu0 %911
          %913 = vadd.xlane.f32.xlu0 %v891
          %v914 = vpop.xlane.xlu0 %913
          %915 = vadd.xlane.f32.xlu0 %v892
          %v916 = vpop.xlane.xlu0 %915
          %917 = vadd.xlane.f32.xlu0 %v893
          %v918 = vpop.xlane.xlu0 %917
          %919 = vadd.xlane.f32.xlu0 %v894
          %v920 = vpop.xlane.xlu0 %919
          %921 = vadd.xlane.f32.xlu0 %v895
          %v922 = vpop.xlane.xlu0 %921
          %923 = vadd.xlane.f32.xlu0 %v896
          %v924 = vpop.xlane.xlu0 %923
          %925 = vadd.xlane.f32.xlu0 %v897
          %v926 = vpop.xlane.xlu0 %925
          %927 = vadd.xlane.f32.xlu0 %v898
          %v928 = vpop.xlane.xlu0 %927
          %929 = vadd.xlane.f32.xlu0 %v899
          %v930 = vpop.xlane.xlu0 %929
          %931 = vadd.xlane.f32.xlu0 %v900
          %v932 = vpop.xlane.xlu0 %931
          %v933 = vmul.f32 %v902, %v852
          %v934 = vmul.f32 %v904, %v852
          %v935 = vmul.f32 %v906, %v852
          %v936 = vmul.f32 %v908, %v852
          %v937 = vmul.f32 %v910, %v852
          %v938 = vmul.f32 %v912, %v852
          %v939 = vmul.f32 %v914, %v852
          %v940 = vmul.f32 %v916, %v852
          %v941 = vmul.f32 %v918, %v852
          %v942 = vmul.f32 %v920, %v852
          %v943 = vmul.f32 %v922, %v852
          %v944 = vmul.f32 %v924, %v852
          %v945 = vmul.f32 %v926, %v852
          %v946 = vmul.f32 %v928, %v852
          %v947 = vmul.f32 %v930, %v852
          %v948 = vmul.f32 %v932, %v852
          %v949 = vadd.f32 %v933, 1e-12
          %v950 = vadd.f32 %v934, 1e-12
          %v951 = vadd.f32 %v935, 1e-12
          %v952 = vadd.f32 %v936, 1e-12
          %v953 = vadd.f32 %v937, 1e-12
          %v954 = vadd.f32 %v938, 1e-12
          %v955 = vadd.f32 %v939, 1e-12
          %v956 = vadd.f32 %v940, 1e-12
          %v957 = vadd.f32 %v941, 1e-12
          %v958 = vadd.f32 %v942, 1e-12
          %v959 = vadd.f32 %v943, 1e-12
          %v960 = vadd.f32 %v944, 1e-12
          %v961 = vadd.f32 %v945, 1e-12
          %v962 = vadd.f32 %v946, 1e-12
          %v963 = vadd.f32 %v947, 1e-12
          %v964 = vadd.f32 %v948, 1e-12
          %v965 = vrsqrt.pop %v949
          %v966 = vrsqrt.pop %v950
          %v967 = vrsqrt.pop %v951
          %v968 = vrsqrt.pop %v952
          %v969 = vrsqrt.pop %v953
          %v970 = vrsqrt.pop %v954
          %v971 = vrsqrt.pop %v955
          %v972 = vrsqrt.pop %v956
          %v973 = vrsqrt.pop %v957
          %v974 = vrsqrt.pop %v958
          %v975 = vrsqrt.pop %v959
          %v976 = vrsqrt.pop %v960
          %v977 = vrsqrt.pop %v961
          %v978 = vrsqrt.pop %v962
          %v979 = vrsqrt.pop %v963
          %v980 = vrsqrt.pop %v964
          %v981 = vmul.f32 %v869, %v965
          %v982 = vmul.f32 %v870, %v966
          %v983 = vmul.f32 %v871, %v967
          %v984 = vmul.f32 %v872, %v968
          %v985 = vmul.f32 %v873, %v969
          %v986 = vmul.f32 %v874, %v970
          %v987 = vmul.f32 %v875, %v971
          %v988 = vmul.f32 %v876, %v972
          %v989 = vmul.f32 %v877, %v973
          %v990 = vmul.f32 %v878, %v974
          %v991 = vmul.f32 %v879, %v975
          %v992 = vmul.f32 %v880, %v976
          %v993 = vmul.f32 %v881, %v977
          %v994 = vmul.f32 %v882, %v978
          %v995 = vmul.f32 %v883, %v979
          %v996 = vmul.f32 %v884, %v980
          %v998 = vlaneseq
          %v999 = vshrl.u32 %v998, 7
          %v1000 = vsub.s32 0, %v999
          %v1001 = vrot.slane %v818, %v1000
          %v1003 = vmul.f32 %v981, %v1001
          %v1004 = vmul.f32 %v982, %v1001
          %v1005 = vmul.f32 %v983, %v1001
          %v1006 = vmul.f32 %v984, %v1001
          %v1007 = vmul.f32 %v985, %v1001
          %v1008 = vmul.f32 %v986, %v1001
          %v1009 = vmul.f32 %v987, %v1001
          %v1010 = vmul.f32 %v988, %v1001
          %v1011 = vmul.f32 %v989, %v1001
          %v1012 = vmul.f32 %v990, %v1001
          %v1013 = vmul.f32 %v991, %v1001
          %v1014 = vmul.f32 %v992, %v1001
          %v1015 = vmul.f32 %v993, %v1001
          %v1016 = vmul.f32 %v994, %v1001
          %v1017 = vmul.f32 %v995, %v1001
          %v1018 = vmul.f32 %v996, %v1001
          %v1020 = vlaneseq
          %v1021 = vshrl.u32 %v1020, 7
          %v1022 = vsub.s32 0, %v1021
          %v1023 = vrot.slane %v819, %v1022
          %v1025 = vadd.f32 %v1003, %v1023
          %v1026 = vadd.f32 %v1004, %v1023
          %v1027 = vadd.f32 %v1005, %v1023
          %v1028 = vadd.f32 %v1006, %v1023
          %v1029 = vadd.f32 %v1007, %v1023
          %v1030 = vadd.f32 %v1008, %v1023
          %v1031 = vadd.f32 %v1009, %v1023
          %v1032 = vadd.f32 %v1010, %v1023
          %v1033 = vadd.f32 %v1011, %v1023
          %v1034 = vadd.f32 %v1012, %v1023
          %v1035 = vadd.f32 %v1013, %v1023
          %v1036 = vadd.f32 %v1014, %v1023
          %v1037 = vadd.f32 %v1015, %v1023
          %v1038 = vadd.f32 %v1016, %v1023
          %v1039 = vadd.f32 %v1017, %v1023
          %v1040 = vadd.f32 %v1018, %v1023
          %1041 = vst [vmem:[#allocation2] sm:$0xff] %v1025
          %1042 = vst [vmem:[#allocation2 + $0x8] sm:$0xff] %v1026
          %1043 = vst [vmem:[#allocation2 + $0x10] sm:$0xff] %v1027
          %1044 = vst [vmem:[#allocation2 + $0x18] sm:$0xff] %v1028
          %1045 = vst [vmem:[#allocation2 + $0x20] sm:$0xff] %v1029
          %1046 = vst [vmem:[#allocation2 + $0x28] sm:$0xff] %v1030
          %1047 = vst [vmem:[#allocation2 + $0x30] sm:$0xff] %v1031
          %1048 = vst [vmem:[#allocation2 + $0x38] sm:$0xff] %v1032
          %1049 = vst [vmem:[#allocation2 + $0x40] sm:$0xff] %v1033
          %1050 = vst [vmem:[#allocation2 + $0x48] sm:$0xff] %v1034
          %1051 = vst [vmem:[#allocation2 + $0x50] sm:$0xff] %v1035
          %1052 = vst [vmem:[#allocation2 + $0x58] sm:$0xff] %v1036
          %1053 = vst [vmem:[#allocation2 + $0x60] sm:$0xff] %v1037
          %1054 = vst [vmem:[#allocation2 + $0x68] sm:$0xff] %v1038
          %1055 = vst [vmem:[#allocation2 + $0x70] sm:$0xff] %v1039
          %1056 = vst [vmem:[#allocation2 + $0x78] sm:$0xff] %v1040
        $region96: #{sent_bert_forward.1} parent=91 // pred_fallthru
          _
        %v1057 = vld [vmem:[#allocation2] sm:$0xff]
        %v1058 = vld [vmem:[#allocation2 + $0x8] sm:$0xff]
        %v1059 = vld [vmem:[#allocation2 + $0x10] sm:$0xff]
        %v1060 = vld [vmem:[#allocation2 + $0x18] sm:$0xff]
        %v1061 = vld [vmem:[#allocation2 + $0x20] sm:$0xff]
        %v1062 = vld [vmem:[#allocation2 + $0x28] sm:$0xff]
        %v1063 = vld [vmem:[#allocation2 + $0x30] sm:$0xff]
        %v1064 = vld [vmem:[#allocation2 + $0x38] sm:$0xff]
        %v1065 = vld [vmem:[#allocation2 + $0x40] sm:$0xff]
        %v1066 = vld [vmem:[#allocation2 + $0x48] sm:$0xff]
        %v1067 = vld [vmem:[#allocation2 + $0x50] sm:$0xff]
        %v1068 = vld [vmem:[#allocation2 + $0x58] sm:$0xff]
        %v1069 = vld [vmem:[#allocation2 + $0x60] sm:$0xff]
        %v1070 = vld [vmem:[#allocation2 + $0x68] sm:$0xff]
        %v1071 = vld [vmem:[#allocation2 + $0x70] sm:$0xff]
        %v1072 = vld [vmem:[#allocation2 + $0x78] sm:$0xff]
        %v1073 = vpack.c.bf16 %v1058, %v1057
        %v1074 = vpack.c.bf16 %v1060, %v1059
        %v1075 = vpack.c.bf16 %v1062, %v1061
        %v1076 = vpack.c.bf16 %v1064, %v1063
        %v1077 = vpack.c.bf16 %v1066, %v1065
        %v1078 = vpack.c.bf16 %v1068, %v1067
        %v1079 = vpack.c.bf16 %v1070, %v1069
        %v1080 = vpack.c.bf16 %v1072, %v1071
        %v1081 = vld [vmem:[%s750] sm:$0x1]
        %v1082 = vld [vmem:[%s755] sm:$0xff]
        %v1083 = vld [vmem:[%s755 + $0x8] sm:$0xf]
        %v1084 = vld [vmem:[%s755 + $0xc] sm:$0xff]
        %v1085 = vld [vmem:[%s755 + $0x14] sm:$0xf]
        %v1086 = vld [vmem:[%s755 + $0x18] sm:$0xff]
        %v1087 = vld [vmem:[%s755 + $0x20] sm:$0xf]
        %v1088 = vld [vmem:[%s755 + $0x24] sm:$0xff]
        %v1089 = vld [vmem:[%s755 + $0x2c] sm:$0xf]
        %v1090 = vld [vmem:[%s755 + $0x30] sm:$0xff]
        %v1091 = vld [vmem:[%s755 + $0x38] sm:$0xf]
        %v1092 = vld [vmem:[%s755 + $0x3c] sm:$0xff]
        %v1093 = vld [vmem:[%s755 + $0x44] sm:$0xf]
        %v1094 = vld [vmem:[%s755 + $0x48] sm:$0xff]
        %v1095 = vld [vmem:[%s755 + $0x50] sm:$0xf]
        %v1096 = vld [vmem:[%s755 + $0x54] sm:$0xff]
        %v1097 = vld [vmem:[%s755 + $0x5c] sm:$0xf]
        %v1098 = vld [vmem:[%s755 + $0x60] sm:$0xff]
        %v1099 = vld [vmem:[%s755 + $0x68] sm:$0xf]
        %v1100 = vld [vmem:[%s755 + $0x6c] sm:$0xff]
        %v1101 = vld [vmem:[%s755 + $0x74] sm:$0xf]
        %v1102 = vld [vmem:[%s755 + $0x78] sm:$0xff]
        %v1103 = vld [vmem:[%s755 + $0x80] sm:$0xf]
        %v1104 = vld [vmem:[%s755 + $0x84] sm:$0xff]
        %v1105 = vld [vmem:[%s755 + $0x8c] sm:$0xf]
        %v1106 = vld [vmem:[%s755 + $0x90] sm:$0xff]
        %v1107 = vld [vmem:[%s755 + $0x98] sm:$0xf]
        %v1108 = vld [vmem:[%s755 + $0x9c] sm:$0xff]
        %v1109 = vld [vmem:[%s755 + $0xa4] sm:$0xf]
        %v1110 = vld [vmem:[%s755 + $0xa8] sm:$0xff]
        %v1111 = vld [vmem:[%s755 + $0xb0] sm:$0xf]
        %v1112 = vld [vmem:[%s755 + $0xb4] sm:$0xff]
        %v1113 = vld [vmem:[%s755 + $0xbc] sm:$0xf]
        %v1114 = vld [vmem:[%s759] sm:$0x7]
        %v1116 = vlaneseq
        %v1117 = vshrl.u32 %v1116, 7
        %v1118 = vsub.s32 0, %v1117
        %v1119 = vrot.slane %v1114, %v1118
        %v1120 = vlaneseq
        %v1121 = vshrl.u32 %v1120, 7
        %v1122 = vsub.s32 1, %v1121
        %v1123 = vrot.slane %v1114, %v1122
        %v1124 = vlaneseq
        %v1125 = vshrl.u32 %v1124, 7
        %v1126 = vsub.s32 2, %v1125
        %v1127 = vrot.slane %v1114, %v1126
        %v1163 = vunpack.c.l.b16 %v1082
        %v1164 = vunpack.c.h.b16 %v1082
        %v1165 = vunpack.c.l.b16 %v1083
        %v1166 = vunpack.c.l.b16 %v1084
        %v1167 = vunpack.c.h.b16 %v1084
        %v1168 = vunpack.c.l.b16 %v1085
        %v1169 = vunpack.c.l.b16 %v1086
        %v1170 = vunpack.c.h.b16 %v1086
        %v1171 = vunpack.c.l.b16 %v1087
        %v1172 = vunpack.c.l.b16 %v1088
        %v1173 = vunpack.c.h.b16 %v1088
        %v1174 = vunpack.c.l.b16 %v1089
        %v1175 = vunpack.c.l.b16 %v1090
        %v1176 = vunpack.c.h.b16 %v1090
        %v1177 = vunpack.c.l.b16 %v1091
        %v1178 = vunpack.c.l.b16 %v1092
        %v1179 = vunpack.c.h.b16 %v1092
        %v1180 = vunpack.c.l.b16 %v1093
        %v1181 = vunpack.c.l.b16 %v1094
        %v1182 = vunpack.c.h.b16 %v1094
        %v1183 = vunpack.c.l.b16 %v1095
        %v1184 = vunpack.c.l.b16 %v1096
        %v1185 = vunpack.c.h.b16 %v1096
        %v1186 = vunpack.c.l.b16 %v1097
        %v1187 = vunpack.c.l.b16 %v1098
        %v1188 = vunpack.c.h.b16 %v1098
        %v1189 = vunpack.c.l.b16 %v1099
        %v1190 = vunpack.c.l.b16 %v1100
        %v1191 = vunpack.c.h.b16 %v1100
        %v1192 = vunpack.c.l.b16 %v1101
        %v1193 = vunpack.c.l.b16 %v1102
        %v1194 = vunpack.c.h.b16 %v1102
        %v1195 = vunpack.c.l.b16 %v1103
        %v1196 = vunpack.c.l.b16 %v1104
        %v1197 = vunpack.c.h.b16 %v1104
        %v1198 = vunpack.c.l.b16 %v1105
        %v1199 = vunpack.c.l.b16 %v1106
        %v1200 = vunpack.c.h.b16 %v1106
        %v1201 = vunpack.c.l.b16 %v1107
        %v1202 = vunpack.c.l.b16 %v1108
        %v1203 = vunpack.c.h.b16 %v1108
        %v1204 = vunpack.c.l.b16 %v1109
        %v1205 = vunpack.c.l.b16 %v1110
        %v1206 = vunpack.c.h.b16 %v1110
        %v1207 = vunpack.c.l.b16 %v1111
        %v1208 = vunpack.c.l.b16 %v1112
        %v1209 = vunpack.c.h.b16 %v1112
        %v1210 = vunpack.c.l.b16 %v1113
        %v1211 = vpack.c.b16 %v1166, %v1163
        %v1212 = vpack.c.b16 %v1167, %v1164
        %v1213 = vpack.c.b16 %v1168, %v1165
        %v1214 = vpack.c.b16 %v1172, %v1169
        %v1215 = vpack.c.b16 %v1173, %v1170
        %v1216 = vpack.c.b16 %v1174, %v1171
        %v1217 = vpack.c.b16 %v1178, %v1175
        %v1218 = vpack.c.b16 %v1179, %v1176
        %v1219 = vpack.c.b16 %v1180, %v1177
        %v1220 = vpack.c.b16 %v1184, %v1181
        %v1221 = vpack.c.b16 %v1185, %v1182
        %v1222 = vpack.c.b16 %v1186, %v1183
        %v1223 = vpack.c.b16 %v1190, %v1187
        %v1224 = vpack.c.b16 %v1191, %v1188
        %v1225 = vpack.c.b16 %v1192, %v1189
        %v1226 = vpack.c.b16 %v1196, %v1193
        %v1227 = vpack.c.b16 %v1197, %v1194
        %v1228 = vpack.c.b16 %v1198, %v1195
        %v1229 = vpack.c.b16 %v1202, %v1199
        %v1230 = vpack.c.b16 %v1203, %v1200
        %v1231 = vpack.c.b16 %v1204, %v1201
        %v1232 = vpack.c.b16 %v1208, %v1205
        %v1233 = vpack.c.b16 %v1209, %v1206
        %v1234 = vpack.c.b16 %v1210, %v1207
        %1259 = vmatprep.subr.bf16.mxu0 %v1212
        %1260 = vmatpush1.bf16.msra.mxu0 %v1211
        %1261 = vmatprep.subr.bf16.mxu0 %v1215
        %1262 = vmatpush1.bf16.msra.mxu0 %v1214
        %1263 = vmatprep.subr.bf16.mxu0 %v1218
        %1264 = vmatpush1.bf16.msra.mxu0 %v1217
        %1265 = vmatprep.subr.bf16.mxu0 %v1221
        %1266 = vmatpush1.bf16.msra.mxu0 %v1220
        %1267 = vmatprep.subr.bf16.mxu0 %v1224
        %1268 = vmatpush1.bf16.msra.mxu0 %v1223
        %1269 = vmatprep.subr.bf16.mxu0 %v1227
        %1270 = vmatpush1.bf16.msra.mxu0 %v1226
        %1271 = vmatprep.subr.bf16.mxu0 %v1230
        %1272 = vmatpush1.bf16.msra.mxu0 %v1229
        %1273 = vmatprep.subr.bf16.mxu0 %v1233
        %1274 = vmatpush1.bf16.msra.mxu0 %v1232
        %1275 = vmatprep.subr.bf16.mxu0 0
        %1276 = vmatpush1.bf16.msra.mxu0 0
        %1277 = vmatprep.subr.bf16.mxu0 0
        %1278 = vmatpush1.bf16.msra.mxu0 0
        %1279 = vmatprep.subr.bf16.mxu0 0
        %1280 = vmatpush1.bf16.msra.mxu0 0
        %1281 = vmatprep.subr.bf16.mxu0 0
        %1282 = vmatpush1.bf16.msra.mxu0 0
        %1283 = vmatprep.subr.bf16.mxu0 0
        %1284 = vmatpush1.bf16.msra.mxu0 0
        %1285 = vmatprep.subr.bf16.mxu0 0
        %1286 = vmatpush1.bf16.msra.mxu0 0
        %1287 = vmatprep.subr.bf16.mxu0 0
        %1288 = vmatpush1.bf16.msra.mxu0 0
        %1289 = vmatprep.subr.bf16.mxu0 0
        %1290 = vmatpush1.bf16.msra.mxu0 0
        %1291 = vmatprep.mubr.bf16.mxu0 0
        %1292 = vmatmul.mubr.bf16.gmra.mrb[0].mxu0 %v1073
        %v1293 = vpop.f32.mrb[0].mxu0
        %v1294 = vadd.f32 %v1119, %v1293
        %v1295 = vpop.f32.mrb[0].mxu0
        %v1296 = vadd.f32 %v1123, %v1295
        %v1297 = vpop.f32.mrb[0].mxu0
        %v1298 = vadd.f32 %v1119, %v1297
        %v1299 = vpop.f32.mrb[0].mxu0
        %v1300 = vadd.f32 %v1123, %v1299
        %1301 = vmatprep.mubr.bf16.mxu0 0
        %1302 = vmatmul.mubr.bf16.gmra.mrb[0].mxu0 %v1074
        %v1303 = vpop.f32.mrb[0].mxu0
        %v1304 = vadd.f32 %v1119, %v1303
        %v1305 = vpop.f32.mrb[0].mxu0
        %v1306 = vadd.f32 %v1123, %v1305
        %v1307 = vpop.f32.mrb[0].mxu0
        %v1308 = vadd.f32 %v1119, %v1307
        %v1309 = vpop.f32.mrb[0].mxu0
        %v1310 = vadd.f32 %v1123, %v1309
        %1311 = vmatprep.mubr.bf16.mxu0 0
        %1312 = vmatmul.mubr.bf16.gmra.mrb[0].mxu0 %v1075
        %v1313 = vpop.f32.mrb[0].mxu0
        %v1314 = vadd.f32 %v1119, %v1313
        %v1315 = vpop.f32.mrb[0].mxu0
        %v1316 = vadd.f32 %v1123, %v1315
        %v1317 = vpop.f32.mrb[0].mxu0
        %v1318 = vadd.f32 %v1119, %v1317
        %v1319 = vpop.f32.mrb[0].mxu0
        %v1320 = vadd.f32 %v1123, %v1319
        %1321 = vmatprep.mubr.bf16.mxu0 0
        %1322 = vmatmul.mubr.bf16.gmra.mrb[0].mxu0 %v1076
        %v1323 = vpop.f32.mrb[0].mxu0
        %v1324 = vadd.f32 %v1119, %v1323
        %v1325 = vpop.f32.mrb[0].mxu0
        %v1326 = vadd.f32 %v1123, %v1325
        %v1327 = vpop.f32.mrb[0].mxu0
        %v1328 = vadd.f32 %v1119, %v1327
        %v1329 = vpop.f32.mrb[0].mxu0
        %v1330 = vadd.f32 %v1123, %v1329
        %1331 = vmatprep.mubr.bf16.mxu0 0
        %1332 = vmatmul.mubr.bf16.gmra.mrb[0].mxu0 %v1077
        %v1333 = vpop.f32.mrb[0].mxu0
        %v1334 = vadd.f32 %v1119, %v1333
        %v1335 = vpop.f32.mrb[0].mxu0
        %v1336 = vadd.f32 %v1123, %v1335
        %v1337 = vpop.f32.mrb[0].mxu0
        %v1338 = vadd.f32 %v1119, %v1337
        %v1339 = vpop.f32.mrb[0].mxu0
        %v1340 = vadd.f32 %v1123, %v1339
        %1341 = vmatprep.mubr.bf16.mxu0 0
        %1342 = vmatmul.mubr.bf16.gmra.mrb[0].mxu0 %v1078
        %v1343 = vpop.f32.mrb[0].mxu0
        %v1344 = vadd.f32 %v1119, %v1343
        %v1345 = vpop.f32.mrb[0].mxu0
        %v1346 = vadd.f32 %v1123, %v1345
        %v1347 = vpop.f32.mrb[0].mxu0
        %v1348 = vadd.f32 %v1119, %v1347
        %v1349 = vpop.f32.mrb[0].mxu0
        %v1350 = vadd.f32 %v1123, %v1349
        %1351 = vmatprep.mubr.bf16.mxu0 0
        %1352 = vmatmul.mubr.bf16.gmra.mrb[0].mxu0 %v1079
        %v1353 = vpop.f32.mrb[0].mxu0
        %v1354 = vadd.f32 %v1119, %v1353
        %v1355 = vpop.f32.mrb[0].mxu0
        %v1356 = vadd.f32 %v1123, %v1355
        %v1357 = vpop.f32.mrb[0].mxu0
        %v1358 = vadd.f32 %v1119, %v1357
        %v1359 = vpop.f32.mrb[0].mxu0
        %v1360 = vadd.f32 %v1123, %v1359
        %1361 = vmatprep.mubr.bf16.mxu0 0
        %1362 = vmatmul.mubr.bf16.gmra.mrb[0].mxu0 %v1080
        %v1363 = vpop.f32.mrb[0].mxu0
        %v1364 = vadd.f32 %v1119, %v1363
        %v1365 = vpop.f32.mrb[0].mxu0
        %v1366 = vadd.f32 %v1123, %v1365
        %v1367 = vpop.f32.mrb[0].mxu0
        %v1368 = vadd.f32 %v1119, %v1367
        %v1369 = vpop.f32.mrb[0].mxu0
        %v1370 = vadd.f32 %v1123, %v1369
        %1371 = vdwg.mxu0
        %1372 = vmatprep.subr.bf16.mxu0 0
        %1373 = vmatpush1.bf16.msra.mxu0 %v1213
        %1374 = vmatprep.subr.bf16.mxu0 0
        %1375 = vmatpush1.bf16.msra.mxu0 %v1216
        %1376 = vmatprep.subr.bf16.mxu0 0
        %1377 = vmatpush1.bf16.msra.mxu0 %v1219
        %1378 = vmatprep.subr.bf16.mxu0 0
        %1379 = vmatpush1.bf16.msra.mxu0 %v1222
        %1380 = vmatprep.subr.bf16.mxu0 0
        %1381 = vmatpush1.bf16.msra.mxu0 %v1225
        %1382 = vmatprep.subr.bf16.mxu0 0
        %1383 = vmatpush1.bf16.msra.mxu0 %v1228
        %1384 = vmatprep.subr.bf16.mxu0 0
        %1385 = vmatpush1.bf16.msra.mxu0 %v1231
        %1386 = vmatprep.subr.bf16.mxu0 0
        %1387 = vmatpush1.bf16.msra.mxu0 %v1234
        %1388 = vmatprep.subr.bf16.mxu0 0
        %1389 = vmatpush1.bf16.msra.mxu0 0
        %1390 = vmatprep.subr.bf16.mxu0 0
        %1391 = vmatpush1.bf16.msra.mxu0 0
        %1392 = vmatprep.subr.bf16.mxu0 0
        %1393 = vmatpush1.bf16.msra.mxu0 0
        %1394 = vmatprep.subr.bf16.mxu0 0
        %1395 = vmatpush1.bf16.msra.mxu0 0
        %1396 = vmatprep.subr.bf16.mxu0 0
        %1397 = vmatpush1.bf16.msra.mxu0 0
        %1398 = vmatprep.subr.bf16.mxu0 0
        %1399 = vmatpush1.bf16.msra.mxu0 0
        %1400 = vmatprep.subr.bf16.mxu0 0
        %1401 = vmatpush1.bf16.msra.mxu0 0
        %1402 = vmatprep.subr.bf16.mxu0 0
        %1403 = vmatpush1.bf16.msra.mxu0 0
        %1404 = vmatprep.mubr.bf16.mxu0 0
        %1405 = vmatmul.mubr.bf16.gmra.mrb[0].mxu0 %v1073
        %v1406 = vpop.f32.mrb[0].mxu0
        %v1407 = vadd.f32 %v1127, %v1406
        %v1408 = vpop.f32.mrb[0].mxu0
        %v1409 = vpop.f32.mrb[0].mxu0
        %v1410 = vadd.f32 %v1127, %v1409
        %v1411 = vpop.f32.mrb[0].mxu0
        %1412 = vmatprep.mubr.bf16.mxu0 0
        %1413 = vmatmul.mubr.bf16.gmra.mrb[0].mxu0 %v1074
        %v1414 = vpop.f32.mrb[0].mxu0
        %v1415 = vadd.f32 %v1127, %v1414
        %v1416 = vpop.f32.mrb[0].mxu0
        %v1417 = vpop.f32.mrb[0].mxu0
        %v1418 = vadd.f32 %v1127, %v1417
        %v1419 = vpop.f32.mrb[0].mxu0
        %1420 = vmatprep.mubr.bf16.mxu0 0
        %1421 = vmatmul.mubr.bf16.gmra.mrb[0].mxu0 %v1075
        %v1422 = vpop.f32.mrb[0].mxu0
        %v1423 = vadd.f32 %v1127, %v1422
        %v1424 = vpop.f32.mrb[0].mxu0
        %v1425 = vpop.f32.mrb[0].mxu0
        %v1426 = vadd.f32 %v1127, %v1425
        %v1427 = vpop.f32.mrb[0].mxu0
        %1428 = vmatprep.mubr.bf16.mxu0 0
        %1429 = vmatmul.mubr.bf16.gmra.mrb[0].mxu0 %v1076
        %v1430 = vpop.f32.mrb[0].mxu0
        %v1431 = vadd.f32 %v1127, %v1430
        %v1432 = vpop.f32.mrb[0].mxu0
        %v1433 = vpop.f32.mrb[0].mxu0
        %v1434 = vadd.f32 %v1127, %v1433
        %v1435 = vpop.f32.mrb[0].mxu0
        %1436 = vmatprep.mubr.bf16.mxu0 0
        %1437 = vmatmul.mubr.bf16.gmra.mrb[0].mxu0 %v1077
        %v1438 = vpop.f32.mrb[0].mxu0
        %v1439 = vadd.f32 %v1127, %v1438
        %v1440 = vpop.f32.mrb[0].mxu0
        %v1441 = vpop.f32.mrb[0].mxu0
        %v1442 = vadd.f32 %v1127, %v1441
        %v1443 = vpop.f32.mrb[0].mxu0
        %1444 = vmatprep.mubr.bf16.mxu0 0
        %1445 = vmatmul.mubr.bf16.gmra.mrb[0].mxu0 %v1078
        %v1446 = vpop.f32.mrb[0].mxu0
        %v1447 = vadd.f32 %v1127, %v1446
        %v1448 = vpop.f32.mrb[0].mxu0
        %v1449 = vpop.f32.mrb[0].mxu0
        %v1450 = vadd.f32 %v1127, %v1449
        %v1451 = vpop.f32.mrb[0].mxu0
        %1452 = vmatprep.mubr.bf16.mxu0 0
        %1453 = vmatmul.mubr.bf16.gmra.mrb[0].mxu0 %v1079
        %v1454 = vpop.f32.mrb[0].mxu0
        %v1455 = vadd.f32 %v1127, %v1454
        %v1456 = vpop.f32.mrb[0].mxu0
        %v1457 = vpop.f32.mrb[0].mxu0
        %v1458 = vadd.f32 %v1127, %v1457
        %v1459 = vpop.f32.mrb[0].mxu0
        %1460 = vmatprep.mubr.bf16.mxu0 0
        %1461 = vmatmul.mubr.bf16.gmra.mrb[0].mxu0 %v1080
        %v1462 = vpop.f32.mrb[0].mxu0
        %v1463 = vadd.f32 %v1127, %v1462
        %v1464 = vpop.f32.mrb[0].mxu0
        %v1465 = vpop.f32.mrb[0].mxu0
        %v1466 = vadd.f32 %v1127, %v1465
        %v1467 = vpop.f32.mrb[0].mxu0
        %1468 = vdwg.mxu0
        %v1469 = vpack.c.bf16 %v1298, %v1294
        %v1470 = vpack.c.bf16 %v1308, %v1304
        %v1471 = vpack.c.bf16 %v1318, %v1314
        %v1472 = vpack.c.bf16 %v1328, %v1324
        %v1473 = vpack.c.bf16 %v1338, %v1334
        %v1474 = vpack.c.bf16 %v1348, %v1344
        %v1475 = vpack.c.bf16 %v1358, %v1354
        %v1476 = vpack.c.bf16 %v1368, %v1364
        %v1477 = vpack.c.bf16 %v1300, %v1296
        %v1478 = vpack.c.bf16 %v1310, %v1306
        %v1479 = vpack.c.bf16 %v1320, %v1316
        %v1480 = vpack.c.bf16 %v1330, %v1326
        %v1481 = vpack.c.bf16 %v1340, %v1336
        %v1482 = vpack.c.bf16 %v1350, %v1346
        %v1483 = vpack.c.bf16 %v1360, %v1356
        %v1484 = vpack.c.bf16 %v1370, %v1366
        %v1485 = vpack.c.bf16 %v1410, %v1407
        %v1486 = vpack.c.bf16 %v1418, %v1415
        %v1487 = vpack.c.bf16 %v1426, %v1423
        %v1488 = vpack.c.bf16 %v1434, %v1431
        %v1489 = vpack.c.bf16 %v1442, %v1439
        %v1490 = vpack.c.bf16 %v1450, %v1447
        %v1491 = vpack.c.bf16 %v1458, %v1455
        %v1492 = vpack.c.bf16 %v1466, %v1463
        %vm1493 = vcmask 523264
        %v1495 = vsel %vm1493, %v1469, 0
        %v1498 = vsel %vm1493, %v1470, 0
        %v1501 = vsel %vm1493, %v1471, 0
        %v1504 = vsel %vm1493, %v1472, 0
        %v1507 = vsel %vm1493, %v1473, 0
        %v1510 = vsel %vm1493, %v1474, 0
        %v1513 = vsel %vm1493, %v1475, 0
        %v1516 = vsel %vm1493, %v1476, 0
        %v1519 = vsel %vm1493, %v1477, 0
        %v1522 = vsel %vm1493, %v1478, 0
        %v1525 = vsel %vm1493, %v1479, 0
        %v1528 = vsel %vm1493, %v1480, 0
        %v1531 = vsel %vm1493, %v1481, 0
        %v1534 = vsel %vm1493, %v1482, 0
        %v1537 = vsel %vm1493, %v1483, 0
        %v1540 = vsel %vm1493, %v1484, 0
        %1542 = vmatprep.subr.bf16.mxu0 0
        %1543 = vmatpush1.bf16.xpose.msra.mxu0 %v1519
        %1544 = vmatprep.subr.bf16.mxu0 0
        %1545 = vmatpush1.bf16.xpose.msra.mxu0 %v1522
        %1546 = vmatprep.subr.bf16.mxu0 0
        %1547 = vmatpush1.bf16.xpose.msra.mxu0 %v1525
        %1548 = vmatprep.subr.bf16.mxu0 0
        %1549 = vmatpush1.bf16.xpose.msra.mxu0 %v1528
        %1550 = vmatprep.subr.bf16.mxu0 0
        %1551 = vmatpush1.bf16.xpose.msra.mxu0 %v1531
        %1552 = vmatprep.subr.bf16.mxu0 0
        %1553 = vmatpush1.bf16.xpose.msra.mxu0 %v1534
        %1554 = vmatprep.subr.bf16.mxu0 0
        %1555 = vmatpush1.bf16.xpose.msra.mxu0 %v1537
        %1556 = vmatprep.subr.bf16.mxu0 0
        %1557 = vmatpush1.bf16.xpose.msra.mxu0 %v1540
        %1558 = vmatprep.subr.bf16.mxu0 0
        %1559 = vmatpush1.bf16.xpose.msra.mxu0 0
        %1560 = vmatprep.subr.bf16.mxu0 0
        %1561 = vmatpush1.bf16.xpose.msra.mxu0 0
        %1562 = vmatprep.subr.bf16.mxu0 0
        %1563 = vmatpush1.bf16.xpose.msra.mxu0 0
        %1564 = vmatprep.subr.bf16.mxu0 0
        %1565 = vmatpush1.bf16.xpose.msra.mxu0 0
        %1566 = vmatprep.subr.bf16.mxu0 0
        %1567 = vmatpush1.bf16.xpose.msra.mxu0 0
        %1568 = vmatprep.subr.bf16.mxu0 0
        %1569 = vmatpush1.bf16.xpose.msra.mxu0 0
        %1570 = vmatprep.subr.bf16.mxu0 0
        %1571 = vmatpush1.bf16.xpose.msra.mxu0 0
        %1572 = vmatprep.subr.bf16.mxu0 0
        %1573 = vmatpush1.bf16.xpose.msra.mxu0 0
        %1574 = vmatprep.mubr.bf16.mxu0 0
        %1575 = vmatmul.mubr.bf16.gmra.mrb[0].mxu0 %v1495
        %v1576 = vpop.f32.mrb[0].mxu0
        %v1577 = vadd.f32 0.0, %v1576
        %v1578 = vpop.f32.mrb[0].mxu0
        %v1579 = vpop.f32.mrb[0].mxu0
        %v1580 = vadd.f32 0.0, %v1579
        %v1581 = vpop.f32.mrb[0].mxu0
        %1582 = vmatprep.mubr.bf16.mxu0 0
        %1583 = vmatmul.mubr.bf16.gmra.mrb[0].mxu0 %v1498
        %v1584 = vpop.f32.mrb[0].mxu0
        %v1585 = vadd.f32 0.0, %v1584
        %v1586 = vpop.f32.mrb[0].mxu0
        %v1587 = vpop.f32.mrb[0].mxu0
        %v1588 = vadd.f32 0.0, %v1587
        %v1589 = vpop.f32.mrb[0].mxu0
        %1590 = vmatprep.mubr.bf16.mxu0 0
        %1591 = vmatmul.mubr.bf16.gmra.mrb[0].mxu0 %v1501
        %v1592 = vpop.f32.mrb[0].mxu0
        %v1593 = vadd.f32 0.0, %v1592
        %v1594 = vpop.f32.mrb[0].mxu0
        %v1595 = vpop.f32.mrb[0].mxu0
        %v1596 = vadd.f32 0.0, %v1595
        %v1597 = vpop.f32.mrb[0].mxu0
        %1598 = vmatprep.mubr.bf16.mxu0 0
        %1599 = vmatmul.mubr.bf16.gmra.mrb[0].mxu0 %v1504
        %v1600 = vpop.f32.mrb[0].mxu0
        %v1601 = vadd.f32 0.0, %v1600
        %v1602 = vpop.f32.mrb[0].mxu0
        %v1603 = vpop.f32.mrb[0].mxu0
        %v1604 = vadd.f32 0.0, %v1603
        %v1605 = vpop.f32.mrb[0].mxu0
        %1606 = vmatprep.mubr.bf16.mxu0 0
        %1607 = vmatmul.mubr.bf16.gmra.mrb[0].mxu0 %v1507
        %v1608 = vpop.f32.mrb[0].mxu0
        %v1609 = vadd.f32 0.0, %v1608
        %v1610 = vpop.f32.mrb[0].mxu0
        %v1611 = vpop.f32.mrb[0].mxu0
        %v1612 = vadd.f32 0.0, %v1611
        %v1613 = vpop.f32.mrb[0].mxu0
        %1614 = vmatprep.mubr.bf16.mxu0 0
        %1615 = vmatmul.mubr.bf16.gmra.mrb[0].mxu0 %v1510
        %v1616 = vpop.f32.mrb[0].mxu0
        %v1617 = vadd.f32 0.0, %v1616
        %v1618 = vpop.f32.mrb[0].mxu0
        %v1619 = vpop.f32.mrb[0].mxu0
        %v1620 = vadd.f32 0.0, %v1619
        %v1621 = vpop.f32.mrb[0].mxu0
        %1622 = vmatprep.mubr.bf16.mxu0 0
        %1623 = vmatmul.mubr.bf16.gmra.mrb[0].mxu0 %v1513
        %v1624 = vpop.f32.mrb[0].mxu0
        %v1625 = vadd.f32 0.0, %v1624
        %v1626 = vpop.f32.mrb[0].mxu0
        %v1627 = vpop.f32.mrb[0].mxu0
        %v1628 = vadd.f32 0.0, %v1627
        %v1629 = vpop.f32.mrb[0].mxu0
        %1630 = vmatprep.mubr.bf16.mxu0 0
        %1631 = vmatmul.mubr.bf16.gmra.mrb[0].mxu0 %v1516
        %v1632 = vpop.f32.mrb[0].mxu0
        %v1633 = vadd.f32 0.0, %v1632
        %v1634 = vpop.f32.mrb[0].mxu0
        %v1635 = vpop.f32.mrb[0].mxu0
        %v1636 = vadd.f32 0.0, %v1635
        %v1637 = vpop.f32.mrb[0].mxu0
        %1638 = vdwg.mxu0
        %v1639 = vmul.f32 %v1577, 0.125
        %v1640 = vmul.f32 %v1580, 0.125
        %v1641 = vmul.f32 %v1585, 0.125
        %v1642 = vmul.f32 %v1588, 0.125
        %v1643 = vmul.f32 %v1593, 0.125
        %v1644 = vmul.f32 %v1596, 0.125
        %v1645 = vmul.f32 %v1601, 0.125
        %v1646 = vmul.f32 %v1604, 0.125
        %v1647 = vmul.f32 %v1609, 0.125
        %v1648 = vmul.f32 %v1612, 0.125
        %v1649 = vmul.f32 %v1617, 0.125
        %v1650 = vmul.f32 %v1620, 0.125
        %v1651 = vmul.f32 %v1625, 0.125
        %v1652 = vmul.f32 %v1628, 0.125
        %v1653 = vmul.f32 %v1633, 0.125
        %v1654 = vmul.f32 %v1636, 0.125
        %v1656 = vlaneseq
        %v1657 = vshrl.u32 %v1656, 7
        %v1658 = vsub.s32 0, %v1657
        %v1659 = vrot.slane %v1081, %v1658
        %v1661 = vadd.f32 %v1639, %v1659
        %v1662 = vadd.f32 %v1640, %v1659
        %v1663 = vadd.f32 %v1641, %v1659
        %v1664 = vadd.f32 %v1642, %v1659
        %v1665 = vadd.f32 %v1643, %v1659
        %v1666 = vadd.f32 %v1644, %v1659
        %v1667 = vadd.f32 %v1645, %v1659
        %v1668 = vadd.f32 %v1646, %v1659
        %v1669 = vadd.f32 %v1647, %v1659
        %v1670 = vadd.f32 %v1648, %v1659
        %v1671 = vadd.f32 %v1649, %v1659
        %v1672 = vadd.f32 %v1650, %v1659
        %v1673 = vadd.f32 %v1651, %v1659
        %v1674 = vadd.f32 %v1652, %v1659
        %v1675 = vadd.f32 %v1653, %v1659
        %v1676 = vadd.f32 %v1654, %v1659
        %1677 = vmax.xlane.f32.xlu0 %v1661
        %v1678 = vpop.xlane.xlu0 %1677
        %1679 = vmax.xlane.f32.xlu0 %v1662
        %v1680 = vpop.xlane.xlu0 %1679
        %1681 = vmax.xlane.f32.xlu0 %v1663
        %v1682 = vpop.xlane.xlu0 %1681
        %1683 = vmax.xlane.f32.xlu0 %v1664
        %v1684 = vpop.xlane.xlu0 %1683
        %1685 = vmax.xlane.f32.xlu0 %v1665
        %v1686 = vpop.xlane.xlu0 %1685
        %1687 = vmax.xlane.f32.xlu0 %v1666
        %v1688 = vpop.xlane.xlu0 %1687
        %1689 = vmax.xlane.f32.xlu0 %v1667
        %v1690 = vpop.xlane.xlu0 %1689
        %1691 = vmax.xlane.f32.xlu0 %v1668
        %v1692 = vpop.xlane.xlu0 %1691
        %1693 = vmax.xlane.f32.xlu0 %v1669
        %v1694 = vpop.xlane.xlu0 %1693
        %1695 = vmax.xlane.f32.xlu0 %v1670
        %v1696 = vpop.xlane.xlu0 %1695
        %1697 = vmax.xlane.f32.xlu0 %v1671
        %v1698 = vpop.xlane.xlu0 %1697
        %1699 = vmax.xlane.f32.xlu0 %v1672
        %v1700 = vpop.xlane.xlu0 %1699
        %1701 = vmax.xlane.f32.xlu0 %v1673
        %v1702 = vpop.xlane.xlu0 %1701
        %1703 = vmax.xlane.f32.xlu0 %v1674
        %v1704 = vpop.xlane.xlu0 %1703
        %1705 = vmax.xlane.f32.xlu0 %v1675
        %v1706 = vpop.xlane.xlu0 %1705
        %1707 = vmax.xlane.f32.xlu0 %v1676
        %v1708 = vpop.xlane.xlu0 %1707
        %v1709 = vsub.f32 %v1661, %v1678
        %v1710 = vsub.f32 %v1662, %v1680
        %v1711 = vsub.f32 %v1663, %v1682
        %v1712 = vsub.f32 %v1664, %v1684
        %v1713 = vsub.f32 %v1665, %v1686
        %v1714 = vsub.f32 %v1666, %v1688
        %v1715 = vsub.f32 %v1667, %v1690
        %v1716 = vsub.f32 %v1668, %v1692
        %v1717 = vsub.f32 %v1669, %v1694
        %v1718 = vsub.f32 %v1670, %v1696
        %v1719 = vsub.f32 %v1671, %v1698
        %v1720 = vsub.f32 %v1672, %v1700
        %v1721 = vsub.f32 %v1673, %v1702
        %v1722 = vsub.f32 %v1674, %v1704
        %v1723 = vsub.f32 %v1675, %v1706
        %v1724 = vsub.f32 %v1676, %v1708
        %v1725 = vmul.f32 %v1709, 1.442695
        %v1726 = vpow.pop %v1725
        %v1727 = vmul.f32 %v1710, 1.442695
        %v1728 = vpow.pop %v1727
        %v1729 = vmul.f32 %v1711, 1.442695
        %v1730 = vpow.pop %v1729
        %v1731 = vmul.f32 %v1712, 1.442695
        %v1732 = vpow.pop %v1731
        %v1733 = vmul.f32 %v1713, 1.442695
        %v1734 = vpow.pop %v1733
        %v1735 = vmul.f32 %v1714, 1.442695
        %v1736 = vpow.pop %v1735
        %v1737 = vmul.f32 %v1715, 1.442695
        %v1738 = vpow.pop %v1737
        %v1739 = vmul.f32 %v1716, 1.442695
        %v1740 = vpow.pop %v1739
        %v1741 = vmul.f32 %v1717, 1.442695
        %v1742 = vpow.pop %v1741
        %v1743 = vmul.f32 %v1718, 1.442695
        %v1744 = vpow.pop %v1743
        %v1745 = vmul.f32 %v1719, 1.442695
        %v1746 = vpow.pop %v1745
        %v1747 = vmul.f32 %v1720, 1.442695
        %v1748 = vpow.pop %v1747
        %v1749 = vmul.f32 %v1721, 1.442695
        %v1750 = vpow.pop %v1749
        %v1751 = vmul.f32 %v1722, 1.442695
        %v1752 = vpow.pop %v1751
        %v1753 = vmul.f32 %v1723, 1.442695
        %v1754 = vpow.pop %v1753
        %v1755 = vmul.f32 %v1724, 1.442695
        %v1756 = vpow.pop %v1755
        %1757 = vadd.xlane.f32.xlu0 %v1726
        %v1758 = vpop.xlane.xlu0 %1757
        %1759 = vadd.xlane.f32.xlu0 %v1728
        %v1760 = vpop.xlane.xlu0 %1759
        %1761 = vadd.xlane.f32.xlu0 %v1730
        %v1762 = vpop.xlane.xlu0 %1761
        %1763 = vadd.xlane.f32.xlu0 %v1732
        %v1764 = vpop.xlane.xlu0 %1763
        %1765 = vadd.xlane.f32.xlu0 %v1734
        %v1766 = vpop.xlane.xlu0 %1765
        %1767 = vadd.xlane.f32.xlu0 %v1736
        %v1768 = vpop.xlane.xlu0 %1767
        %1769 = vadd.xlane.f32.xlu0 %v1738
        %v1770 = vpop.xlane.xlu0 %1769
        %1771 = vadd.xlane.f32.xlu0 %v1740
        %v1772 = vpop.xlane.xlu0 %1771
        %1773 = vadd.xlane.f32.xlu0 %v1742
        %v1774 = vpop.xlane.xlu0 %1773
        %1775 = vadd.xlane.f32.xlu0 %v1744
        %v1776 = vpop.xlane.xlu0 %1775
        %1777 = vadd.xlane.f32.xlu0 %v1746
        %v1778 = vpop.xlane.xlu0 %1777
        %1779 = vadd.xlane.f32.xlu0 %v1748
        %v1780 = vpop.xlane.xlu0 %1779
        %1781 = vadd.xlane.f32.xlu0 %v1750
        %v1782 = vpop.xlane.xlu0 %1781
        %1783 = vadd.xlane.f32.xlu0 %v1752
        %v1784 = vpop.xlane.xlu0 %1783
        %1785 = vadd.xlane.f32.xlu0 %v1754
        %v1786 = vpop.xlane.xlu0 %1785
        %1787 = vadd.xlane.f32.xlu0 %v1756
        %v1788 = vpop.xlane.xlu0 %1787
        %v1789 = vrcp.pop %v1758
        %v1790 = vrcp.pop %v1760
        %v1791 = vrcp.pop %v1762
        %v1792 = vrcp.pop %v1764
        %v1793 = vrcp.pop %v1766
        %v1794 = vrcp.pop %v1768
        %v1795 = vrcp.pop %v1770
        %v1796 = vrcp.pop %v1772
        %v1797 = vrcp.pop %v1774
        %v1798 = vrcp.pop %v1776
        %v1799 = vrcp.pop %v1778
        %v1800 = vrcp.pop %v1780
        %v1801 = vrcp.pop %v1782
        %v1802 = vrcp.pop %v1784
        %v1803 = vrcp.pop %v1786
        %v1804 = vrcp.pop %v1788
        %v1805 = vmul.f32 %v1726, %v1789
        %v1806 = vmul.f32 %v1728, %v1790
        %v1807 = vmul.f32 %v1730, %v1791
        %v1808 = vmul.f32 %v1732, %v1792
        %v1809 = vmul.f32 %v1734, %v1793
        %v1810 = vmul.f32 %v1736, %v1794
        %v1811 = vmul.f32 %v1738, %v1795
        %v1812 = vmul.f32 %v1740, %v1796
        %v1813 = vmul.f32 %v1742, %v1797
        %v1814 = vmul.f32 %v1744, %v1798
        %v1815 = vmul.f32 %v1746, %v1799
        %v1816 = vmul.f32 %v1748, %v1800
        %v1817 = vmul.f32 %v1750, %v1801
        %v1818 = vmul.f32 %v1752, %v1802
        %v1819 = vmul.f32 %v1754, %v1803
        %v1820 = vmul.f32 %v1756, %v1804
        %v1821 = vpack.c.bf16 %v1806, %v1805
        %v1822 = vpack.c.bf16 %v1808, %v1807
        %v1823 = vpack.c.bf16 %v1810, %v1809
        %v1824 = vpack.c.bf16 %v1812, %v1811
        %v1825 = vpack.c.bf16 %v1814, %v1813
        %v1826 = vpack.c.bf16 %v1816, %v1815
        %v1827 = vpack.c.bf16 %v1818, %v1817
        %v1828 = vpack.c.bf16 %v1820, %v1819
        %1829 = vmatprep.subr.bf16.mxu0 0
        %1830 = vmatpush1.bf16.msra.mxu0 %v1485
        %1831 = vmatprep.subr.bf16.mxu0 0
        %1832 = vmatpush1.bf16.msra.mxu0 %v1486
        %1833 = vmatprep.subr.bf16.mxu0 0
        %1834 = vmatpush1.bf16.msra.mxu0 %v1487
        %1835 = vmatprep.subr.bf16.mxu0 0
        %1836 = vmatpush1.bf16.msra.mxu0 %v1488
        %1837 = vmatprep.subr.bf16.mxu0 0
        %1838 = vmatpush1.bf16.msra.mxu0 %v1489
        %1839 = vmatprep.subr.bf16.mxu0 0
        %1840 = vmatpush1.bf16.msra.mxu0 %v1490
        %1841 = vmatprep.subr.bf16.mxu0 0
        %1842 = vmatpush1.bf16.msra.mxu0 %v1491
        %1843 = vmatprep.subr.bf16.mxu0 0
        %1844 = vmatpush1.bf16.msra.mxu0 %v1492
        %1845 = vmatprep.subr.bf16.mxu0 0
        %1846 = vmatpush1.bf16.msra.mxu0 0
        %1847 = vmatprep.subr.bf16.mxu0 0
        %1848 = vmatpush1.bf16.msra.mxu0 0
        %1849 = vmatprep.subr.bf16.mxu0 0
        %1850 = vmatpush1.bf16.msra.mxu0 0
        %1851 = vmatprep.subr.bf16.mxu0 0
        %1852 = vmatpush1.bf16.msra.mxu0 0
        %1853 = vmatprep.subr.bf16.mxu0 0
        %1854 = vmatpush1.bf16.msra.mxu0 0
        %1855 = vmatprep.subr.bf16.mxu0 0
        %1856 = vmatpush1.bf16.msra.mxu0 0
        %1857 = vmatprep.subr.bf16.mxu0 0
        %1858 = vmatpush1.bf16.msra.mxu0 0
        %1859 = vmatprep.subr.bf16.mxu0 0
        %1860 = vmatpush1.bf16.msra.mxu0 0
        %1861 = vmatprep.mubr.bf16.mxu0 0
        %1862 = vmatmul.mubr.bf16.gmra.mrb[0].mxu0 %v1821
        %v1863 = vpop.f32.mrb[0].mxu0
        %v1864 = vadd.f32 0.0, %v1863
        %v1865 = vpop.f32.mrb[0].mxu0
        %v1866 = vpop.f32.mrb[0].mxu0
        %v1867 = vadd.f32 0.0, %v1866
        %v1868 = vpop.f32.mrb[0].mxu0
        %1869 = vmatprep.mubr.bf16.mxu0 0
        %1870 = vmatmul.mubr.bf16.gmra.mrb[0].mxu0 %v1822
        %v1871 = vpop.f32.mrb[0].mxu0
        %v1872 = vadd.f32 0.0, %v1871
        %v1873 = vpop.f32.mrb[0].mxu0
        %v1874 = vpop.f32.mrb[0].mxu0
        %v1875 = vadd.f32 0.0, %v1874
        %v1876 = vpop.f32.mrb[0].mxu0
        %1877 = vmatprep.mubr.bf16.mxu0 0
        %1878 = vmatmul.mubr.bf16.gmra.mrb[0].mxu0 %v1823
        %v1879 = vpop.f32.mrb[0].mxu0
        %v1880 = vadd.f32 0.0, %v1879
        %v1881 = vpop.f32.mrb[0].mxu0
        %v1882 = vpop.f32.mrb[0].mxu0
        %v1883 = vadd.f32 0.0, %v1882
        %v1884 = vpop.f32.mrb[0].mxu0
        %1885 = vmatprep.mubr.bf16.mxu0 0
        %1886 = vmatmul.mubr.bf16.gmra.mrb[0].mxu0 %v1824
        %v1887 = vpop.f32.mrb[0].mxu0
        %v1888 = vadd.f32 0.0, %v1887
        %v1889 = vpop.f32.mrb[0].mxu0
        %v1890 = vpop.f32.mrb[0].mxu0
        %v1891 = vadd.f32 0.0, %v1890
        %v1892 = vpop.f32.mrb[0].mxu0
        %1893 = vmatprep.mubr.bf16.mxu0 0
        %1894 = vmatmul.mubr.bf16.gmra.mrb[0].mxu0 %v1825
        %v1895 = vpop.f32.mrb[0].mxu0
        %v1896 = vadd.f32 0.0, %v1895
        %v1897 = vpop.f32.mrb[0].mxu0
        %v1898 = vpop.f32.mrb[0].mxu0
        %v1899 = vadd.f32 0.0, %v1898
        %v1900 = vpop.f32.mrb[0].mxu0
        %1901 = vmatprep.mubr.bf16.mxu0 0
        %1902 = vmatmul.mubr.bf16.gmra.mrb[0].mxu0 %v1826
        %v1903 = vpop.f32.mrb[0].mxu0
        %v1904 = vadd.f32 0.0, %v1903
        %v1905 = vpop.f32.mrb[0].mxu0
        %v1906 = vpop.f32.mrb[0].mxu0
        %v1907 = vadd.f32 0.0, %v1906
        %v1908 = vpop.f32.mrb[0].mxu0
        %1909 = vmatprep.mubr.bf16.mxu0 0
        %1910 = vmatmul.mubr.bf16.gmra.mrb[0].mxu0 %v1827
        %v1911 = vpop.f32.mrb[0].mxu0
        %v1912 = vadd.f32 0.0, %v1911
        %v1913 = vpop.f32.mrb[0].mxu0
        %v1914 = vpop.f32.mrb[0].mxu0
        %v1915 = vadd.f32 0.0, %v1914
        %v1916 = vpop.f32.mrb[0].mxu0
        %1917 = vmatprep.mubr.bf16.mxu0 0
        %1918 = vmatmul.mubr.bf16.gmra.mrb[0].mxu0 %v1828
        %v1919 = vpop.f32.mrb[0].mxu0
        %v1920 = vadd.f32 0.0, %v1919
        %v1921 = vpop.f32.mrb[0].mxu0
        %v1922 = vpop.f32.mrb[0].mxu0
        %v1923 = vadd.f32 0.0, %v1922
        %v1924 = vpop.f32.mrb[0].mxu0
        %1925 = vdwg.mxu0
        %1934 = vrot.lane.b32.xlu0 %v1469, 64
        %v1935 = vpop.permute.xlu0 %1934
        %1936 = vrot.lane.b32.xlu0 %v1470, 64
        %v1937 = vpop.permute.xlu0 %1936
        %1938 = vrot.lane.b32.xlu0 %v1471, 64
        %v1939 = vpop.permute.xlu0 %1938
        %1940 = vrot.lane.b32.xlu0 %v1472, 64
        %v1941 = vpop.permute.xlu0 %1940
        %1942 = vrot.lane.b32.xlu0 %v1473, 64
        %v1943 = vpop.permute.xlu0 %1942
        %1944 = vrot.lane.b32.xlu0 %v1474, 64
        %v1945 = vpop.permute.xlu0 %1944
        %1946 = vrot.lane.b32.xlu0 %v1475, 64
        %v1947 = vpop.permute.xlu0 %1946
        %1948 = vrot.lane.b32.xlu0 %v1476, 64
        %v1949 = vpop.permute.xlu0 %1948
        %1958 = vrot.lane.b32.xlu0 %v1477, 64
        %v1959 = vpop.permute.xlu0 %1958
        %1960 = vrot.lane.b32.xlu0 %v1478, 64
        %v1961 = vpop.permute.xlu0 %1960
        %1962 = vrot.lane.b32.xlu0 %v1479, 64
        %v1963 = vpop.permute.xlu0 %1962
        %1964 = vrot.lane.b32.xlu0 %v1480, 64
        %v1965 = vpop.permute.xlu0 %1964
        %1966 = vrot.lane.b32.xlu0 %v1481, 64
        %v1967 = vpop.permute.xlu0 %1966
        %1968 = vrot.lane.b32.xlu0 %v1482, 64
        %v1969 = vpop.permute.xlu0 %1968
        %1970 = vrot.lane.b32.xlu0 %v1483, 64
        %v1971 = vpop.permute.xlu0 %1970
        %1972 = vrot.lane.b32.xlu0 %v1484, 64
        %v1973 = vpop.permute.xlu0 %1972
        %v1975 = vsel %vm1493, %v1935, 0
        %v1978 = vsel %vm1493, %v1937, 0
        %v1981 = vsel %vm1493, %v1939, 0
        %v1984 = vsel %vm1493, %v1941, 0
        %v1987 = vsel %vm1493, %v1943, 0
        %v1990 = vsel %vm1493, %v1945, 0
        %v1993 = vsel %vm1493, %v1947, 0
        %v1996 = vsel %vm1493, %v1949, 0
        %v1999 = vsel %vm1493, %v1959, 0
        %v2002 = vsel %vm1493, %v1961, 0
        %v2005 = vsel %vm1493, %v1963, 0
        %v2008 = vsel %vm1493, %v1965, 0
        %v2011 = vsel %vm1493, %v1967, 0
        %v2014 = vsel %vm1493, %v1969, 0
        %v2017 = vsel %vm1493, %v1971, 0
        %v2020 = vsel %vm1493, %v1973, 0
        %2022 = vmatprep.subr.bf16.mxu0 0
        %2023 = vmatpush1.bf16.xpose.msra.mxu0 %v1999
        %2024 = vmatprep.subr.bf16.mxu0 0
        %2025 = vmatpush1.bf16.xpose.msra.mxu0 %v2002
        %2026 = vmatprep.subr.bf16.mxu0 0
        %2027 = vmatpush1.bf16.xpose.msra.mxu0 %v2005
        %2028 = vmatprep.subr.bf16.mxu0 0
        %2029 = vmatpush1.bf16.xpose.msra.mxu0 %v2008
        %2030 = vmatprep.subr.bf16.mxu0 0
        %2031 = vmatpush1.bf16.xpose.msra.mxu0 %v2011
        %2032 = vmatprep.subr.bf16.mxu0 0
        %2033 = vmatpush1.bf16.xpose.msra.mxu0 %v2014
        %2034 = vmatprep.subr.bf16.mxu0 0
        %2035 = vmatpush1.bf16.xpose.msra.mxu0 %v2017
        %2036 = vmatprep.subr.bf16.mxu0 0
        %2037 = vmatpush1.bf16.xpose.msra.mxu0 %v2020
        %2038 = vmatprep.subr.bf16.mxu0 0
        %2039 = vmatpush1.bf16.xpose.msra.mxu0 0
        %2040 = vmatprep.subr.bf16.mxu0 0
        %2041 = vmatpush1.bf16.xpose.msra.mxu0 0
        %2042 = vmatprep.subr.bf16.mxu0 0
        %2043 = vmatpush1.bf16.xpose.msra.mxu0 0
        %2044 = vmatprep.subr.bf16.mxu0 0
        %2045 = vmatpush1.bf16.xpose.msra.mxu0 0
        %2046 = vmatprep.subr.bf16.mxu0 0
        %2047 = vmatpush1.bf16.xpose.msra.mxu0 0
        %2048 = vmatprep.subr.bf16.mxu0 0
        %2049 = vmatpush1.bf16.xpose.msra.mxu0 0
        %2050 = vmatprep.subr.bf16.mxu0 0
        %2051 = vmatpush1.bf16.xpose.msra.mxu0 0
        %2052 = vmatprep.subr.bf16.mxu0 0
        %2053 = vmatpush1.bf16.xpose.msra.mxu0 0
        %2054 = vmatprep.mubr.bf16.mxu0 0
        %2055 = vmatmul.mubr.bf16.gmra.mrb[0].mxu0 %v1975
        %v2056 = vpop.f32.mrb[0].mxu0
        %v2057 = vadd.f32 0.0, %v2056
        %v2058 = vpop.f32.mrb[0].mxu0
        %v2059 = vpop.f32.mrb[0].mxu0
        %v2060 = vadd.f32 0.0, %v2059
        %v2061 = vpop.f32.mrb[0].mxu0
        %2062 = vmatprep.mubr.bf16.mxu0 0
        %2063 = vmatmul.mubr.bf16.gmra.mrb[0].mxu0 %v1978
        %v2064 = vpop.f32.mrb[0].mxu0
        %v2065 = vadd.f32 0.0, %v2064
        %v2066 = vpop.f32.mrb[0].mxu0
        %v2067 = vpop.f32.mrb[0].mxu0
        %v2068 = vadd.f32 0.0, %v2067
        %v2069 = vpop.f32.mrb[0].mxu0
        %2070 = vmatprep.mubr.bf16.mxu0 0
        %2071 = vmatmul.mubr.bf16.gmra.mrb[0].mxu0 %v1981
        %v2072 = vpop.f32.mrb[0].mxu0
        %v2073 = vadd.f32 0.0, %v2072
        %v2074 = vpop.f32.mrb[0].mxu0
        %v2075 = vpop.f32.mrb[0].mxu0
        %v2076 = vadd.f32 0.0, %v2075
        %v2077 = vpop.f32.mrb[0].mxu0
        %2078 = vmatprep.mubr.bf16.mxu0 0
        %2079 = vmatmul.mubr.bf16.gmra.mrb[0].mxu0 %v1984
        %v2080 = vpop.f32.mrb[0].mxu0
        %v2081 = vadd.f32 0.0, %v2080
        %v2082 = vpop.f32.mrb[0].mxu0
        %v2083 = vpop.f32.mrb[0].mxu0
        %v2084 = vadd.f32 0.0, %v2083
        %v2085 = vpop.f32.mrb[0].mxu0
        %2086 = vmatprep.mubr.bf16.mxu0 0
        %2087 = vmatmul.mubr.bf16.gmra.mrb[0].mxu0 %v1987
        %v2088 = vpop.f32.mrb[0].mxu0
        %v2089 = vadd.f32 0.0, %v2088
        %v2090 = vpop.f32.mrb[0].mxu0
        %v2091 = vpop.f32.mrb[0].mxu0
        %v2092 = vadd.f32 0.0, %v2091
        %v2093 = vpop.f32.mrb[0].mxu0
        %2094 = vmatprep.mubr.bf16.mxu0 0
        %2095 = vmatmul.mubr.bf16.gmra.mrb[0].mxu0 %v1990
        %v2096 = vpop.f32.mrb[0].mxu0
        %v2097 = vadd.f32 0.0, %v2096
        %v2098 = vpop.f32.mrb[0].mxu0
        %v2099 = vpop.f32.mrb[0].mxu0
        %v2100 = vadd.f32 0.0, %v2099
        %v2101 = vpop.f32.mrb[0].mxu0
        %2102 = vmatprep.mubr.bf16.mxu0 0
        %2103 = vmatmul.mubr.bf16.gmra.mrb[0].mxu0 %v1993
        %v2104 = vpop.f32.mrb[0].mxu0
        %v2105 = vadd.f32 0.0, %v2104
        %v2106 = vpop.f32.mrb[0].mxu0
        %v2107 = vpop.f32.mrb[0].mxu0
        %v2108 = vadd.f32 0.0, %v2107
        %v2109 = vpop.f32.mrb[0].mxu0
        %2110 = vmatprep.mubr.bf16.mxu0 0
        %2111 = vmatmul.mubr.bf16.gmra.mrb[0].mxu0 %v1996
        %v2112 = vpop.f32.mrb[0].mxu0
        %v2113 = vadd.f32 0.0, %v2112
        %v2114 = vpop.f32.mrb[0].mxu0
        %v2115 = vpop.f32.mrb[0].mxu0
        %v2116 = vadd.f32 0.0, %v2115
        %v2117 = vpop.f32.mrb[0].mxu0
        %2118 = vdwg.mxu0
        %v2119 = vmul.f32 %v2057, 0.125
        %v2120 = vmul.f32 %v2060, 0.125
        %v2121 = vmul.f32 %v2065, 0.125
        %v2122 = vmul.f32 %v2068, 0.125
        %v2123 = vmul.f32 %v2073, 0.125
        %v2124 = vmul.f32 %v2076, 0.125
        %v2125 = vmul.f32 %v2081, 0.125
        %v2126 = vmul.f32 %v2084, 0.125
        %v2127 = vmul.f32 %v2089, 0.125
        %v2128 = vmul.f32 %v2092, 0.125
        %v2129 = vmul.f32 %v2097, 0.125
        %v2130 = vmul.f32 %v2100, 0.125
        %v2131 = vmul.f32 %v2105, 0.125
        %v2132 = vmul.f32 %v2108, 0.125
        %v2133 = vmul.f32 %v2113, 0.125
        %v2134 = vmul.f32 %v2116, 0.125
        %v2135 = vadd.f32 %v2119, %v1659
        %v2136 = vadd.f32 %v2120, %v1659
        %v2137 = vadd.f32 %v2121, %v1659
        %v2138 = vadd.f32 %v2122, %v1659
        %v2139 = vadd.f32 %v2123, %v1659
        %v2140 = vadd.f32 %v2124, %v1659
        %v2141 = vadd.f32 %v2125, %v1659
        %v2142 = vadd.f32 %v2126, %v1659
        %v2143 = vadd.f32 %v2127, %v1659
        %v2144 = vadd.f32 %v2128, %v1659
        %v2145 = vadd.f32 %v2129, %v1659
        %v2146 = vadd.f32 %v2130, %v1659
        %v2147 = vadd.f32 %v2131, %v1659
        %v2148 = vadd.f32 %v2132, %v1659
        %v2149 = vadd.f32 %v2133, %v1659
        %v2150 = vadd.f32 %v2134, %v1659
        %2151 = vmax.xlane.f32.xlu0 %v2135
        %v2152 = vpop.xlane.xlu0 %2151
        %2153 = vmax.xlane.f32.xlu0 %v2136
        %v2154 = vpop.xlane.xlu0 %2153
        %2155 = vmax.xlane.f32.xlu0 %v2137
        %v2156 = vpop.xlane.xlu0 %2155
        %2157 = vmax.xlane.f32.xlu0 %v2138
        %v2158 = vpop.xlane.xlu0 %2157
        %2159 = vmax.xlane.f32.xlu0 %v2139
        %v2160 = vpop.xlane.xlu0 %2159
        %2161 = vmax.xlane.f32.xlu0 %v2140
        %v2162 = vpop.xlane.xlu0 %2161
        %2163 = vmax.xlane.f32.xlu0 %v2141
        %v2164 = vpop.xlane.xlu0 %2163
        %2165 = vmax.xlane.f32.xlu0 %v2142
        %v2166 = vpop.xlane.xlu0 %2165
        %2167 = vmax.xlane.f32.xlu0 %v2143
        %v2168 = vpop.xlane.xlu0 %2167
        %2169 = vmax.xlane.f32.xlu0 %v2144
        %v2170 = vpop.xlane.xlu0 %2169
        %2171 = vmax.xlane.f32.xlu0 %v2145
        %v2172 = vpop.xlane.xlu0 %2171
        %2173 = vmax.xlane.f32.xlu0 %v2146
        %v2174 = vpop.xlane.xlu0 %2173
        %2175 = vmax.xlane.f32.xlu0 %v2147
        %v2176 = vpop.xlane.xlu0 %2175
        %2177 = vmax.xlane.f32.xlu0 %v2148
        %v2178 = vpop.xlane.xlu0 %2177
        %2179 = vmax.xlane.f32.xlu0 %v2149
        %v2180 = vpop.xlane.xlu0 %2179
        %2181 = vmax.xlane.f32.xlu0 %v2150
        %v2182 = vpop.xlane.xlu0 %2181
        %v2183 = vsub.f32 %v2135, %v2152
        %v2184 = vsub.f32 %v2136, %v2154
        %v2185 = vsub.f32 %v2137, %v2156
        %v2186 = vsub.f32 %v2138, %v2158
        %v2187 = vsub.f32 %v2139, %v2160
        %v2188 = vsub.f32 %v2140, %v2162
        %v2189 = vsub.f32 %v2141, %v2164
        %v2190 = vsub.f32 %v2142, %v2166
        %v2191 = vsub.f32 %v2143, %v2168
        %v2192 = vsub.f32 %v2144, %v2170
        %v2193 = vsub.f32 %v2145, %v2172
        %v2194 = vsub.f32 %v2146, %v2174
        %v2195 = vsub.f32 %v2147, %v2176
        %v2196 = vsub.f32 %v2148, %v2178
        %v2197 = vsub.f32 %v2149, %v2180
        %v2198 = vsub.f32 %v2150, %v2182
        %v2199 = vmul.f32 %v2183, 1.442695
        %v2200 = vpow.pop %v2199
        %v2201 = vmul.f32 %v2184, 1.442695
        %v2202 = vpow.pop %v2201
        %v2203 = vmul.f32 %v2185, 1.442695
        %v2204 = vpow.pop %v2203
        %v2205 = vmul.f32 %v2186, 1.442695
        %v2206 = vpow.pop %v2205
        %v2207 = vmul.f32 %v2187, 1.442695
        %v2208 = vpow.pop %v2207
        %v2209 = vmul.f32 %v2188, 1.442695
        %v2210 = vpow.pop %v2209
        %v2211 = vmul.f32 %v2189, 1.442695
        %v2212 = vpow.pop %v2211
        %v2213 = vmul.f32 %v2190, 1.442695
        %v2214 = vpow.pop %v2213
        %v2215 = vmul.f32 %v2191, 1.442695
        %v2216 = vpow.pop %v2215
        %v2217 = vmul.f32 %v2192, 1.442695
        %v2218 = vpow.pop %v2217
        %v2219 = vmul.f32 %v2193, 1.442695
        %v2220 = vpow.pop %v2219
        %v2221 = vmul.f32 %v2194, 1.442695
        %v2222 = vpow.pop %v2221
        %v2223 = vmul.f32 %v2195, 1.442695
        %v2224 = vpow.pop %v2223
        %v2225 = vmul.f32 %v2196, 1.442695
        %v2226 = vpow.pop %v2225
        %v2227 = vmul.f32 %v2197, 1.442695
        %v2228 = vpow.pop %v2227
        %v2229 = vmul.f32 %v2198, 1.442695
        %v2230 = vpow.pop %v2229
        %2231 = vadd.xlane.f32.xlu0 %v2200
        %v2232 = vpop.xlane.xlu0 %2231
        %2233 = vadd.xlane.f32.xlu0 %v2202
        %v2234 = vpop.xlane.xlu0 %2233
        %2235 = vadd.xlane.f32.xlu0 %v2204
        %v2236 = vpop.xlane.xlu0 %2235
        %2237 = vadd.xlane.f32.xlu0 %v2206
        %v2238 = vpop.xlane.xlu0 %2237
        %2239 = vadd.xlane.f32.xlu0 %v2208
        %v2240 = vpop.xlane.xlu0 %2239
        %2241 = vadd.xlane.f32.xlu0 %v2210
        %v2242 = vpop.xlane.xlu0 %2241
        %2243 = vadd.xlane.f32.xlu0 %v2212
        %v2244 = vpop.xlane.xlu0 %2243
        %2245 = vadd.xlane.f32.xlu0 %v2214
        %v2246 = vpop.xlane.xlu0 %2245
        %2247 = vadd.xlane.f32.xlu0 %v2216
        %v2248 = vpop.xlane.xlu0 %2247
        %2249 = vadd.xlane.f32.xlu0 %v2218
        %v2250 = vpop.xlane.xlu0 %2249
        %2251 = vadd.xlane.f32.xlu0 %v2220
        %v2252 = vpop.xlane.xlu0 %2251
        %2253 = vadd.xlane.f32.xlu0 %v2222
        %v2254 = vpop.xlane.xlu0 %2253
        %2255 = vadd.xlane.f32.xlu0 %v2224
        %v2256 = vpop.xlane.xlu0 %2255
        %2257 = vadd.xlane.f32.xlu0 %v2226
        %v2258 = vpop.xlane.xlu0 %2257
        %2259 = vadd.xlane.f32.xlu0 %v2228
        %v2260 = vpop.xlane.xlu0 %2259
        %2261 = vadd.xlane.f32.xlu0 %v2230
        %v2262 = vpop.xlane.xlu0 %2261
        %v2263 = vrcp.pop %v2232
        %v2264 = vrcp.pop %v2234
        %v2265 = vrcp.pop %v2236
        %v2266 = vrcp.pop %v2238
        %v2267 = vrcp.pop %v2240
        %v2268 = vrcp.pop %v2242
        %v2269 = vrcp.pop %v2244
        %v2270 = vrcp.pop %v2246
        %v2271 = vrcp.pop %v2248
        %v2272 = vrcp.pop %v2250
        %v2273 = vrcp.pop %v2252
        %v2274 = vrcp.pop %v2254
        %v2275 = vrcp.pop %v2256
        %v2276 = vrcp.pop %v2258
        %v2277 = vrcp.pop %v2260
        %v2278 = vrcp.pop %v2262
        %v2279 = vmul.f32 %v2200, %v2263
        %v2280 = vmul.f32 %v2202, %v2264
        %v2281 = vmul.f32 %v2204, %v2265
        %v2282 = vmul.f32 %v2206, %v2266
        %v2283 = vmul.f32 %v2208, %v2267
        %v2284 = vmul.f32 %v2210, %v2268
        %v2285 = vmul.f32 %v2212, %v2269
        %v2286 = vmul.f32 %v2214, %v2270
        %v2287 = vmul.f32 %v2216, %v2271
        %v2288 = vmul.f32 %v2218, %v2272
        %v2289 = vmul.f32 %v2220, %v2273
        %v2290 = vmul.f32 %v2222, %v2274
        %v2291 = vmul.f32 %v2224, %v2275
        %v2292 = vmul.f32 %v2226, %v2276
        %v2293 = vmul.f32 %v2228, %v2277
        %v2294 = vmul.f32 %v2230, %v2278
        %v2295 = vpack.c.bf16 %v2280, %v2279
        %v2296 = vpack.c.bf16 %v2282, %v2281
        %v2297 = vpack.c.bf16 %v2284, %v2283
        %v2298 = vpack.c.bf16 %v2286, %v2285
        %v2299 = vpack.c.bf16 %v2288, %v2287
        %v2300 = vpack.c.bf16 %v2290, %v2289
        %v2301 = vpack.c.bf16 %v2292, %v2291
        %v2302 = vpack.c.bf16 %v2294, %v2293
        %2311 = vrot.lane.b32.xlu0 %v1485, 64
        %v2312 = vpop.permute.xlu0 %2311
        %2313 = vrot.lane.b32.xlu0 %v1486, 64
        %v2314 = vpop.permute.xlu0 %2313
        %2315 = vrot.lane.b32.xlu0 %v1487, 64
        %v2316 = vpop.permute.xlu0 %2315
        %2317 = vrot.lane.b32.xlu0 %v1488, 64
        %v2318 = vpop.permute.xlu0 %2317
        %2319 = vrot.lane.b32.xlu0 %v1489, 64
        %v2320 = vpop.permute.xlu0 %2319
        %2321 = vrot.lane.b32.xlu0 %v1490, 64
        %v2322 = vpop.permute.xlu0 %2321
        %2323 = vrot.lane.b32.xlu0 %v1491, 64
        %v2324 = vpop.permute.xlu0 %2323
        %2325 = vrot.lane.b32.xlu0 %v1492, 64
        %v2326 = vpop.permute.xlu0 %2325
        %2335 = vmatprep.subr.bf16.mxu0 0
        %2336 = vmatpush1.bf16.msra.mxu0 %v2312
        %2337 = vmatprep.subr.bf16.mxu0 0
        %2338 = vmatpush1.bf16.msra.mxu0 %v2314
        %2339 = vmatprep.subr.bf16.mxu0 0
        %2340 = vmatpush1.bf16.msra.mxu0 %v2316
        %2341 = vmatprep.subr.bf16.mxu0 0
        %2342 = vmatpush1.bf16.msra.mxu0 %v2318
        %2343 = vmatprep.subr.bf16.mxu0 0
        %2344 = vmatpush1.bf16.msra.mxu0 %v2320
        %2345 = vmatprep.subr.bf16.mxu0 0
        %2346 = vmatpush1.bf16.msra.mxu0 %v2322
        %2347 = vmatprep.subr.bf16.mxu0 0
        %2348 = vmatpush1.bf16.msra.mxu0 %v2324
        %2349 = vmatprep.subr.bf16.mxu0 0
        %2350 = vmatpush1.bf16.msra.mxu0 %v2326
        %2351 = vmatprep.subr.bf16.mxu0 0
        %2352 = vmatpush1.bf16.msra.mxu0 0
        %2353 = vmatprep.subr.bf16.mxu0 0
        %2354 = vmatpush1.bf16.msra.mxu0 0
        %2355 = vmatprep.subr.bf16.mxu0 0
        %2356 = vmatpush1.bf16.msra.mxu0 0
        %2357 = vmatprep.subr.bf16.mxu0 0
        %2358 = vmatpush1.bf16.msra.mxu0 0
        %2359 = vmatprep.subr.bf16.mxu0 0
        %2360 = vmatpush1.bf16.msra.mxu0 0
        %2361 = vmatprep.subr.bf16.mxu0 0
        %2362 = vmatpush1.bf16.msra.mxu0 0
        %2363 = vmatprep.subr.bf16.mxu0 0
        %2364 = vmatpush1.bf16.msra.mxu0 0
        %2365 = vmatprep.subr.bf16.mxu0 0
        %2366 = vmatpush1.bf16.msra.mxu0 0
        %2367 = vmatprep.mubr.bf16.mxu0 0
        %2368 = vmatmul.mubr.bf16.gmra.mrb[0].mxu0 %v2295
        %v2369 = vpop.f32.mrb[0].mxu0
        %v2370 = vadd.f32 0.0, %v2369
        %v2371 = vpop.f32.mrb[0].mxu0
        %v2372 = vpop.f32.mrb[0].mxu0
        %v2373 = vadd.f32 0.0, %v2372
        %v2374 = vpop.f32.mrb[0].mxu0
        %2375 = vmatprep.mubr.bf16.mxu0 0
        %2376 = vmatmul.mubr.bf16.gmra.mrb[0].mxu0 %v2296
        %v2377 = vpop.f32.mrb[0].mxu0
        %v2378 = vadd.f32 0.0, %v2377
        %v2379 = vpop.f32.mrb[0].mxu0
        %v2380 = vpop.f32.mrb[0].mxu0
        %v2381 = vadd.f32 0.0, %v2380
        %v2382 = vpop.f32.mrb[0].mxu0
        %2383 = vmatprep.mubr.bf16.mxu0 0
        %2384 = vmatmul.mubr.bf16.gmra.mrb[0].mxu0 %v2297
        %v2385 = vpop.f32.mrb[0].mxu0
        %v2386 = vadd.f32 0.0, %v2385
        %v2387 = vpop.f32.mrb[0].mxu0
        %v2388 = vpop.f32.mrb[0].mxu0
        %v2389 = vadd.f32 0.0, %v2388
        %v2390 = vpop.f32.mrb[0].mxu0
        %2391 = vmatprep.mubr.bf16.mxu0 0
        %2392 = vmatmul.mubr.bf16.gmra.mrb[0].mxu0 %v2298
        %v2393 = vpop.f32.mrb[0].mxu0
        %v2394 = vadd.f32 0.0, %v2393
        %v2395 = vpop.f32.mrb[0].mxu0
        %v2396 = vpop.f32.mrb[0].mxu0
        %v2397 = vadd.f32 0.0, %v2396
        %v2398 = vpop.f32.mrb[0].mxu0
        %2399 = vmatprep.mubr.bf16.mxu0 0
        %2400 = vmatmul.mubr.bf16.gmra.mrb[0].mxu0 %v2299
        %v2401 = vpop.f32.mrb[0].mxu0
        %v2402 = vadd.f32 0.0, %v2401
        %v2403 = vpop.f32.mrb[0].mxu0
        %v2404 = vpop.f32.mrb[0].mxu0
        %v2405 = vadd.f32 0.0, %v2404
        %v2406 = vpop.f32.mrb[0].mxu0
        %2407 = vmatprep.mubr.bf16.mxu0 0
        %2408 = vmatmul.mubr.bf16.gmra.mrb[0].mxu0 %v2300
        %v2409 = vpop.f32.mrb[0].mxu0
        %v2410 = vadd.f32 0.0, %v2409
        %v2411 = vpop.f32.mrb[0].mxu0
        %v2412 = vpop.f32.mrb[0].mxu0
        %v2413 = vadd.f32 0.0, %v2412
        %v2414 = vpop.f32.mrb[0].mxu0
        %2415 = vmatprep.mubr.bf16.mxu0 0
        %2416 = vmatmul.mubr.bf16.gmra.mrb[0].mxu0 %v2301
        %v2417 = vpop.f32.mrb[0].mxu0
        %v2418 = vadd.f32 0.0, %v2417
        %v2419 = vpop.f32.mrb[0].mxu0
        %v2420 = vpop.f32.mrb[0].mxu0
        %v2421 = vadd.f32 0.0, %v2420
        %v2422 = vpop.f32.mrb[0].mxu0
        %2423 = vmatprep.mubr.bf16.mxu0 0
        %2424 = vmatmul.mubr.bf16.gmra.mrb[0].mxu0 %v2302
        %v2425 = vpop.f32.mrb[0].mxu0
        %v2426 = vadd.f32 0.0, %v2425
        %v2427 = vpop.f32.mrb[0].mxu0
        %v2428 = vpop.f32.mrb[0].mxu0
        %v2429 = vadd.f32 0.0, %v2428
        %v2430 = vpop.f32.mrb[0].mxu0
        %2431 = vdwg.mxu0
        %2448 = vrot.lane.b32.xlu0 %v2370, 64
        %v2449 = vpop.permute.xlu0 %2448
        %2450 = vrot.lane.b32.xlu0 %v2373, 64
        %v2451 = vpop.permute.xlu0 %2450
        %2452 = vrot.lane.b32.xlu0 %v2378, 64
        %v2453 = vpop.permute.xlu0 %2452
        %2454 = vrot.lane.b32.xlu0 %v2381, 64
        %v2455 = vpop.permute.xlu0 %2454
        %2456 = vrot.lane.b32.xlu0 %v2386, 64
        %v2457 = vpop.permute.xlu0 %2456
        %2458 = vrot.lane.b32.xlu0 %v2389, 64
        %v2459 = vpop.permute.xlu0 %2458
        %2460 = vrot.lane.b32.xlu0 %v2394, 64
        %v2461 = vpop.permute.xlu0 %2460
        %2462 = vrot.lane.b32.xlu0 %v2397, 64
        %v2463 = vpop.permute.xlu0 %2462
        %2464 = vrot.lane.b32.xlu0 %v2402, 64
        %v2465 = vpop.permute.xlu0 %2464
        %2466 = vrot.lane.b32.xlu0 %v2405, 64
        %v2467 = vpop.permute.xlu0 %2466
        %2468 = vrot.lane.b32.xlu0 %v2410, 64
        %v2469 = vpop.permute.xlu0 %2468
        %2470 = vrot.lane.b32.xlu0 %v2413, 64
        %v2471 = vpop.permute.xlu0 %2470
        %2472 = vrot.lane.b32.xlu0 %v2418, 64
        %v2473 = vpop.permute.xlu0 %2472
        %2474 = vrot.lane.b32.xlu0 %v2421, 64
        %v2475 = vpop.permute.xlu0 %2474
        %2476 = vrot.lane.b32.xlu0 %v2426, 64
        %v2477 = vpop.permute.xlu0 %2476
        %2478 = vrot.lane.b32.xlu0 %v2429, 64
        %v2479 = vpop.permute.xlu0 %2478
        %v2496 = vsel %vm1493, %v1864, %v2449
        %v2497 = vsel %vm1493, %v1867, %v2451
        %v2498 = vsel %vm1493, %v1872, %v2453
        %v2499 = vsel %vm1493, %v1875, %v2455
        %v2500 = vsel %vm1493, %v1880, %v2457
        %v2501 = vsel %vm1493, %v1883, %v2459
        %v2502 = vsel %vm1493, %v1888, %v2461
        %v2503 = vsel %vm1493, %v1891, %v2463
        %v2504 = vsel %vm1493, %v1896, %v2465
        %v2505 = vsel %vm1493, %v1899, %v2467
        %v2506 = vsel %vm1493, %v1904, %v2469
        %v2507 = vsel %vm1493, %v1907, %v2471
        %v2508 = vsel %vm1493, %v1912, %v2473
        %v2509 = vsel %vm1493, %v1915, %v2475
        %v2510 = vsel %vm1493, %v1920, %v2477
        %v2511 = vsel %vm1493, %v1923, %v2479
        %v2512 = vpack.c.bf16 %v2497, %v2496
        %v2513 = vpack.c.bf16 %v2499, %v2498
        %v2514 = vpack.c.bf16 %v2501, %v2500
        %v2515 = vpack.c.bf16 %v2503, %v2502
        %v2516 = vpack.c.bf16 %v2505, %v2504
        %v2517 = vpack.c.bf16 %v2507, %v2506
        %v2518 = vpack.c.bf16 %v2509, %v2508
        %v2519 = vpack.c.bf16 %v2511, %v2510
        %v2520 = vld [vmem:[%s764] sm:$0xf]
        %v2521 = vld [vmem:[%s764 + $0x4] sm:$0xf]
        %v2522 = vld [vmem:[%s764 + $0x8] sm:$0xf]
        %v2523 = vld [vmem:[%s764 + $0xc] sm:$0xf]
        %v2524 = vld [vmem:[%s764 + $0x10] sm:$0xf]
        %v2525 = vld [vmem:[%s764 + $0x14] sm:$0xf]
        %v2526 = vld [vmem:[%s764 + $0x18] sm:$0xf]
        %v2527 = vld [vmem:[%s764 + $0x1c] sm:$0xf]
        %v2528 = vld [vmem:[%s764 + $0x20] sm:$0xf]
        %v2529 = vld [vmem:[%s764 + $0x24] sm:$0xf]
        %v2530 = vld [vmem:[%s764 + $0x28] sm:$0xf]
        %v2531 = vld [vmem:[%s764 + $0x2c] sm:$0xf]
        %v2532 = vld [vmem:[%s764 + $0x30] sm:$0xf]
        %v2533 = vld [vmem:[%s764 + $0x34] sm:$0xf]
        %v2534 = vld [vmem:[%s764 + $0x38] sm:$0xf]
        %v2535 = vld [vmem:[%s764 + $0x3c] sm:$0xf]
        %v2536 = vld [vmem:[%s767] sm:$0x1]
        %v2538 = vlaneseq
        %v2539 = vshrl.u32 %v2538, 7
        %v2540 = vsub.s32 0, %v2539
        %v2541 = vrot.slane %v2536, %v2540
        %v2559 = vunpack.c.l.b16 %v2520
        %v2560 = vunpack.c.l.b16 %v2521
        %v2561 = vunpack.c.l.b16 %v2522
        %v2562 = vunpack.c.l.b16 %v2523
        %v2563 = vunpack.c.l.b16 %v2524
        %v2564 = vunpack.c.l.b16 %v2525
        %v2565 = vunpack.c.l.b16 %v2526
        %v2566 = vunpack.c.l.b16 %v2527
        %v2567 = vunpack.c.l.b16 %v2528
        %v2568 = vunpack.c.l.b16 %v2529
        %v2569 = vunpack.c.l.b16 %v2530
        %v2570 = vunpack.c.l.b16 %v2531
        %v2571 = vunpack.c.l.b16 %v2532
        %v2572 = vunpack.c.l.b16 %v2533
        %v2573 = vunpack.c.l.b16 %v2534
        %v2574 = vunpack.c.l.b16 %v2535
        %v2575 = vpack.c.b16 %v2560, %v2559
        %v2576 = vpack.c.b16 %v2562, %v2561
        %v2577 = vpack.c.b16 %v2564, %v2563
        %v2578 = vpack.c.b16 %v2566, %v2565
        %v2579 = vpack.c.b16 %v2568, %v2567
        %v2580 = vpack.c.b16 %v2570, %v2569
        %v2581 = vpack.c.b16 %v2572, %v2571
        %v2582 = vpack.c.b16 %v2574, %v2573
        %2591 = vmatprep.subr.bf16.mxu0 0
        %2592 = vmatpush1.bf16.msra.mxu0 %v2575
        %2593 = vmatprep.subr.bf16.mxu0 0
        %2594 = vmatpush1.bf16.msra.mxu0 %v2576
        %2595 = vmatprep.subr.bf16.mxu0 0
        %2596 = vmatpush1.bf16.msra.mxu0 %v2577
        %2597 = vmatprep.subr.bf16.mxu0 0
        %2598 = vmatpush1.bf16.msra.mxu0 %v2578
        %2599 = vmatprep.subr.bf16.mxu0 0
        %2600 = vmatpush1.bf16.msra.mxu0 %v2579
        %2601 = vmatprep.subr.bf16.mxu0 0
        %2602 = vmatpush1.bf16.msra.mxu0 %v2580
        %2603 = vmatprep.subr.bf16.mxu0 0
        %2604 = vmatpush1.bf16.msra.mxu0 %v2581
        %2605 = vmatprep.subr.bf16.mxu0 0
        %2606 = vmatpush1.bf16.msra.mxu0 %v2582
        %2607 = vmatprep.subr.bf16.mxu0 0
        %2608 = vmatpush1.bf16.msra.mxu0 0
        %2609 = vmatprep.subr.bf16.mxu0 0
        %2610 = vmatpush1.bf16.msra.mxu0 0
        %2611 = vmatprep.subr.bf16.mxu0 0
        %2612 = vmatpush1.bf16.msra.mxu0 0
        %2613 = vmatprep.subr.bf16.mxu0 0
        %2614 = vmatpush1.bf16.msra.mxu0 0
        %2615 = vmatprep.subr.bf16.mxu0 0
        %2616 = vmatpush1.bf16.msra.mxu0 0
        %2617 = vmatprep.subr.bf16.mxu0 0
        %2618 = vmatpush1.bf16.msra.mxu0 0
        %2619 = vmatprep.subr.bf16.mxu0 0
        %2620 = vmatpush1.bf16.msra.mxu0 0
        %2621 = vmatprep.subr.bf16.mxu0 0
        %2622 = vmatpush1.bf16.msra.mxu0 0
        %2623 = vmatprep.mubr.bf16.mxu0 0
        %2624 = vmatmul.mubr.bf16.gmra.mrb[0].mxu0 %v2512
        %v2625 = vpop.f32.mrb[0].mxu0
        %v2626 = vadd.f32 %v2541, %v2625
        %v2627 = vpop.f32.mrb[0].mxu0
        %v2628 = vpop.f32.mrb[0].mxu0
        %v2629 = vadd.f32 %v2541, %v2628
        %v2630 = vpop.f32.mrb[0].mxu0
        %2631 = vmatprep.mubr.bf16.mxu0 0
        %2632 = vmatmul.mubr.bf16.gmra.mrb[0].mxu0 %v2513
        %v2633 = vpop.f32.mrb[0].mxu0
        %v2634 = vadd.f32 %v2541, %v2633
        %v2635 = vpop.f32.mrb[0].mxu0
        %v2636 = vpop.f32.mrb[0].mxu0
        %v2637 = vadd.f32 %v2541, %v2636
        %v2638 = vpop.f32.mrb[0].mxu0
        %2639 = vmatprep.mubr.bf16.mxu0 0
        %2640 = vmatmul.mubr.bf16.gmra.mrb[0].mxu0 %v2514
        %v2641 = vpop.f32.mrb[0].mxu0
        %v2642 = vadd.f32 %v2541, %v2641
        %v2643 = vpop.f32.mrb[0].mxu0
        %v2644 = vpop.f32.mrb[0].mxu0
        %v2645 = vadd.f32 %v2541, %v2644
        %v2646 = vpop.f32.mrb[0].mxu0
        %2647 = vmatprep.mubr.bf16.mxu0 0
        %2648 = vmatmul.mubr.bf16.gmra.mrb[0].mxu0 %v2515
        %v2649 = vpop.f32.mrb[0].mxu0
        %v2650 = vadd.f32 %v2541, %v2649
        %v2651 = vpop.f32.mrb[0].mxu0
        %v2652 = vpop.f32.mrb[0].mxu0
        %v2653 = vadd.f32 %v2541, %v2652
        %v2654 = vpop.f32.mrb[0].mxu0
        %2655 = vmatprep.mubr.bf16.mxu0 0
        %2656 = vmatmul.mubr.bf16.gmra.mrb[0].mxu0 %v2516
        %v2657 = vpop.f32.mrb[0].mxu0
        %v2658 = vadd.f32 %v2541, %v2657
        %v2659 = vpop.f32.mrb[0].mxu0
        %v2660 = vpop.f32.mrb[0].mxu0
        %v2661 = vadd.f32 %v2541, %v2660
        %v2662 = vpop.f32.mrb[0].mxu0
        %2663 = vmatprep.mubr.bf16.mxu0 0
        %2664 = vmatmul.mubr.bf16.gmra.mrb[0].mxu0 %v2517
        %v2665 = vpop.f32.mrb[0].mxu0
        %v2666 = vadd.f32 %v2541, %v2665
        %v2667 = vpop.f32.mrb[0].mxu0
        %v2668 = vpop.f32.mrb[0].mxu0
        %v2669 = vadd.f32 %v2541, %v2668
        %v2670 = vpop.f32.mrb[0].mxu0
        %2671 = vmatprep.mubr.bf16.mxu0 0
        %2672 = vmatmul.mubr.bf16.gmra.mrb[0].mxu0 %v2518
        %v2673 = vpop.f32.mrb[0].mxu0
        %v2674 = vadd.f32 %v2541, %v2673
        %v2675 = vpop.f32.mrb[0].mxu0
        %v2676 = vpop.f32.mrb[0].mxu0
        %v2677 = vadd.f32 %v2541, %v2676
        %v2678 = vpop.f32.mrb[0].mxu0
        %2679 = vmatprep.mubr.bf16.mxu0 0
        %2680 = vmatmul.mubr.bf16.gmra.mrb[0].mxu0 %v2519
        %v2681 = vpop.f32.mrb[0].mxu0
        %v2682 = vadd.f32 %v2541, %v2681
        %v2683 = vpop.f32.mrb[0].mxu0
        %v2684 = vpop.f32.mrb[0].mxu0
        %v2685 = vadd.f32 %v2541, %v2684
        %v2686 = vpop.f32.mrb[0].mxu0
        %2687 = vdwg.mxu0
        %v2688 = vadd.f32 %v1057, %v2626
        %v2689 = vadd.f32 %v1058, %v2629
        %v2690 = vadd.f32 %v1059, %v2634
        %v2691 = vadd.f32 %v1060, %v2637
        %v2692 = vadd.f32 %v1061, %v2642
        %v2693 = vadd.f32 %v1062, %v2645
        %v2694 = vadd.f32 %v1063, %v2650
        %v2695 = vadd.f32 %v1064, %v2653
        %v2696 = vadd.f32 %v1065, %v2658
        %v2697 = vadd.f32 %v1066, %v2661
        %v2698 = vadd.f32 %v1067, %v2666
        %v2699 = vadd.f32 %v1068, %v2669
        %v2700 = vadd.f32 %v1069, %v2674
        %v2701 = vadd.f32 %v1070, %v2677
        %v2702 = vadd.f32 %v1071, %v2682
        %v2703 = vadd.f32 %v1072, %v2685
        %v2704 = vld [vmem:[%s770] sm:$0x1]
        %v2705 = vld [vmem:[%s773] sm:$0x1]
        %2706 = vadd.xlane.f32.xlu0 %v2688
        %v2707 = vpop.xlane.xlu0 %2706
        %2708 = vadd.xlane.f32.xlu0 %v2689
        %v2709 = vpop.xlane.xlu0 %2708
        %2710 = vadd.xlane.f32.xlu0 %v2690
        %v2711 = vpop.xlane.xlu0 %2710
        %2712 = vadd.xlane.f32.xlu0 %v2691
        %v2713 = vpop.xlane.xlu0 %2712
        %2714 = vadd.xlane.f32.xlu0 %v2692
        %v2715 = vpop.xlane.xlu0 %2714
        %2716 = vadd.xlane.f32.xlu0 %v2693
        %v2717 = vpop.xlane.xlu0 %2716
        %2718 = vadd.xlane.f32.xlu0 %v2694
        %v2719 = vpop.xlane.xlu0 %2718
        %2720 = vadd.xlane.f32.xlu0 %v2695
        %v2721 = vpop.xlane.xlu0 %2720
        %2722 = vadd.xlane.f32.xlu0 %v2696
        %v2723 = vpop.xlane.xlu0 %2722
        %2724 = vadd.xlane.f32.xlu0 %v2697
        %v2725 = vpop.xlane.xlu0 %2724
        %2726 = vadd.xlane.f32.xlu0 %v2698
        %v2727 = vpop.xlane.xlu0 %2726
        %2728 = vadd.xlane.f32.xlu0 %v2699
        %v2729 = vpop.xlane.xlu0 %2728
        %2730 = vadd.xlane.f32.xlu0 %v2700
        %v2731 = vpop.xlane.xlu0 %2730
        %2732 = vadd.xlane.f32.xlu0 %v2701
        %v2733 = vpop.xlane.xlu0 %2732
        %2734 = vadd.xlane.f32.xlu0 %v2702
        %v2735 = vpop.xlane.xlu0 %2734
        %2736 = vadd.xlane.f32.xlu0 %v2703
        %v2737 = vpop.xlane.xlu0 %2736
        %v2738 = vrcp.pop 128.0
        %v2739 = vmul.f32 %v2707, %v2738
        %v2740 = vmul.f32 %v2709, %v2738
        %v2741 = vmul.f32 %v2711, %v2738
        %v2742 = vmul.f32 %v2713, %v2738
        %v2743 = vmul.f32 %v2715, %v2738
        %v2744 = vmul.f32 %v2717, %v2738
        %v2745 = vmul.f32 %v2719, %v2738
        %v2746 = vmul.f32 %v2721, %v2738
        %v2747 = vmul.f32 %v2723, %v2738
        %v2748 = vmul.f32 %v2725, %v2738
        %v2749 = vmul.f32 %v2727, %v2738
        %v2750 = vmul.f32 %v2729, %v2738
        %v2751 = vmul.f32 %v2731, %v2738
        %v2752 = vmul.f32 %v2733, %v2738
        %v2753 = vmul.f32 %v2735, %v2738
        %v2754 = vmul.f32 %v2737, %v2738
        %v2755 = vsub.f32 %v2688, %v2739
        %v2756 = vsub.f32 %v2689, %v2740
        %v2757 = vsub.f32 %v2690, %v2741
        %v2758 = vsub.f32 %v2691, %v2742
        %v2759 = vsub.f32 %v2692, %v2743
        %v2760 = vsub.f32 %v2693, %v2744
        %v2761 = vsub.f32 %v2694, %v2745
        %v2762 = vsub.f32 %v2695, %v2746
        %v2763 = vsub.f32 %v2696, %v2747
        %v2764 = vsub.f32 %v2697, %v2748
        %v2765 = vsub.f32 %v2698, %v2749
        %v2766 = vsub.f32 %v2699, %v2750
        %v2767 = vsub.f32 %v2700, %v2751
        %v2768 = vsub.f32 %v2701, %v2752
        %v2769 = vsub.f32 %v2702, %v2753
        %v2770 = vsub.f32 %v2703, %v2754
        %v2771 = vmul.f32 %v2755, %v2755
        %v2772 = vmul.f32 %v2756, %v2756
        %v2773 = vmul.f32 %v2757, %v2757
        %v2774 = vmul.f32 %v2758, %v2758
        %v2775 = vmul.f32 %v2759, %v2759
        %v2776 = vmul.f32 %v2760, %v2760
        %v2777 = vmul.f32 %v2761, %v2761
        %v2778 = vmul.f32 %v2762, %v2762
        %v2779 = vmul.f32 %v2763, %v2763
        %v2780 = vmul.f32 %v2764, %v2764
        %v2781 = vmul.f32 %v2765, %v2765
        %v2782 = vmul.f32 %v2766, %v2766
        %v2783 = vmul.f32 %v2767, %v2767
        %v2784 = vmul.f32 %v2768, %v2768
        %v2785 = vmul.f32 %v2769, %v2769
        %v2786 = vmul.f32 %v2770, %v2770
        %2787 = vadd.xlane.f32.xlu0 %v2771
        %v2788 = vpop.xlane.xlu0 %2787
        %2789 = vadd.xlane.f32.xlu0 %v2772
        %v2790 = vpop.xlane.xlu0 %2789
        %2791 = vadd.xlane.f32.xlu0 %v2773
        %v2792 = vpop.xlane.xlu0 %2791
        %2793 = vadd.xlane.f32.xlu0 %v2774
        %v2794 = vpop.xlane.xlu0 %2793
        %2795 = vadd.xlane.f32.xlu0 %v2775
        %v2796 = vpop.xlane.xlu0 %2795
        %2797 = vadd.xlane.f32.xlu0 %v2776
        %v2798 = vpop.xlane.xlu0 %2797
        %2799 = vadd.xlane.f32.xlu0 %v2777
        %v2800 = vpop.xlane.xlu0 %2799
        %2801 = vadd.xlane.f32.xlu0 %v2778
        %v2802 = vpop.xlane.xlu0 %2801
        %2803 = vadd.xlane.f32.xlu0 %v2779
        %v2804 = vpop.xlane.xlu0 %2803
        %2805 = vadd.xlane.f32.xlu0 %v2780
        %v2806 = vpop.xlane.xlu0 %2805
        %2807 = vadd.xlane.f32.xlu0 %v2781
        %v2808 = vpop.xlane.xlu0 %2807
        %2809 = vadd.xlane.f32.xlu0 %v2782
        %v2810 = vpop.xlane.xlu0 %2809
        %2811 = vadd.xlane.f32.xlu0 %v2783
        %v2812 = vpop.xlane.xlu0 %2811
        %2813 = vadd.xlane.f32.xlu0 %v2784
        %v2814 = vpop.xlane.xlu0 %2813
        %2815 = vadd.xlane.f32.xlu0 %v2785
        %v2816 = vpop.xlane.xlu0 %2815
        %2817 = vadd.xlane.f32.xlu0 %v2786
        %v2818 = vpop.xlane.xlu0 %2817
        %v2819 = vmul.f32 %v2788, %v2738
        %v2820 = vmul.f32 %v2790, %v2738
        %v2821 = vmul.f32 %v2792, %v2738
        %v2822 = vmul.f32 %v2794, %v2738
        %v2823 = vmul.f32 %v2796, %v2738
        %v2824 = vmul.f32 %v2798, %v2738
        %v2825 = vmul.f32 %v2800, %v2738
        %v2826 = vmul.f32 %v2802, %v2738
        %v2827 = vmul.f32 %v2804, %v2738
        %v2828 = vmul.f32 %v2806, %v2738
        %v2829 = vmul.f32 %v2808, %v2738
        %v2830 = vmul.f32 %v2810, %v2738
        %v2831 = vmul.f32 %v2812, %v2738
        %v2832 = vmul.f32 %v2814, %v2738
        %v2833 = vmul.f32 %v2816, %v2738
        %v2834 = vmul.f32 %v2818, %v2738
        %v2835 = vadd.f32 %v2819, 1e-12
        %v2836 = vadd.f32 %v2820, 1e-12
        %v2837 = vadd.f32 %v2821, 1e-12
        %v2838 = vadd.f32 %v2822, 1e-12
        %v2839 = vadd.f32 %v2823, 1e-12
        %v2840 = vadd.f32 %v2824, 1e-12
        %v2841 = vadd.f32 %v2825, 1e-12
        %v2842 = vadd.f32 %v2826, 1e-12
        %v2843 = vadd.f32 %v2827, 1e-12
        %v2844 = vadd.f32 %v2828, 1e-12
        %v2845 = vadd.f32 %v2829, 1e-12
        %v2846 = vadd.f32 %v2830, 1e-12
        %v2847 = vadd.f32 %v2831, 1e-12
        %v2848 = vadd.f32 %v2832, 1e-12
        %v2849 = vadd.f32 %v2833, 1e-12
        %v2850 = vadd.f32 %v2834, 1e-12
        %v2851 = vrsqrt.pop %v2835
        %v2852 = vrsqrt.pop %v2836
        %v2853 = vrsqrt.pop %v2837
        %v2854 = vrsqrt.pop %v2838
        %v2855 = vrsqrt.pop %v2839
        %v2856 = vrsqrt.pop %v2840
        %v2857 = vrsqrt.pop %v2841
        %v2858 = vrsqrt.pop %v2842
        %v2859 = vrsqrt.pop %v2843
        %v2860 = vrsqrt.pop %v2844
        %v2861 = vrsqrt.pop %v2845
        %v2862 = vrsqrt.pop %v2846
        %v2863 = vrsqrt.pop %v2847
        %v2864 = vrsqrt.pop %v2848
        %v2865 = vrsqrt.pop %v2849
        %v2866 = vrsqrt.pop %v2850
        %v2867 = vmul.f32 %v2755, %v2851
        %v2868 = vmul.f32 %v2756, %v2852
        %v2869 = vmul.f32 %v2757, %v2853
        %v2870 = vmul.f32 %v2758, %v2854
        %v2871 = vmul.f32 %v2759, %v2855
        %v2872 = vmul.f32 %v2760, %v2856
        %v2873 = vmul.f32 %v2761, %v2857
        %v2874 = vmul.f32 %v2762, %v2858
        %v2875 = vmul.f32 %v2763, %v2859
        %v2876 = vmul.f32 %v2764, %v2860
        %v2877 = vmul.f32 %v2765, %v2861
        %v2878 = vmul.f32 %v2766, %v2862
        %v2879 = vmul.f32 %v2767, %v2863
        %v2880 = vmul.f32 %v2768, %v2864
        %v2881 = vmul.f32 %v2769, %v2865
        %v2882 = vmul.f32 %v2770, %v2866
        %v2884 = vlaneseq
        %v2885 = vshrl.u32 %v2884, 7
        %v2886 = vsub.s32 0, %v2885
        %v2887 = vrot.slane %v2704, %v2886
        %v2889 = vmul.f32 %v2867, %v2887
        %v2890 = vmul.f32 %v2868, %v2887
        %v2891 = vmul.f32 %v2869, %v2887
        %v2892 = vmul.f32 %v2870, %v2887
        %v2893 = vmul.f32 %v2871, %v2887
        %v2894 = vmul.f32 %v2872, %v2887
        %v2895 = vmul.f32 %v2873, %v2887
        %v2896 = vmul.f32 %v2874, %v2887
        %v2897 = vmul.f32 %v2875, %v2887
        %v2898 = vmul.f32 %v2876, %v2887
        %v2899 = vmul.f32 %v2877, %v2887
        %v2900 = vmul.f32 %v2878, %v2887
        %v2901 = vmul.f32 %v2879, %v2887
        %v2902 = vmul.f32 %v2880, %v2887
        %v2903 = vmul.f32 %v2881, %v2887
        %v2904 = vmul.f32 %v2882, %v2887
        %v2906 = vlaneseq
        %v2907 = vshrl.u32 %v2906, 7
        %v2908 = vsub.s32 0, %v2907
        %v2909 = vrot.slane %v2705, %v2908
        %v2911 = vadd.f32 %v2889, %v2909
        %v2912 = vadd.f32 %v2890, %v2909
        %v2913 = vadd.f32 %v2891, %v2909
        %v2914 = vadd.f32 %v2892, %v2909
        %v2915 = vadd.f32 %v2893, %v2909
        %v2916 = vadd.f32 %v2894, %v2909
        %v2917 = vadd.f32 %v2895, %v2909
        %v2918 = vadd.f32 %v2896, %v2909
        %v2919 = vadd.f32 %v2897, %v2909
        %v2920 = vadd.f32 %v2898, %v2909
        %v2921 = vadd.f32 %v2899, %v2909
        %v2922 = vadd.f32 %v2900, %v2909
        %v2923 = vadd.f32 %v2901, %v2909
        %v2924 = vadd.f32 %v2902, %v2909
        %v2925 = vadd.f32 %v2903, %v2909
        %v2926 = vadd.f32 %v2904, %v2909
        %v2927 = vpack.c.bf16 %v2912, %v2911
        %v2928 = vpack.c.bf16 %v2914, %v2913
        %v2929 = vpack.c.bf16 %v2916, %v2915
        %v2930 = vpack.c.bf16 %v2918, %v2917
        %v2931 = vpack.c.bf16 %v2920, %v2919
        %v2932 = vpack.c.bf16 %v2922, %v2921
        %v2933 = vpack.c.bf16 %v2924, %v2923
        %v2934 = vpack.c.bf16 %v2926, %v2925
        %v2935 = vld [vmem:[%s778] sm:$0xff]
        %v2936 = vld [vmem:[%s778 + $0x8] sm:$0xff]
        %v2937 = vld [vmem:[%s778 + $0x10] sm:$0xff]
        %v2938 = vld [vmem:[%s778 + $0x18] sm:$0xff]
        %v2939 = vld [vmem:[%s778 + $0x20] sm:$0xff]
        %v2940 = vld [vmem:[%s778 + $0x28] sm:$0xff]
        %v2941 = vld [vmem:[%s778 + $0x30] sm:$0xff]
        %v2942 = vld [vmem:[%s778 + $0x38] sm:$0xff]
        %v2943 = vld [vmem:[%s778 + $0x40] sm:$0xff]
        %v2944 = vld [vmem:[%s778 + $0x48] sm:$0xff]
        %v2945 = vld [vmem:[%s778 + $0x50] sm:$0xff]
        %v2946 = vld [vmem:[%s778 + $0x58] sm:$0xff]
        %v2947 = vld [vmem:[%s778 + $0x60] sm:$0xff]
        %v2948 = vld [vmem:[%s778 + $0x68] sm:$0xff]
        %v2949 = vld [vmem:[%s778 + $0x70] sm:$0xff]
        %v2950 = vld [vmem:[%s778 + $0x78] sm:$0xff]
        %v2951 = vld [vmem:[%s778 + $0x80] sm:$0xff]
        %v2952 = vld [vmem:[%s778 + $0x88] sm:$0xff]
        %v2953 = vld [vmem:[%s778 + $0x90] sm:$0xff]
        %v2954 = vld [vmem:[%s778 + $0x98] sm:$0xff]
        %v2955 = vld [vmem:[%s778 + $0xa0] sm:$0xff]
        %v2956 = vld [vmem:[%s778 + $0xa8] sm:$0xff]
        %v2957 = vld [vmem:[%s778 + $0xb0] sm:$0xff]
        %v2958 = vld [vmem:[%s778 + $0xb8] sm:$0xff]
        %v2959 = vld [vmem:[%s778 + $0xc0] sm:$0xff]
        %v2960 = vld [vmem:[%s778 + $0xc8] sm:$0xff]
        %v2961 = vld [vmem:[%s778 + $0xd0] sm:$0xff]
        %v2962 = vld [vmem:[%s778 + $0xd8] sm:$0xff]
        %v2963 = vld [vmem:[%s778 + $0xe0] sm:$0xff]
        %v2964 = vld [vmem:[%s778 + $0xe8] sm:$0xff]
        %v2965 = vld [vmem:[%s778 + $0xf0] sm:$0xff]
        %v2966 = vld [vmem:[%s778 + $0xf8] sm:$0xff]
        %v2967 = vld [vmem:[%s782] sm:$0xf]
        %v2969 = vlaneseq
        %v2970 = vshrl.u32 %v2969, 7
        %v2971 = vsub.s32 0, %v2970
        %v2972 = vrot.slane %v2967, %v2971
        %v2973 = vlaneseq
        %v2974 = vshrl.u32 %v2973, 7
        %v2975 = vsub.s32 1, %v2974
        %v2976 = vrot.slane %v2967, %v2975
        %v2977 = vlaneseq
        %v2978 = vshrl.u32 %v2977, 7
        %v2979 = vsub.s32 2, %v2978
        %v2980 = vrot.slane %v2967, %v2979
        %v2981 = vlaneseq
        %v2982 = vshrl.u32 %v2981, 7
        %v2983 = vsub.s32 3, %v2982
        %v2984 = vrot.slane %v2967, %v2983
        %v3021 = vunpack.c.l.b16 %v2935
        %v3022 = vunpack.c.h.b16 %v2935
        %v3023 = vunpack.c.l.b16 %v2936
        %v3024 = vunpack.c.h.b16 %v2936
        %v3025 = vunpack.c.l.b16 %v2937
        %v3026 = vunpack.c.h.b16 %v2937
        %v3027 = vunpack.c.l.b16 %v2938
        %v3028 = vunpack.c.h.b16 %v2938
        %v3029 = vunpack.c.l.b16 %v2939
        %v3030 = vunpack.c.h.b16 %v2939
        %v3031 = vunpack.c.l.b16 %v2940
        %v3032 = vunpack.c.h.b16 %v2940
        %v3033 = vunpack.c.l.b16 %v2941
        %v3034 = vunpack.c.h.b16 %v2941
        %v3035 = vunpack.c.l.b16 %v2942
        %v3036 = vunpack.c.h.b16 %v2942
        %v3037 = vunpack.c.l.b16 %v2943
        %v3038 = vunpack.c.h.b16 %v2943
        %v3039 = vunpack.c.l.b16 %v2944
        %v3040 = vunpack.c.h.b16 %v2944
        %v3041 = vunpack.c.l.b16 %v2945
        %v3042 = vunpack.c.h.b16 %v2945
        %v3043 = vunpack.c.l.b16 %v2946
        %v3044 = vunpack.c.h.b16 %v2946
        %v3045 = vunpack.c.l.b16 %v2947
        %v3046 = vunpack.c.h.b16 %v2947
        %v3047 = vunpack.c.l.b16 %v2948
        %v3048 = vunpack.c.h.b16 %v2948
        %v3049 = vunpack.c.l.b16 %v2949
        %v3050 = vunpack.c.h.b16 %v2949
        %v3051 = vunpack.c.l.b16 %v2950
        %v3052 = vunpack.c.h.b16 %v2950
        %v3053 = vunpack.c.l.b16 %v2951
        %v3054 = vunpack.c.h.b16 %v2951
        %v3055 = vunpack.c.l.b16 %v2952
        %v3056 = vunpack.c.h.b16 %v2952
        %v3057 = vunpack.c.l.b16 %v2953
        %v3058 = vunpack.c.h.b16 %v2953
        %v3059 = vunpack.c.l.b16 %v2954
        %v3060 = vunpack.c.h.b16 %v2954
        %v3061 = vunpack.c.l.b16 %v2955
        %v3062 = vunpack.c.h.b16 %v2955
        %v3063 = vunpack.c.l.b16 %v2956
        %v3064 = vunpack.c.h.b16 %v2956
        %v3065 = vunpack.c.l.b16 %v2957
        %v3066 = vunpack.c.h.b16 %v2957
        %v3067 = vunpack.c.l.b16 %v2958
        %v3068 = vunpack.c.h.b16 %v2958
        %v3069 = vunpack.c.l.b16 %v2959
        %v3070 = vunpack.c.h.b16 %v2959
        %v3071 = vunpack.c.l.b16 %v2960
        %v3072 = vunpack.c.h.b16 %v2960
        %v3073 = vunpack.c.l.b16 %v2961
        %v3074 = vunpack.c.h.b16 %v2961
        %v3075 = vunpack.c.l.b16 %v2962
        %v3076 = vunpack.c.h.b16 %v2962
        %v3077 = vunpack.c.l.b16 %v2963
        %v3078 = vunpack.c.h.b16 %v2963
        %v3079 = vunpack.c.l.b16 %v2964
        %v3080 = vunpack.c.h.b16 %v2964
        %v3081 = vunpack.c.l.b16 %v2965
        %v3082 = vunpack.c.h.b16 %v2965
        %v3083 = vunpack.c.l.b16 %v2966
        %v3084 = vunpack.c.h.b16 %v2966
        %v3085 = vpack.c.b16 %v3025, %v3021
        %v3086 = vpack.c.b16 %v3026, %v3022
        %v3087 = vpack.c.b16 %v3027, %v3023
        %v3088 = vpack.c.b16 %v3028, %v3024
        %v3089 = vpack.c.b16 %v3033, %v3029
        %v3090 = vpack.c.b16 %v3034, %v3030
        %v3091 = vpack.c.b16 %v3035, %v3031
        %v3092 = vpack.c.b16 %v3036, %v3032
        %v3093 = vpack.c.b16 %v3041, %v3037
        %v3094 = vpack.c.b16 %v3042, %v3038
        %v3095 = vpack.c.b16 %v3043, %v3039
        %v3096 = vpack.c.b16 %v3044, %v3040
        %v3097 = vpack.c.b16 %v3049, %v3045
        %v3098 = vpack.c.b16 %v3050, %v3046
        %v3099 = vpack.c.b16 %v3051, %v3047
        %v3100 = vpack.c.b16 %v3052, %v3048
        %v3101 = vpack.c.b16 %v3057, %v3053
        %v3102 = vpack.c.b16 %v3058, %v3054
        %v3103 = vpack.c.b16 %v3059, %v3055
        %v3104 = vpack.c.b16 %v3060, %v3056
        %v3105 = vpack.c.b16 %v3065, %v3061
        %v3106 = vpack.c.b16 %v3066, %v3062
        %v3107 = vpack.c.b16 %v3067, %v3063
        %v3108 = vpack.c.b16 %v3068, %v3064
        %v3109 = vpack.c.b16 %v3073, %v3069
        %v3110 = vpack.c.b16 %v3074, %v3070
        %v3111 = vpack.c.b16 %v3075, %v3071
        %v3112 = vpack.c.b16 %v3076, %v3072
        %v3113 = vpack.c.b16 %v3081, %v3077
        %v3114 = vpack.c.b16 %v3082, %v3078
        %v3115 = vpack.c.b16 %v3083, %v3079
        %v3116 = vpack.c.b16 %v3084, %v3080
        %3149 = vmatprep.subr.bf16.mxu0 %v3086
        %3150 = vmatpush1.bf16.msra.mxu0 %v3085
        %3151 = vmatprep.subr.bf16.mxu0 %v3090
        %3152 = vmatpush1.bf16.msra.mxu0 %v3089
        %3153 = vmatprep.subr.bf16.mxu0 %v3094
        %3154 = vmatpush1.bf16.msra.mxu0 %v3093
        %3155 = vmatprep.subr.bf16.mxu0 %v3098
        %3156 = vmatpush1.bf16.msra.mxu0 %v3097
        %3157 = vmatprep.subr.bf16.mxu0 %v3102
        %3158 = vmatpush1.bf16.msra.mxu0 %v3101
        %3159 = vmatprep.subr.bf16.mxu0 %v3106
        %3160 = vmatpush1.bf16.msra.mxu0 %v3105
        %3161 = vmatprep.subr.bf16.mxu0 %v3110
        %3162 = vmatpush1.bf16.msra.mxu0 %v3109
        %3163 = vmatprep.subr.bf16.mxu0 %v3114
        %3164 = vmatpush1.bf16.msra.mxu0 %v3113
        %3165 = vmatprep.subr.bf16.mxu0 0
        %3166 = vmatpush1.bf16.msra.mxu0 0
        %3167 = vmatprep.subr.bf16.mxu0 0
        %3168 = vmatpush1.bf16.msra.mxu0 0
        %3169 = vmatprep.subr.bf16.mxu0 0
        %3170 = vmatpush1.bf16.msra.mxu0 0
        %3171 = vmatprep.subr.bf16.mxu0 0
        %3172 = vmatpush1.bf16.msra.mxu0 0
        %3173 = vmatprep.subr.bf16.mxu0 0
        %3174 = vmatpush1.bf16.msra.mxu0 0
        %3175 = vmatprep.subr.bf16.mxu0 0
        %3176 = vmatpush1.bf16.msra.mxu0 0
        %3177 = vmatprep.subr.bf16.mxu0 0
        %3178 = vmatpush1.bf16.msra.mxu0 0
        %3179 = vmatprep.subr.bf16.mxu0 0
        %3180 = vmatpush1.bf16.msra.mxu0 0
        %3181 = vmatprep.mubr.bf16.mxu0 0
        %3182 = vmatmul.mubr.bf16.gmra.mrb[0].mxu0 %v2927
        %v3183 = vpop.f32.mrb[0].mxu0
        %v3184 = vadd.f32 %v2972, %v3183
        %v3185 = vpop.f32.mrb[0].mxu0
        %v3186 = vadd.f32 %v2976, %v3185
        %v3187 = vpop.f32.mrb[0].mxu0
        %v3188 = vadd.f32 %v2972, %v3187
        %v3189 = vpop.f32.mrb[0].mxu0
        %v3190 = vadd.f32 %v2976, %v3189
        %3191 = vmatprep.mubr.bf16.mxu0 0
        %3192 = vmatmul.mubr.bf16.gmra.mrb[0].mxu0 %v2928
        %v3193 = vpop.f32.mrb[0].mxu0
        %v3194 = vadd.f32 %v2972, %v3193
        %v3195 = vpop.f32.mrb[0].mxu0
        %v3196 = vadd.f32 %v2976, %v3195
        %v3197 = vpop.f32.mrb[0].mxu0
        %v3198 = vadd.f32 %v2972, %v3197
        %v3199 = vpop.f32.mrb[0].mxu0
        %v3200 = vadd.f32 %v2976, %v3199
        %3201 = vmatprep.mubr.bf16.mxu0 0
        %3202 = vmatmul.mubr.bf16.gmra.mrb[0].mxu0 %v2929
        %v3203 = vpop.f32.mrb[0].mxu0
        %v3204 = vadd.f32 %v2972, %v3203
        %v3205 = vpop.f32.mrb[0].mxu0
        %v3206 = vadd.f32 %v2976, %v3205
        %v3207 = vpop.f32.mrb[0].mxu0
        %v3208 = vadd.f32 %v2972, %v3207
        %v3209 = vpop.f32.mrb[0].mxu0
        %v3210 = vadd.f32 %v2976, %v3209
        %3211 = vmatprep.mubr.bf16.mxu0 0
        %3212 = vmatmul.mubr.bf16.gmra.mrb[0].mxu0 %v2930
        %v3213 = vpop.f32.mrb[0].mxu0
        %v3214 = vadd.f32 %v2972, %v3213
        %v3215 = vpop.f32.mrb[0].mxu0
        %v3216 = vadd.f32 %v2976, %v3215
        %v3217 = vpop.f32.mrb[0].mxu0
        %v3218 = vadd.f32 %v2972, %v3217
        %v3219 = vpop.f32.mrb[0].mxu0
        %v3220 = vadd.f32 %v2976, %v3219
        %3221 = vmatprep.mubr.bf16.mxu0 0
        %3222 = vmatmul.mubr.bf16.gmra.mrb[0].mxu0 %v2931
        %v3223 = vpop.f32.mrb[0].mxu0
        %v3224 = vadd.f32 %v2972, %v3223
        %v3225 = vpop.f32.mrb[0].mxu0
        %v3226 = vadd.f32 %v2976, %v3225
        %v3227 = vpop.f32.mrb[0].mxu0
        %v3228 = vadd.f32 %v2972, %v3227
        %v3229 = vpop.f32.mrb[0].mxu0
        %v3230 = vadd.f32 %v2976, %v3229
        %3231 = vmatprep.mubr.bf16.mxu0 0
        %3232 = vmatmul.mubr.bf16.gmra.mrb[0].mxu0 %v2932
        %v3233 = vpop.f32.mrb[0].mxu0
        %v3234 = vadd.f32 %v2972, %v3233
        %v3235 = vpop.f32.mrb[0].mxu0
        %v3236 = vadd.f32 %v2976, %v3235
        %v3237 = vpop.f32.mrb[0].mxu0
        %v3238 = vadd.f32 %v2972, %v3237
        %v3239 = vpop.f32.mrb[0].mxu0
        %v3240 = vadd.f32 %v2976, %v3239
        %3241 = vmatprep.mubr.bf16.mxu0 0
        %3242 = vmatmul.mubr.bf16.gmra.mrb[0].mxu0 %v2933
        %v3243 = vpop.f32.mrb[0].mxu0
        %v3244 = vadd.f32 %v2972, %v3243
        %v3245 = vpop.f32.mrb[0].mxu0
        %v3246 = vadd.f32 %v2976, %v3245
        %v3247 = vpop.f32.mrb[0].mxu0
        %v3248 = vadd.f32 %v2972, %v3247
        %v3249 = vpop.f32.mrb[0].mxu0
        %v3250 = vadd.f32 %v2976, %v3249
        %3251 = vmatprep.mubr.bf16.mxu0 0
        %3252 = vmatmul.mubr.bf16.gmra.mrb[0].mxu0 %v2934
        %v3253 = vpop.f32.mrb[0].mxu0
        %v3254 = vadd.f32 %v2972, %v3253
        %v3255 = vpop.f32.mrb[0].mxu0
        %v3256 = vadd.f32 %v2976, %v3255
        %v3257 = vpop.f32.mrb[0].mxu0
        %v3258 = vadd.f32 %v2972, %v3257
        %v3259 = vpop.f32.mrb[0].mxu0
        %v3260 = vadd.f32 %v2976, %v3259
        %3261 = vdwg.mxu0
        %3262 = vmatprep.subr.bf16.mxu0 %v3088
        %3263 = vmatpush1.bf16.msra.mxu0 %v3087
        %3264 = vmatprep.subr.bf16.mxu0 %v3092
        %3265 = vmatpush1.bf16.msra.mxu0 %v3091
        %3266 = vmatprep.subr.bf16.mxu0 %v3096
        %3267 = vmatpush1.bf16.msra.mxu0 %v3095
        %3268 = vmatprep.subr.bf16.mxu0 %v3100
        %3269 = vmatpush1.bf16.msra.mxu0 %v3099
        %3270 = vmatprep.subr.bf16.mxu0 %v3104
        %3271 = vmatpush1.bf16.msra.mxu0 %v3103
        %3272 = vmatprep.subr.bf16.mxu0 %v3108
        %3273 = vmatpush1.bf16.msra.mxu0 %v3107
        %3274 = vmatprep.subr.bf16.mxu0 %v3112
        %3275 = vmatpush1.bf16.msra.mxu0 %v3111
        %3276 = vmatprep.subr.bf16.mxu0 %v3116
        %3277 = vmatpush1.bf16.msra.mxu0 %v3115
        %3278 = vmatprep.subr.bf16.mxu0 0
        %3279 = vmatpush1.bf16.msra.mxu0 0
        %3280 = vmatprep.subr.bf16.mxu0 0
        %3281 = vmatpush1.bf16.msra.mxu0 0
        %3282 = vmatprep.subr.bf16.mxu0 0
        %3283 = vmatpush1.bf16.msra.mxu0 0
        %3284 = vmatprep.subr.bf16.mxu0 0
        %3285 = vmatpush1.bf16.msra.mxu0 0
        %3286 = vmatprep.subr.bf16.mxu0 0
        %3287 = vmatpush1.bf16.msra.mxu0 0
        %3288 = vmatprep.subr.bf16.mxu0 0
        %3289 = vmatpush1.bf16.msra.mxu0 0
        %3290 = vmatprep.subr.bf16.mxu0 0
        %3291 = vmatpush1.bf16.msra.mxu0 0
        %3292 = vmatprep.subr.bf16.mxu0 0
        %3293 = vmatpush1.bf16.msra.mxu0 0
        %3294 = vmatprep.mubr.bf16.mxu0 0
        %3295 = vmatmul.mubr.bf16.gmra.mrb[0].mxu0 %v2927
        %v3296 = vpop.f32.mrb[0].mxu0
        %v3297 = vadd.f32 %v2980, %v3296
        %v3298 = vpop.f32.mrb[0].mxu0
        %v3299 = vadd.f32 %v2984, %v3298
        %v3300 = vpop.f32.mrb[0].mxu0
        %v3301 = vadd.f32 %v2980, %v3300
        %v3302 = vpop.f32.mrb[0].mxu0
        %v3303 = vadd.f32 %v2984, %v3302
        %3304 = vmatprep.mubr.bf16.mxu0 0
        %3305 = vmatmul.mubr.bf16.gmra.mrb[0].mxu0 %v2928
        %v3306 = vpop.f32.mrb[0].mxu0
        %v3307 = vadd.f32 %v2980, %v3306
        %v3308 = vpop.f32.mrb[0].mxu0
        %v3309 = vadd.f32 %v2984, %v3308
        %v3310 = vpop.f32.mrb[0].mxu0
        %v3311 = vadd.f32 %v2980, %v3310
        %v3312 = vpop.f32.mrb[0].mxu0
        %v3313 = vadd.f32 %v2984, %v3312
        %3314 = vmatprep.mubr.bf16.mxu0 0
        %3315 = vmatmul.mubr.bf16.gmra.mrb[0].mxu0 %v2929
        %v3316 = vpop.f32.mrb[0].mxu0
        %v3317 = vadd.f32 %v2980, %v3316
        %v3318 = vpop.f32.mrb[0].mxu0
        %v3319 = vadd.f32 %v2984, %v3318
        %v3320 = vpop.f32.mrb[0].mxu0
        %v3321 = vadd.f32 %v2980, %v3320
        %v3322 = vpop.f32.mrb[0].mxu0
        %v3323 = vadd.f32 %v2984, %v3322
        %3324 = vmatprep.mubr.bf16.mxu0 0
        %3325 = vmatmul.mubr.bf16.gmra.mrb[0].mxu0 %v2930
        %v3326 = vpop.f32.mrb[0].mxu0
        %v3327 = vadd.f32 %v2980, %v3326
        %v3328 = vpop.f32.mrb[0].mxu0
        %v3329 = vadd.f32 %v2984, %v3328
        %v3330 = vpop.f32.mrb[0].mxu0
        %v3331 = vadd.f32 %v2980, %v3330
        %v3332 = vpop.f32.mrb[0].mxu0
        %v3333 = vadd.f32 %v2984, %v3332
        %3334 = vmatprep.mubr.bf16.mxu0 0
        %3335 = vmatmul.mubr.bf16.gmra.mrb[0].mxu0 %v2931
        %v3336 = vpop.f32.mrb[0].mxu0
        %v3337 = vadd.f32 %v2980, %v3336
        %v3338 = vpop.f32.mrb[0].mxu0
        %v3339 = vadd.f32 %v2984, %v3338
        %v3340 = vpop.f32.mrb[0].mxu0
        %v3341 = vadd.f32 %v2980, %v3340
        %v3342 = vpop.f32.mrb[0].mxu0
        %v3343 = vadd.f32 %v2984, %v3342
        %3344 = vmatprep.mubr.bf16.mxu0 0
        %3345 = vmatmul.mubr.bf16.gmra.mrb[0].mxu0 %v2932
        %v3346 = vpop.f32.mrb[0].mxu0
        %v3347 = vadd.f32 %v2980, %v3346
        %v3348 = vpop.f32.mrb[0].mxu0
        %v3349 = vadd.f32 %v2984, %v3348
        %v3350 = vpop.f32.mrb[0].mxu0
        %v3351 = vadd.f32 %v2980, %v3350
        %v3352 = vpop.f32.mrb[0].mxu0
        %v3353 = vadd.f32 %v2984, %v3352
        %3354 = vmatprep.mubr.bf16.mxu0 0
        %3355 = vmatmul.mubr.bf16.gmra.mrb[0].mxu0 %v2933
        %v3356 = vpop.f32.mrb[0].mxu0
        %v3357 = vadd.f32 %v2980, %v3356
        %v3358 = vpop.f32.mrb[0].mxu0
        %v3359 = vadd.f32 %v2984, %v3358
        %v3360 = vpop.f32.mrb[0].mxu0
        %v3361 = vadd.f32 %v2980, %v3360
        %v3362 = vpop.f32.mrb[0].mxu0
        %v3363 = vadd.f32 %v2984, %v3362
        %3364 = vmatprep.mubr.bf16.mxu0 0
        %3365 = vmatmul.mubr.bf16.gmra.mrb[0].mxu0 %v2934
        %v3366 = vpop.f32.mrb[0].mxu0
        %v3367 = vadd.f32 %v2980, %v3366
        %v3368 = vpop.f32.mrb[0].mxu0
        %v3369 = vadd.f32 %v2984, %v3368
        %v3370 = vpop.f32.mrb[0].mxu0
        %v3371 = vadd.f32 %v2980, %v3370
        %v3372 = vpop.f32.mrb[0].mxu0
        %v3373 = vadd.f32 %v2984, %v3372
        %3374 = vdwg.mxu0
        %v3375 = vmul.f32 %v3184, 0.5
        %v3376 = vmul.f32 %v3186, 0.5
        %v3377 = vmul.f32 %v3297, 0.5
        %v3378 = vmul.f32 %v3299, 0.5
        %v3379 = vmul.f32 %v3188, 0.5
        %v3380 = vmul.f32 %v3190, 0.5
        %v3381 = vmul.f32 %v3301, 0.5
        %v3382 = vmul.f32 %v3303, 0.5
        %v3383 = vmul.f32 %v3194, 0.5
        %v3384 = vmul.f32 %v3196, 0.5
        %v3385 = vmul.f32 %v3307, 0.5
        %v3386 = vmul.f32 %v3309, 0.5
        %v3387 = vmul.f32 %v3198, 0.5
        %v3388 = vmul.f32 %v3200, 0.5
        %v3389 = vmul.f32 %v3311, 0.5
        %v3390 = vmul.f32 %v3313, 0.5
        %v3391 = vmul.f32 %v3204, 0.5
        %v3392 = vmul.f32 %v3206, 0.5
        %v3393 = vmul.f32 %v3317, 0.5
        %v3394 = vmul.f32 %v3319, 0.5
        %v3395 = vmul.f32 %v3208, 0.5
        %v3396 = vmul.f32 %v3210, 0.5
        %v3397 = vmul.f32 %v3321, 0.5
        %v3398 = vmul.f32 %v3323, 0.5
        %v3399 = vmul.f32 %v3214, 0.5
        %v3400 = vmul.f32 %v3216, 0.5
        %v3401 = vmul.f32 %v3327, 0.5
        %v3402 = vmul.f32 %v3329, 0.5
        %v3403 = vmul.f32 %v3218, 0.5
        %v3404 = vmul.f32 %v3220, 0.5
        %v3405 = vmul.f32 %v3331, 0.5
        %v3406 = vmul.f32 %v3333, 0.5
        %v3407 = vmul.f32 %v3224, 0.5
        %v3408 = vmul.f32 %v3226, 0.5
        %v3409 = vmul.f32 %v3337, 0.5
        %v3410 = vmul.f32 %v3339, 0.5
        %v3411 = vmul.f32 %v3228, 0.5
        %v3412 = vmul.f32 %v3230, 0.5
        %v3413 = vmul.f32 %v3341, 0.5
        %v3414 = vmul.f32 %v3343, 0.5
        %v3415 = vmul.f32 %v3234, 0.5
        %v3416 = vmul.f32 %v3236, 0.5
        %v3417 = vmul.f32 %v3347, 0.5
        %v3418 = vmul.f32 %v3349, 0.5
        %v3419 = vmul.f32 %v3238, 0.5
        %v3420 = vmul.f32 %v3240, 0.5
        %v3421 = vmul.f32 %v3351, 0.5
        %v3422 = vmul.f32 %v3353, 0.5
        %v3423 = vmul.f32 %v3244, 0.5
        %v3424 = vmul.f32 %v3246, 0.5
        %v3425 = vmul.f32 %v3357, 0.5
        %v3426 = vmul.f32 %v3359, 0.5
        %v3427 = vmul.f32 %v3248, 0.5
        %v3428 = vmul.f32 %v3250, 0.5
        %v3429 = vmul.f32 %v3361, 0.5
        %v3430 = vmul.f32 %v3363, 0.5
        %v3431 = vmul.f32 %v3254, 0.5
        %v3432 = vmul.f32 %v3256, 0.5
        %v3433 = vmul.f32 %v3367, 0.5
        %v3434 = vmul.f32 %v3369, 0.5
        %v3435 = vmul.f32 %v3258, 0.5
        %v3436 = vmul.f32 %v3260, 0.5
        %v3437 = vmul.f32 %v3371, 0.5
        %v3438 = vmul.f32 %v3373, 0.5
        %v3439 = vmul.f32 %v3184, 0.044715
        %v3440 = vmul.f32 %v3186, 0.044715
        %v3441 = vmul.f32 %v3297, 0.044715
        %v3442 = vmul.f32 %v3299, 0.044715
        %v3443 = vmul.f32 %v3188, 0.044715
        %v3444 = vmul.f32 %v3190, 0.044715
        %v3445 = vmul.f32 %v3301, 0.044715
        %v3446 = vmul.f32 %v3303, 0.044715
        %v3447 = vmul.f32 %v3194, 0.044715
        %v3448 = vmul.f32 %v3196, 0.044715
        %v3449 = vmul.f32 %v3307, 0.044715
        %v3450 = vmul.f32 %v3309, 0.044715
        %v3451 = vmul.f32 %v3198, 0.044715
        %v3452 = vmul.f32 %v3200, 0.044715
        %v3453 = vmul.f32 %v3311, 0.044715
        %v3454 = vmul.f32 %v3313, 0.044715
        %v3455 = vmul.f32 %v3204, 0.044715
        %v3456 = vmul.f32 %v3206, 0.044715
        %v3457 = vmul.f32 %v3317, 0.044715
        %v3458 = vmul.f32 %v3319, 0.044715
        %v3459 = vmul.f32 %v3208, 0.044715
        %v3460 = vmul.f32 %v3210, 0.044715
        %v3461 = vmul.f32 %v3321, 0.044715
        %v3462 = vmul.f32 %v3323, 0.044715
        %v3463 = vmul.f32 %v3214, 0.044715
        %v3464 = vmul.f32 %v3216, 0.044715
        %v3465 = vmul.f32 %v3327, 0.044715
        %v3466 = vmul.f32 %v3329, 0.044715
        %v3467 = vmul.f32 %v3218, 0.044715
        %v3468 = vmul.f32 %v3220, 0.044715
        %v3469 = vmul.f32 %v3331, 0.044715
        %v3470 = vmul.f32 %v3333, 0.044715
        %v3471 = vmul.f32 %v3224, 0.044715
        %v3472 = vmul.f32 %v3226, 0.044715
        %v3473 = vmul.f32 %v3337, 0.044715
        %v3474 = vmul.f32 %v3339, 0.044715
        %v3475 = vmul.f32 %v3228, 0.044715
        %v3476 = vmul.f32 %v3230, 0.044715
        %v3477 = vmul.f32 %v3341, 0.044715
        %v3478 = vmul.f32 %v3343, 0.044715
        %v3479 = vmul.f32 %v3234, 0.044715
        %v3480 = vmul.f32 %v3236, 0.044715
        %v3481 = vmul.f32 %v3347, 0.044715
        %v3482 = vmul.f32 %v3349, 0.044715
        %v3483 = vmul.f32 %v3238, 0.044715
        %v3484 = vmul.f32 %v3240, 0.044715
        %v3485 = vmul.f32 %v3351, 0.044715
        %v3486 = vmul.f32 %v3353, 0.044715
        %v3487 = vmul.f32 %v3244, 0.044715
        %v3488 = vmul.f32 %v3246, 0.044715
        %v3489 = vmul.f32 %v3357, 0.044715
        %v3490 = vmul.f32 %v3359, 0.044715
        %v3491 = vmul.f32 %v3248, 0.044715
        %v3492 = vmul.f32 %v3250, 0.044715
        %v3493 = vmul.f32 %v3361, 0.044715
        %v3494 = vmul.f32 %v3363, 0.044715
        %v3495 = vmul.f32 %v3254, 0.044715
        %v3496 = vmul.f32 %v3256, 0.044715
        %v3497 = vmul.f32 %v3367, 0.044715
        %v3498 = vmul.f32 %v3369, 0.044715
        %v3499 = vmul.f32 %v3258, 0.044715
        %v3500 = vmul.f32 %v3260, 0.044715
        %v3501 = vmul.f32 %v3371, 0.044715
        %v3502 = vmul.f32 %v3373, 0.044715
        %v3503 = vmul.f32 %v3439, %v3184
        %v3504 = vmul.f32 %v3440, %v3186
        %v3505 = vmul.f32 %v3441, %v3297
        %v3506 = vmul.f32 %v3442, %v3299
        %v3507 = vmul.f32 %v3443, %v3188
        %v3508 = vmul.f32 %v3444, %v3190
        %v3509 = vmul.f32 %v3445, %v3301
        %v3510 = vmul.f32 %v3446, %v3303
        %v3511 = vmul.f32 %v3447, %v3194
        %v3512 = vmul.f32 %v3448, %v3196
        %v3513 = vmul.f32 %v3449, %v3307
        %v3514 = vmul.f32 %v3450, %v3309
        %v3515 = vmul.f32 %v3451, %v3198
        %v3516 = vmul.f32 %v3452, %v3200
        %v3517 = vmul.f32 %v3453, %v3311
        %v3518 = vmul.f32 %v3454, %v3313
        %v3519 = vmul.f32 %v3455, %v3204
        %v3520 = vmul.f32 %v3456, %v3206
        %v3521 = vmul.f32 %v3457, %v3317
        %v3522 = vmul.f32 %v3458, %v3319
        %v3523 = vmul.f32 %v3459, %v3208
        %v3524 = vmul.f32 %v3460, %v3210
        %v3525 = vmul.f32 %v3461, %v3321
        %v3526 = vmul.f32 %v3462, %v3323
        %v3527 = vmul.f32 %v3463, %v3214
        %v3528 = vmul.f32 %v3464, %v3216
        %v3529 = vmul.f32 %v3465, %v3327
        %v3530 = vmul.f32 %v3466, %v3329
        %v3531 = vmul.f32 %v3467, %v3218
        %v3532 = vmul.f32 %v3468, %v3220
        %v3533 = vmul.f32 %v3469, %v3331
        %v3534 = vmul.f32 %v3470, %v3333
        %v3535 = vmul.f32 %v3471, %v3224
        %v3536 = vmul.f32 %v3472, %v3226
        %v3537 = vmul.f32 %v3473, %v3337
        %v3538 = vmul.f32 %v3474, %v3339
        %v3539 = vmul.f32 %v3475, %v3228
        %v3540 = vmul.f32 %v3476, %v3230
        %v3541 = vmul.f32 %v3477, %v3341
        %v3542 = vmul.f32 %v3478, %v3343
        %v3543 = vmul.f32 %v3479, %v3234
        %v3544 = vmul.f32 %v3480, %v3236
        %v3545 = vmul.f32 %v3481, %v3347
        %v3546 = vmul.f32 %v3482, %v3349
        %v3547 = vmul.f32 %v3483, %v3238
        %v3548 = vmul.f32 %v3484, %v3240
        %v3549 = vmul.f32 %v3485, %v3351
        %v3550 = vmul.f32 %v3486, %v3353
        %v3551 = vmul.f32 %v3487, %v3244
        %v3552 = vmul.f32 %v3488, %v3246
        %v3553 = vmul.f32 %v3489, %v3357
        %v3554 = vmul.f32 %v3490, %v3359
        %v3555 = vmul.f32 %v3491, %v3248
        %v3556 = vmul.f32 %v3492, %v3250
        %v3557 = vmul.f32 %v3493, %v3361
        %v3558 = vmul.f32 %v3494, %v3363
        %v3559 = vmul.f32 %v3495, %v3254
        %v3560 = vmul.f32 %v3496, %v3256
        %v3561 = vmul.f32 %v3497, %v3367
        %v3562 = vmul.f32 %v3498, %v3369
        %v3563 = vmul.f32 %v3499, %v3258
        %v3564 = vmul.f32 %v3500, %v3260
        %v3565 = vmul.f32 %v3501, %v3371
        %v3566 = vmul.f32 %v3502, %v3373
        %v3567 = vmul.f32 %v3503, %v3184
        %v3568 = vmul.f32 %v3504, %v3186
        %v3569 = vmul.f32 %v3505, %v3297
        %v3570 = vmul.f32 %v3506, %v3299
        %v3571 = vmul.f32 %v3507, %v3188
        %v3572 = vmul.f32 %v3508, %v3190
        %v3573 = vmul.f32 %v3509, %v3301
        %v3574 = vmul.f32 %v3510, %v3303
        %v3575 = vmul.f32 %v3511, %v3194
        %v3576 = vmul.f32 %v3512, %v3196
        %v3577 = vmul.f32 %v3513, %v3307
        %v3578 = vmul.f32 %v3514, %v3309
        %v3579 = vmul.f32 %v3515, %v3198
        %v3580 = vmul.f32 %v3516, %v3200
        %v3581 = vmul.f32 %v3517, %v3311
        %v3582 = vmul.f32 %v3518, %v3313
        %v3583 = vmul.f32 %v3519, %v3204
        %v3584 = vmul.f32 %v3520, %v3206
        %v3585 = vmul.f32 %v3521, %v3317
        %v3586 = vmul.f32 %v3522, %v3319
        %v3587 = vmul.f32 %v3523, %v3208
        %v3588 = vmul.f32 %v3524, %v3210
        %v3589 = vmul.f32 %v3525, %v3321
        %v3590 = vmul.f32 %v3526, %v3323
        %v3591 = vmul.f32 %v3527, %v3214
        %v3592 = vmul.f32 %v3528, %v3216
        %v3593 = vmul.f32 %v3529, %v3327
        %v3594 = vmul.f32 %v3530, %v3329
        %v3595 = vmul.f32 %v3531, %v3218
        %v3596 = vmul.f32 %v3532, %v3220
        %v3597 = vmul.f32 %v3533, %v3331
        %v3598 = vmul.f32 %v3534, %v3333
        %v3599 = vmul.f32 %v3535, %v3224
        %v3600 = vmul.f32 %v3536, %v3226
        %v3601 = vmul.f32 %v3537, %v3337
        %v3602 = vmul.f32 %v3538, %v3339
        %v3603 = vmul.f32 %v3539, %v3228
        %v3604 = vmul.f32 %v3540, %v3230
        %v3605 = vmul.f32 %v3541, %v3341
        %v3606 = vmul.f32 %v3542, %v3343
        %v3607 = vmul.f32 %v3543, %v3234
        %v3608 = vmul.f32 %v3544, %v3236
        %v3609 = vmul.f32 %v3545, %v3347
        %v3610 = vmul.f32 %v3546, %v3349
        %v3611 = vmul.f32 %v3547, %v3238
        %v3612 = vmul.f32 %v3548, %v3240
        %v3613 = vmul.f32 %v3549, %v3351
        %v3614 = vmul.f32 %v3550, %v3353
        %v3615 = vmul.f32 %v3551, %v3244
        %v3616 = vmul.f32 %v3552, %v3246
        %v3617 = vmul.f32 %v3553, %v3357
        %v3618 = vmul.f32 %v3554, %v3359
        %v3619 = vmul.f32 %v3555, %v3248
        %v3620 = vmul.f32 %v3556, %v3250
        %v3621 = vmul.f32 %v3557, %v3361
        %v3622 = vmul.f32 %v3558, %v3363
        %v3623 = vmul.f32 %v3559, %v3254
        %v3624 = vmul.f32 %v3560, %v3256
        %v3625 = vmul.f32 %v3561, %v3367
        %v3626 = vmul.f32 %v3562, %v3369
        %v3627 = vmul.f32 %v3563, %v3258
        %v3628 = vmul.f32 %v3564, %v3260
        %v3629 = vmul.f32 %v3565, %v3371
        %v3630 = vmul.f32 %v3566, %v3373
        %v3631 = vadd.f32 %v3184, %v3567
        %v3632 = vadd.f32 %v3186, %v3568
        %v3633 = vadd.f32 %v3297, %v3569
        %v3634 = vadd.f32 %v3299, %v3570
        %v3635 = vadd.f32 %v3188, %v3571
        %v3636 = vadd.f32 %v3190, %v3572
        %v3637 = vadd.f32 %v3301, %v3573
        %v3638 = vadd.f32 %v3303, %v3574
        %v3639 = vadd.f32 %v3194, %v3575
        %v3640 = vadd.f32 %v3196, %v3576
        %v3641 = vadd.f32 %v3307, %v3577
        %v3642 = vadd.f32 %v3309, %v3578
        %v3643 = vadd.f32 %v3198, %v3579
        %v3644 = vadd.f32 %v3200, %v3580
        %v3645 = vadd.f32 %v3311, %v3581
        %v3646 = vadd.f32 %v3313, %v3582
        %v3647 = vadd.f32 %v3204, %v3583
        %v3648 = vadd.f32 %v3206, %v3584
        %v3649 = vadd.f32 %v3317, %v3585
        %v3650 = vadd.f32 %v3319, %v3586
        %v3651 = vadd.f32 %v3208, %v3587
        %v3652 = vadd.f32 %v3210, %v3588
        %v3653 = vadd.f32 %v3321, %v3589
        %v3654 = vadd.f32 %v3323, %v3590
        %v3655 = vadd.f32 %v3214, %v3591
        %v3656 = vadd.f32 %v3216, %v3592
        %v3657 = vadd.f32 %v3327, %v3593
        %v3658 = vadd.f32 %v3329, %v3594
        %v3659 = vadd.f32 %v3218, %v3595
        %v3660 = vadd.f32 %v3220, %v3596
        %v3661 = vadd.f32 %v3331, %v3597
        %v3662 = vadd.f32 %v3333, %v3598
        %v3663 = vadd.f32 %v3224, %v3599
        %v3664 = vadd.f32 %v3226, %v3600
        %v3665 = vadd.f32 %v3337, %v3601
        %v3666 = vadd.f32 %v3339, %v3602
        %v3667 = vadd.f32 %v3228, %v3603
        %v3668 = vadd.f32 %v3230, %v3604
        %v3669 = vadd.f32 %v3341, %v3605
        %v3670 = vadd.f32 %v3343, %v3606
        %v3671 = vadd.f32 %v3234, %v3607
        %v3672 = vadd.f32 %v3236, %v3608
        %v3673 = vadd.f32 %v3347, %v3609
        %v3674 = vadd.f32 %v3349, %v3610
        %v3675 = vadd.f32 %v3238, %v3611
        %v3676 = vadd.f32 %v3240, %v3612
        %v3677 = vadd.f32 %v3351, %v3613
        %v3678 = vadd.f32 %v3353, %v3614
        %v3679 = vadd.f32 %v3244, %v3615
        %v3680 = vadd.f32 %v3246, %v3616
        %v3681 = vadd.f32 %v3357, %v3617
        %v3682 = vadd.f32 %v3359, %v3618
        %v3683 = vadd.f32 %v3248, %v3619
        %v3684 = vadd.f32 %v3250, %v3620
        %v3685 = vadd.f32 %v3361, %v3621
        %v3686 = vadd.f32 %v3363, %v3622
        %v3687 = vadd.f32 %v3254, %v3623
        %v3688 = vadd.f32 %v3256, %v3624
        %v3689 = vadd.f32 %v3367, %v3625
        %v3690 = vadd.f32 %v3369, %v3626
        %v3691 = vadd.f32 %v3258, %v3627
        %v3692 = vadd.f32 %v3260, %v3628
        %v3693 = vadd.f32 %v3371, %v3629
        %v3694 = vadd.f32 %v3373, %v3630
        %v3695 = vmul.f32 %v3631, 0.7978846
        %v3696 = vmul.f32 %v3632, 0.7978846
        %v3697 = vmul.f32 %v3633, 0.7978846
        %v3698 = vmul.f32 %v3634, 0.7978846
        %v3699 = vmul.f32 %v3635, 0.7978846
        %v3700 = vmul.f32 %v3636, 0.7978846
        %v3701 = vmul.f32 %v3637, 0.7978846
        %v3702 = vmul.f32 %v3638, 0.7978846
        %v3703 = vmul.f32 %v3639, 0.7978846
        %v3704 = vmul.f32 %v3640, 0.7978846
        %v3705 = vmul.f32 %v3641, 0.7978846
        %v3706 = vmul.f32 %v3642, 0.7978846
        %v3707 = vmul.f32 %v3643, 0.7978846
        %v3708 = vmul.f32 %v3644, 0.7978846
        %v3709 = vmul.f32 %v3645, 0.7978846
        %v3710 = vmul.f32 %v3646, 0.7978846
        %v3711 = vmul.f32 %v3647, 0.7978846
        %v3712 = vmul.f32 %v3648, 0.7978846
        %v3713 = vmul.f32 %v3649, 0.7978846
        %v3714 = vmul.f32 %v3650, 0.7978846
        %v3715 = vmul.f32 %v3651, 0.7978846
        %v3716 = vmul.f32 %v3652, 0.7978846
        %v3717 = vmul.f32 %v3653, 0.7978846
        %v3718 = vmul.f32 %v3654, 0.7978846
        %v3719 = vmul.f32 %v3655, 0.7978846
        %v3720 = vmul.f32 %v3656, 0.7978846
        %v3721 = vmul.f32 %v3657, 0.7978846
        %v3722 = vmul.f32 %v3658, 0.7978846
        %v3723 = vmul.f32 %v3659, 0.7978846
        %v3724 = vmul.f32 %v3660, 0.7978846
        %v3725 = vmul.f32 %v3661, 0.7978846
        %v3726 = vmul.f32 %v3662, 0.7978846
        %v3727 = vmul.f32 %v3663, 0.7978846
        %v3728 = vmul.f32 %v3664, 0.7978846
        %v3729 = vmul.f32 %v3665, 0.7978846
        %v3730 = vmul.f32 %v3666, 0.7978846
        %v3731 = vmul.f32 %v3667, 0.7978846
        %v3732 = vmul.f32 %v3668, 0.7978846
        %v3733 = vmul.f32 %v3669, 0.7978846
        %v3734 = vmul.f32 %v3670, 0.7978846
        %v3735 = vmul.f32 %v3671, 0.7978846
        %v3736 = vmul.f32 %v3672, 0.7978846
        %v3737 = vmul.f32 %v3673, 0.7978846
        %v3738 = vmul.f32 %v3674, 0.7978846
        %v3739 = vmul.f32 %v3675, 0.7978846
        %v3740 = vmul.f32 %v3676, 0.7978846
        %v3741 = vmul.f32 %v3677, 0.7978846
        %v3742 = vmul.f32 %v3678, 0.7978846
        %v3743 = vmul.f32 %v3679, 0.7978846
        %v3744 = vmul.f32 %v3680, 0.7978846
        %v3745 = vmul.f32 %v3681, 0.7978846
        %v3746 = vmul.f32 %v3682, 0.7978846
        %v3747 = vmul.f32 %v3683, 0.7978846
        %v3748 = vmul.f32 %v3684, 0.7978846
        %v3749 = vmul.f32 %v3685, 0.7978846
        %v3750 = vmul.f32 %v3686, 0.7978846
        %v3751 = vmul.f32 %v3687, 0.7978846
        %v3752 = vmul.f32 %v3688, 0.7978846
        %v3753 = vmul.f32 %v3689, 0.7978846
        %v3754 = vmul.f32 %v3690, 0.7978846
        %v3755 = vmul.f32 %v3691, 0.7978846
        %v3756 = vmul.f32 %v3692, 0.7978846
        %v3757 = vmul.f32 %v3693, 0.7978846
        %v3758 = vmul.f32 %v3694, 0.7978846
        %v3759 = vtanh.pop %v3695
        %v3760 = vtanh.pop %v3696
        %v3761 = vtanh.pop %v3697
        %v3762 = vtanh.pop %v3698
        %v3763 = vtanh.pop %v3699
        %v3764 = vtanh.pop %v3700
        %v3765 = vtanh.pop %v3701
        %v3766 = vtanh.pop %v3702
        %v3767 = vtanh.pop %v3703
        %v3768 = vtanh.pop %v3704
        %v3769 = vtanh.pop %v3705
        %v3770 = vtanh.pop %v3706
        %v3771 = vtanh.pop %v3707
        %v3772 = vtanh.pop %v3708
        %v3773 = vtanh.pop %v3709
        %v3774 = vtanh.pop %v3710
        %v3775 = vtanh.pop %v3711
        %v3776 = vtanh.pop %v3712
        %v3777 = vtanh.pop %v3713
        %v3778 = vtanh.pop %v3714
        %v3779 = vtanh.pop %v3715
        %v3780 = vtanh.pop %v3716
        %v3781 = vtanh.pop %v3717
        %v3782 = vtanh.pop %v3718
        %v3783 = vtanh.pop %v3719
        %v3784 = vtanh.pop %v3720
        %v3785 = vtanh.pop %v3721
        %v3786 = vtanh.pop %v3722
        %v3787 = vtanh.pop %v3723
        %v3788 = vtanh.pop %v3724
        %v3789 = vtanh.pop %v3725
        %v3790 = vtanh.pop %v3726
        %v3791 = vtanh.pop %v3727
        %v3792 = vtanh.pop %v3728
        %v3793 = vtanh.pop %v3729
        %v3794 = vtanh.pop %v3730
        %v3795 = vtanh.pop %v3731
        %v3796 = vtanh.pop %v3732
        %v3797 = vtanh.pop %v3733
        %v3798 = vtanh.pop %v3734
        %v3799 = vtanh.pop %v3735
        %v3800 = vtanh.pop %v3736
        %v3801 = vtanh.pop %v3737
        %v3802 = vtanh.pop %v3738
        %v3803 = vtanh.pop %v3739
        %v3804 = vtanh.pop %v3740
        %v3805 = vtanh.pop %v3741
        %v3806 = vtanh.pop %v3742
        %v3807 = vtanh.pop %v3743
        %v3808 = vtanh.pop %v3744
        %v3809 = vtanh.pop %v3745
        %v3810 = vtanh.pop %v3746
        %v3811 = vtanh.pop %v3747
        %v3812 = vtanh.pop %v3748
        %v3813 = vtanh.pop %v3749
        %v3814 = vtanh.pop %v3750
        %v3815 = vtanh.pop %v3751
        %v3816 = vtanh.pop %v3752
        %v3817 = vtanh.pop %v3753
        %v3818 = vtanh.pop %v3754
        %v3819 = vtanh.pop %v3755
        %v3820 = vtanh.pop %v3756
        %v3821 = vtanh.pop %v3757
        %v3822 = vtanh.pop %v3758
        %v3823 = vadd.f32 %v3759, 1.0
        %v3824 = vadd.f32 %v3760, 1.0
        %v3825 = vadd.f32 %v3761, 1.0
        %v3826 = vadd.f32 %v3762, 1.0
        %v3827 = vadd.f32 %v3763, 1.0
        %v3828 = vadd.f32 %v3764, 1.0
        %v3829 = vadd.f32 %v3765, 1.0
        %v3830 = vadd.f32 %v3766, 1.0
        %v3831 = vadd.f32 %v3767, 1.0
        %v3832 = vadd.f32 %v3768, 1.0
        %v3833 = vadd.f32 %v3769, 1.0
        %v3834 = vadd.f32 %v3770, 1.0
        %v3835 = vadd.f32 %v3771, 1.0
        %v3836 = vadd.f32 %v3772, 1.0
        %v3837 = vadd.f32 %v3773, 1.0
        %v3838 = vadd.f32 %v3774, 1.0
        %v3839 = vadd.f32 %v3775, 1.0
        %v3840 = vadd.f32 %v3776, 1.0
        %v3841 = vadd.f32 %v3777, 1.0
        %v3842 = vadd.f32 %v3778, 1.0
        %v3843 = vadd.f32 %v3779, 1.0
        %v3844 = vadd.f32 %v3780, 1.0
        %v3845 = vadd.f32 %v3781, 1.0
        %v3846 = vadd.f32 %v3782, 1.0
        %v3847 = vadd.f32 %v3783, 1.0
        %v3848 = vadd.f32 %v3784, 1.0
        %v3849 = vadd.f32 %v3785, 1.0
        %v3850 = vadd.f32 %v3786, 1.0
        %v3851 = vadd.f32 %v3787, 1.0
        %v3852 = vadd.f32 %v3788, 1.0
        %v3853 = vadd.f32 %v3789, 1.0
        %v3854 = vadd.f32 %v3790, 1.0
        %v3855 = vadd.f32 %v3791, 1.0
        %v3856 = vadd.f32 %v3792, 1.0
        %v3857 = vadd.f32 %v3793, 1.0
        %v3858 = vadd.f32 %v3794, 1.0
        %v3859 = vadd.f32 %v3795, 1.0
        %v3860 = vadd.f32 %v3796, 1.0
        %v3861 = vadd.f32 %v3797, 1.0
        %v3862 = vadd.f32 %v3798, 1.0
        %v3863 = vadd.f32 %v3799, 1.0
        %v3864 = vadd.f32 %v3800, 1.0
        %v3865 = vadd.f32 %v3801, 1.0
        %v3866 = vadd.f32 %v3802, 1.0
        %v3867 = vadd.f32 %v3803, 1.0
        %v3868 = vadd.f32 %v3804, 1.0
        %v3869 = vadd.f32 %v3805, 1.0
        %v3870 = vadd.f32 %v3806, 1.0
        %v3871 = vadd.f32 %v3807, 1.0
        %v3872 = vadd.f32 %v3808, 1.0
        %v3873 = vadd.f32 %v3809, 1.0
        %v3874 = vadd.f32 %v3810, 1.0
        %v3875 = vadd.f32 %v3811, 1.0
        %v3876 = vadd.f32 %v3812, 1.0
        %v3877 = vadd.f32 %v3813, 1.0
        %v3878 = vadd.f32 %v3814, 1.0
        %v3879 = vadd.f32 %v3815, 1.0
        %v3880 = vadd.f32 %v3816, 1.0
        %v3881 = vadd.f32 %v3817, 1.0
        %v3882 = vadd.f32 %v3818, 1.0
        %v3883 = vadd.f32 %v3819, 1.0
        %v3884 = vadd.f32 %v3820, 1.0
        %v3885 = vadd.f32 %v3821, 1.0
        %v3886 = vadd.f32 %v3822, 1.0
        %v3887 = vmul.f32 %v3375, %v3823
        %v3888 = vmul.f32 %v3376, %v3824
        %v3889 = vmul.f32 %v3377, %v3825
        %v3890 = vmul.f32 %v3378, %v3826
        %v3891 = vmul.f32 %v3379, %v3827
        %v3892 = vmul.f32 %v3380, %v3828
        %v3893 = vmul.f32 %v3381, %v3829
        %v3894 = vmul.f32 %v3382, %v3830
        %v3895 = vmul.f32 %v3383, %v3831
        %v3896 = vmul.f32 %v3384, %v3832
        %v3897 = vmul.f32 %v3385, %v3833
        %v3898 = vmul.f32 %v3386, %v3834
        %v3899 = vmul.f32 %v3387, %v3835
        %v3900 = vmul.f32 %v3388, %v3836
        %v3901 = vmul.f32 %v3389, %v3837
        %v3902 = vmul.f32 %v3390, %v3838
        %v3903 = vmul.f32 %v3391, %v3839
        %v3904 = vmul.f32 %v3392, %v3840
        %v3905 = vmul.f32 %v3393, %v3841
        %v3906 = vmul.f32 %v3394, %v3842
        %v3907 = vmul.f32 %v3395, %v3843
        %v3908 = vmul.f32 %v3396, %v3844
        %v3909 = vmul.f32 %v3397, %v3845
        %v3910 = vmul.f32 %v3398, %v3846
        %v3911 = vmul.f32 %v3399, %v3847
        %v3912 = vmul.f32 %v3400, %v3848
        %v3913 = vmul.f32 %v3401, %v3849
        %v3914 = vmul.f32 %v3402, %v3850
        %v3915 = vmul.f32 %v3403, %v3851
        %v3916 = vmul.f32 %v3404, %v3852
        %v3917 = vmul.f32 %v3405, %v3853
        %v3918 = vmul.f32 %v3406, %v3854
        %v3919 = vmul.f32 %v3407, %v3855
        %v3920 = vmul.f32 %v3408, %v3856
        %v3921 = vmul.f32 %v3409, %v3857
        %v3922 = vmul.f32 %v3410, %v3858
        %v3923 = vmul.f32 %v3411, %v3859
        %v3924 = vmul.f32 %v3412, %v3860
        %v3925 = vmul.f32 %v3413, %v3861
        %v3926 = vmul.f32 %v3414, %v3862
        %v3927 = vmul.f32 %v3415, %v3863
        %v3928 = vmul.f32 %v3416, %v3864
        %v3929 = vmul.f32 %v3417, %v3865
        %v3930 = vmul.f32 %v3418, %v3866
        %v3931 = vmul.f32 %v3419, %v3867
        %v3932 = vmul.f32 %v3420, %v3868
        %v3933 = vmul.f32 %v3421, %v3869
        %v3934 = vmul.f32 %v3422, %v3870
        %v3935 = vmul.f32 %v3423, %v3871
        %v3936 = vmul.f32 %v3424, %v3872
        %v3937 = vmul.f32 %v3425, %v3873
        %v3938 = vmul.f32 %v3426, %v3874
        %v3939 = vmul.f32 %v3427, %v3875
        %v3940 = vmul.f32 %v3428, %v3876
        %v3941 = vmul.f32 %v3429, %v3877
        %v3942 = vmul.f32 %v3430, %v3878
        %v3943 = vmul.f32 %v3431, %v3879
        %v3944 = vmul.f32 %v3432, %v3880
        %v3945 = vmul.f32 %v3433, %v3881
        %v3946 = vmul.f32 %v3434, %v3882
        %v3947 = vmul.f32 %v3435, %v3883
        %v3948 = vmul.f32 %v3436, %v3884
        %v3949 = vmul.f32 %v3437, %v3885
        %v3950 = vmul.f32 %v3438, %v3886
        %v3951 = vpack.c.bf16 %v3891, %v3887
        %v3952 = vpack.c.bf16 %v3892, %v3888
        %v3953 = vpack.c.bf16 %v3893, %v3889
        %v3954 = vpack.c.bf16 %v3894, %v3890
        %v3955 = vpack.c.bf16 %v3899, %v3895
        %v3956 = vpack.c.bf16 %v3900, %v3896
        %v3957 = vpack.c.bf16 %v3901, %v3897
        %v3958 = vpack.c.bf16 %v3902, %v3898
        %v3959 = vpack.c.bf16 %v3907, %v3903
        %v3960 = vpack.c.bf16 %v3908, %v3904
        %v3961 = vpack.c.bf16 %v3909, %v3905
        %v3962 = vpack.c.bf16 %v3910, %v3906
        %v3963 = vpack.c.bf16 %v3915, %v3911
        %v3964 = vpack.c.bf16 %v3916, %v3912
        %v3965 = vpack.c.bf16 %v3917, %v3913
        %v3966 = vpack.c.bf16 %v3918, %v3914
        %v3967 = vpack.c.bf16 %v3923, %v3919
        %v3968 = vpack.c.bf16 %v3924, %v3920
        %v3969 = vpack.c.bf16 %v3925, %v3921
        %v3970 = vpack.c.bf16 %v3926, %v3922
        %v3971 = vpack.c.bf16 %v3931, %v3927
        %v3972 = vpack.c.bf16 %v3932, %v3928
        %v3973 = vpack.c.bf16 %v3933, %v3929
        %v3974 = vpack.c.bf16 %v3934, %v3930
        %v3975 = vpack.c.bf16 %v3939, %v3935
        %v3976 = vpack.c.bf16 %v3940, %v3936
        %v3977 = vpack.c.bf16 %v3941, %v3937
        %v3978 = vpack.c.bf16 %v3942, %v3938
        %v3979 = vpack.c.bf16 %v3947, %v3943
        %v3980 = vpack.c.bf16 %v3948, %v3944
        %v3981 = vpack.c.bf16 %v3949, %v3945
        %v3982 = vpack.c.bf16 %v3950, %v3946
        %v3983 = vld [vmem:[%s787] sm:$0xf]
        %v3984 = vld [vmem:[%s787 + $0x4] sm:$0xf]
        %v3985 = vld [vmem:[%s787 + $0x8] sm:$0xf]
        %v3986 = vld [vmem:[%s787 + $0xc] sm:$0xf]
        %v3987 = vld [vmem:[%s787 + $0x10] sm:$0xf]
        %v3988 = vld [vmem:[%s787 + $0x14] sm:$0xf]
        %v3989 = vld [vmem:[%s787 + $0x18] sm:$0xf]
        %v3990 = vld [vmem:[%s787 + $0x1c] sm:$0xf]
        %v3991 = vld [vmem:[%s787 + $0x20] sm:$0xf]
        %v3992 = vld [vmem:[%s787 + $0x24] sm:$0xf]
        %v3993 = vld [vmem:[%s787 + $0x28] sm:$0xf]
        %v3994 = vld [vmem:[%s787 + $0x2c] sm:$0xf]
        %v3995 = vld [vmem:[%s787 + $0x30] sm:$0xf]
        %v3996 = vld [vmem:[%s787 + $0x34] sm:$0xf]
        %v3997 = vld [vmem:[%s787 + $0x38] sm:$0xf]
        %v3998 = vld [vmem:[%s787 + $0x3c] sm:$0xf]
        %v3999 = vld [vmem:[%s787 + $0x40] sm:$0xf]
        %v4000 = vld [vmem:[%s787 + $0x44] sm:$0xf]
        %v4001 = vld [vmem:[%s787 + $0x48] sm:$0xf]
        %v4002 = vld [vmem:[%s787 + $0x4c] sm:$0xf]
        %v4003 = vld [vmem:[%s787 + $0x50] sm:$0xf]
        %v4004 = vld [vmem:[%s787 + $0x54] sm:$0xf]
        %v4005 = vld [vmem:[%s787 + $0x58] sm:$0xf]
        %v4006 = vld [vmem:[%s787 + $0x5c] sm:$0xf]
        %v4007 = vld [vmem:[%s787 + $0x60] sm:$0xf]
        %v4008 = vld [vmem:[%s787 + $0x64] sm:$0xf]
        %v4009 = vld [vmem:[%s787 + $0x68] sm:$0xf]
        %v4010 = vld [vmem:[%s787 + $0x6c] sm:$0xf]
        %v4011 = vld [vmem:[%s787 + $0x70] sm:$0xf]
        %v4012 = vld [vmem:[%s787 + $0x74] sm:$0xf]
        %v4013 = vld [vmem:[%s787 + $0x78] sm:$0xf]
        %v4014 = vld [vmem:[%s787 + $0x7c] sm:$0xf]
        %v4015 = vld [vmem:[%s787 + $0x80] sm:$0xf]
        %v4016 = vld [vmem:[%s787 + $0x84] sm:$0xf]
        %v4017 = vld [vmem:[%s787 + $0x88] sm:$0xf]
        %v4018 = vld [vmem:[%s787 + $0x8c] sm:$0xf]
        %v4019 = vld [vmem:[%s787 + $0x90] sm:$0xf]
        %v4020 = vld [vmem:[%s787 + $0x94] sm:$0xf]
        %v4021 = vld [vmem:[%s787 + $0x98] sm:$0xf]
        %v4022 = vld [vmem:[%s787 + $0x9c] sm:$0xf]
        %v4023 = vld [vmem:[%s787 + $0xa0] sm:$0xf]
        %v4024 = vld [vmem:[%s787 + $0xa4] sm:$0xf]
        %v4025 = vld [vmem:[%s787 + $0xa8] sm:$0xf]
        %v4026 = vld [vmem:[%s787 + $0xac] sm:$0xf]
        %v4027 = vld [vmem:[%s787 + $0xb0] sm:$0xf]
        %v4028 = vld [vmem:[%s787 + $0xb4] sm:$0xf]
        %v4029 = vld [vmem:[%s787 + $0xb8] sm:$0xf]
        %v4030 = vld [vmem:[%s787 + $0xbc] sm:$0xf]
        %v4031 = vld [vmem:[%s787 + $0xc0] sm:$0xf]
        %v4032 = vld [vmem:[%s787 + $0xc4] sm:$0xf]
        %v4033 = vld [vmem:[%s787 + $0xc8] sm:$0xf]
        %v4034 = vld [vmem:[%s787 + $0xcc] sm:$0xf]
        %v4035 = vld [vmem:[%s787 + $0xd0] sm:$0xf]
        %v4036 = vld [vmem:[%s787 + $0xd4] sm:$0xf]
        %v4037 = vld [vmem:[%s787 + $0xd8] sm:$0xf]
        %v4038 = vld [vmem:[%s787 + $0xdc] sm:$0xf]
        %v4039 = vld [vmem:[%s787 + $0xe0] sm:$0xf]
        %v4040 = vld [vmem:[%s787 + $0xe4] sm:$0xf]
        %v4041 = vld [vmem:[%s787 + $0xe8] sm:$0xf]
        %v4042 = vld [vmem:[%s787 + $0xec] sm:$0xf]
        %v4043 = vld [vmem:[%s787 + $0xf0] sm:$0xf]
        %v4044 = vld [vmem:[%s787 + $0xf4] sm:$0xf]
        %v4045 = vld [vmem:[%s787 + $0xf8] sm:$0xf]
        %v4046 = vld [vmem:[%s787 + $0xfc] sm:$0xf]
        %v4047 = vld [vmem:[%s790] sm:$0x1]
        %v4049 = vlaneseq
        %v4050 = vshrl.u32 %v4049, 7
        %v4051 = vsub.s32 0, %v4050
        %v4052 = vrot.slane %v4047, %v4051
        %v4118 = vunpack.c.l.b16 %v3983
        %v4119 = vunpack.c.l.b16 %v3984
        %v4120 = vunpack.c.l.b16 %v3985
        %v4121 = vunpack.c.l.b16 %v3986
        %v4122 = vunpack.c.l.b16 %v3987
        %v4123 = vunpack.c.l.b16 %v3988
        %v4124 = vunpack.c.l.b16 %v3989
        %v4125 = vunpack.c.l.b16 %v3990
        %v4126 = vunpack.c.l.b16 %v3991
        %v4127 = vunpack.c.l.b16 %v3992
        %v4128 = vunpack.c.l.b16 %v3993
        %v4129 = vunpack.c.l.b16 %v3994
        %v4130 = vunpack.c.l.b16 %v3995
        %v4131 = vunpack.c.l.b16 %v3996
        %v4132 = vunpack.c.l.b16 %v3997
        %v4133 = vunpack.c.l.b16 %v3998
        %v4134 = vunpack.c.l.b16 %v3999
        %v4135 = vunpack.c.l.b16 %v4000
        %v4136 = vunpack.c.l.b16 %v4001
        %v4137 = vunpack.c.l.b16 %v4002
        %v4138 = vunpack.c.l.b16 %v4003
        %v4139 = vunpack.c.l.b16 %v4004
        %v4140 = vunpack.c.l.b16 %v4005
        %v4141 = vunpack.c.l.b16 %v4006
        %v4142 = vunpack.c.l.b16 %v4007
        %v4143 = vunpack.c.l.b16 %v4008
        %v4144 = vunpack.c.l.b16 %v4009
        %v4145 = vunpack.c.l.b16 %v4010
        %v4146 = vunpack.c.l.b16 %v4011
        %v4147 = vunpack.c.l.b16 %v4012
        %v4148 = vunpack.c.l.b16 %v4013
        %v4149 = vunpack.c.l.b16 %v4014
        %v4150 = vunpack.c.l.b16 %v4015
        %v4151 = vunpack.c.l.b16 %v4016
        %v4152 = vunpack.c.l.b16 %v4017
        %v4153 = vunpack.c.l.b16 %v4018
        %v4154 = vunpack.c.l.b16 %v4019
        %v4155 = vunpack.c.l.b16 %v4020
        %v4156 = vunpack.c.l.b16 %v4021
        %v4157 = vunpack.c.l.b16 %v4022
        %v4158 = vunpack.c.l.b16 %v4023
        %v4159 = vunpack.c.l.b16 %v4024
        %v4160 = vunpack.c.l.b16 %v4025
        %v4161 = vunpack.c.l.b16 %v4026
        %v4162 = vunpack.c.l.b16 %v4027
        %v4163 = vunpack.c.l.b16 %v4028
        %v4164 = vunpack.c.l.b16 %v4029
        %v4165 = vunpack.c.l.b16 %v4030
        %v4166 = vunpack.c.l.b16 %v4031
        %v4167 = vunpack.c.l.b16 %v4032
        %v4168 = vunpack.c.l.b16 %v4033
        %v4169 = vunpack.c.l.b16 %v4034
        %v4170 = vunpack.c.l.b16 %v4035
        %v4171 = vunpack.c.l.b16 %v4036
        %v4172 = vunpack.c.l.b16 %v4037
        %v4173 = vunpack.c.l.b16 %v4038
        %v4174 = vunpack.c.l.b16 %v4039
        %v4175 = vunpack.c.l.b16 %v4040
        %v4176 = vunpack.c.l.b16 %v4041
        %v4177 = vunpack.c.l.b16 %v4042
        %v4178 = vunpack.c.l.b16 %v4043
        %v4179 = vunpack.c.l.b16 %v4044
        %v4180 = vunpack.c.l.b16 %v4045
        %v4181 = vunpack.c.l.b16 %v4046
        %v4182 = vpack.c.b16 %v4119, %v4118
        %v4183 = vpack.c.b16 %v4121, %v4120
        %v4184 = vpack.c.b16 %v4123, %v4122
        %v4185 = vpack.c.b16 %v4125, %v4124
        %v4186 = vpack.c.b16 %v4127, %v4126
        %v4187 = vpack.c.b16 %v4129, %v4128
        %v4188 = vpack.c.b16 %v4131, %v4130
        %v4189 = vpack.c.b16 %v4133, %v4132
        %v4190 = vpack.c.b16 %v4135, %v4134
        %v4191 = vpack.c.b16 %v4137, %v4136
        %v4192 = vpack.c.b16 %v4139, %v4138
        %v4193 = vpack.c.b16 %v4141, %v4140
        %v4194 = vpack.c.b16 %v4143, %v4142
        %v4195 = vpack.c.b16 %v4145, %v4144
        %v4196 = vpack.c.b16 %v4147, %v4146
        %v4197 = vpack.c.b16 %v4149, %v4148
        %v4198 = vpack.c.b16 %v4151, %v4150
        %v4199 = vpack.c.b16 %v4153, %v4152
        %v4200 = vpack.c.b16 %v4155, %v4154
        %v4201 = vpack.c.b16 %v4157, %v4156
        %v4202 = vpack.c.b16 %v4159, %v4158
        %v4203 = vpack.c.b16 %v4161, %v4160
        %v4204 = vpack.c.b16 %v4163, %v4162
        %v4205 = vpack.c.b16 %v4165, %v4164
        %v4206 = vpack.c.b16 %v4167, %v4166
        %v4207 = vpack.c.b16 %v4169, %v4168
        %v4208 = vpack.c.b16 %v4171, %v4170
        %v4209 = vpack.c.b16 %v4173, %v4172
        %v4210 = vpack.c.b16 %v4175, %v4174
        %v4211 = vpack.c.b16 %v4177, %v4176
        %v4212 = vpack.c.b16 %v4179, %v4178
        %v4213 = vpack.c.b16 %v4181, %v4180
        %4246 = vmatprep.subr.bf16.mxu0 0
        %4247 = vmatpush1.bf16.msra.mxu0 %v4182
        %4248 = vmatprep.subr.bf16.mxu0 0
        %4249 = vmatpush1.bf16.msra.mxu0 %v4183
        %4250 = vmatprep.subr.bf16.mxu0 0
        %4251 = vmatpush1.bf16.msra.mxu0 %v4184
        %4252 = vmatprep.subr.bf16.mxu0 0
        %4253 = vmatpush1.bf16.msra.mxu0 %v4185
        %4254 = vmatprep.subr.bf16.mxu0 0
        %4255 = vmatpush1.bf16.msra.mxu0 %v4186
        %4256 = vmatprep.subr.bf16.mxu0 0
        %4257 = vmatpush1.bf16.msra.mxu0 %v4187
        %4258 = vmatprep.subr.bf16.mxu0 0
        %4259 = vmatpush1.bf16.msra.mxu0 %v4188
        %4260 = vmatprep.subr.bf16.mxu0 0
        %4261 = vmatpush1.bf16.msra.mxu0 %v4189
        %4262 = vmatprep.subr.bf16.mxu0 0
        %4263 = vmatpush1.bf16.msra.mxu0 %v4190
        %4264 = vmatprep.subr.bf16.mxu0 0
        %4265 = vmatpush1.bf16.msra.mxu0 %v4191
        %4266 = vmatprep.subr.bf16.mxu0 0
        %4267 = vmatpush1.bf16.msra.mxu0 %v4192
        %4268 = vmatprep.subr.bf16.mxu0 0
        %4269 = vmatpush1.bf16.msra.mxu0 %v4193
        %4270 = vmatprep.subr.bf16.mxu0 0
        %4271 = vmatpush1.bf16.msra.mxu0 %v4194
        %4272 = vmatprep.subr.bf16.mxu0 0
        %4273 = vmatpush1.bf16.msra.mxu0 %v4195
        %4274 = vmatprep.subr.bf16.mxu0 0
        %4275 = vmatpush1.bf16.msra.mxu0 %v4196
        %4276 = vmatprep.subr.bf16.mxu0 0
        %4277 = vmatpush1.bf16.msra.mxu0 %v4197
        %4278 = vmatprep.mubr.bf16.mxu0 %v3952
        %4279 = vmatmul.mubr.bf16.gmra.mrb[0].mxu0 %v3951
        %v4280 = vpop.f32.mrb[0].mxu0
        %v4281 = vadd.f32 %v4052, %v4280
        %v4282 = vpop.f32.mrb[0].mxu0
        %v4283 = vpop.f32.mrb[0].mxu0
        %v4284 = vadd.f32 %v4052, %v4283
        %v4285 = vpop.f32.mrb[0].mxu0
        %4286 = vmatprep.mubr.bf16.mxu0 %v3956
        %4287 = vmatmul.mubr.bf16.gmra.mrb[0].mxu0 %v3955
        %v4288 = vpop.f32.mrb[0].mxu0
        %v4289 = vadd.f32 %v4052, %v4288
        %v4290 = vpop.f32.mrb[0].mxu0
        %v4291 = vpop.f32.mrb[0].mxu0
        %v4292 = vadd.f32 %v4052, %v4291
        %v4293 = vpop.f32.mrb[0].mxu0
        %4294 = vmatprep.mubr.bf16.mxu0 %v3960
        %4295 = vmatmul.mubr.bf16.gmra.mrb[0].mxu0 %v3959
        %v4296 = vpop.f32.mrb[0].mxu0
        %v4297 = vadd.f32 %v4052, %v4296
        %v4298 = vpop.f32.mrb[0].mxu0
        %v4299 = vpop.f32.mrb[0].mxu0
        %v4300 = vadd.f32 %v4052, %v4299
        %v4301 = vpop.f32.mrb[0].mxu0
        %4302 = vmatprep.mubr.bf16.mxu0 %v3964
        %4303 = vmatmul.mubr.bf16.gmra.mrb[0].mxu0 %v3963
        %v4304 = vpop.f32.mrb[0].mxu0
        %v4305 = vadd.f32 %v4052, %v4304
        %v4306 = vpop.f32.mrb[0].mxu0
        %v4307 = vpop.f32.mrb[0].mxu0
        %v4308 = vadd.f32 %v4052, %v4307
        %v4309 = vpop.f32.mrb[0].mxu0
        %4310 = vmatprep.mubr.bf16.mxu0 %v3968
        %4311 = vmatmul.mubr.bf16.gmra.mrb[0].mxu0 %v3967
        %v4312 = vpop.f32.mrb[0].mxu0
        %v4313 = vadd.f32 %v4052, %v4312
        %v4314 = vpop.f32.mrb[0].mxu0
        %v4315 = vpop.f32.mrb[0].mxu0
        %v4316 = vadd.f32 %v4052, %v4315
        %v4317 = vpop.f32.mrb[0].mxu0
        %4318 = vmatprep.mubr.bf16.mxu0 %v3972
        %4319 = vmatmul.mubr.bf16.gmra.mrb[0].mxu0 %v3971
        %v4320 = vpop.f32.mrb[0].mxu0
        %v4321 = vadd.f32 %v4052, %v4320
        %v4322 = vpop.f32.mrb[0].mxu0
        %v4323 = vpop.f32.mrb[0].mxu0
        %v4324 = vadd.f32 %v4052, %v4323
        %v4325 = vpop.f32.mrb[0].mxu0
        %4326 = vmatprep.mubr.bf16.mxu0 %v3976
        %4327 = vmatmul.mubr.bf16.gmra.mrb[0].mxu0 %v3975
        %v4328 = vpop.f32.mrb[0].mxu0
        %v4329 = vadd.f32 %v4052, %v4328
        %v4330 = vpop.f32.mrb[0].mxu0
        %v4331 = vpop.f32.mrb[0].mxu0
        %v4332 = vadd.f32 %v4052, %v4331
        %v4333 = vpop.f32.mrb[0].mxu0
        %4334 = vmatprep.mubr.bf16.mxu0 %v3980
        %4335 = vmatmul.mubr.bf16.gmra.mrb[0].mxu0 %v3979
        %v4336 = vpop.f32.mrb[0].mxu0
        %v4337 = vadd.f32 %v4052, %v4336
        %v4338 = vpop.f32.mrb[0].mxu0
        %v4339 = vpop.f32.mrb[0].mxu0
        %v4340 = vadd.f32 %v4052, %v4339
        %v4341 = vpop.f32.mrb[0].mxu0
        %4342 = vdwg.mxu0
        %4343 = vmatprep.subr.bf16.mxu0 0
        %4344 = vmatpush1.bf16.msra.mxu0 %v4198
        %4345 = vmatprep.subr.bf16.mxu0 0
        %4346 = vmatpush1.bf16.msra.mxu0 %v4199
        %4347 = vmatprep.subr.bf16.mxu0 0
        %4348 = vmatpush1.bf16.msra.mxu0 %v4200
        %4349 = vmatprep.subr.bf16.mxu0 0
        %4350 = vmatpush1.bf16.msra.mxu0 %v4201
        %4351 = vmatprep.subr.bf16.mxu0 0
        %4352 = vmatpush1.bf16.msra.mxu0 %v4202
        %4353 = vmatprep.subr.bf16.mxu0 0
        %4354 = vmatpush1.bf16.msra.mxu0 %v4203
        %4355 = vmatprep.subr.bf16.mxu0 0
        %4356 = vmatpush1.bf16.msra.mxu0 %v4204
        %4357 = vmatprep.subr.bf16.mxu0 0
        %4358 = vmatpush1.bf16.msra.mxu0 %v4205
        %4359 = vmatprep.subr.bf16.mxu0 0
        %4360 = vmatpush1.bf16.msra.mxu0 %v4206
        %4361 = vmatprep.subr.bf16.mxu0 0
        %4362 = vmatpush1.bf16.msra.mxu0 %v4207
        %4363 = vmatprep.subr.bf16.mxu0 0
        %4364 = vmatpush1.bf16.msra.mxu0 %v4208
        %4365 = vmatprep.subr.bf16.mxu0 0
        %4366 = vmatpush1.bf16.msra.mxu0 %v4209
        %4367 = vmatprep.subr.bf16.mxu0 0
        %4368 = vmatpush1.bf16.msra.mxu0 %v4210
        %4369 = vmatprep.subr.bf16.mxu0 0
        %4370 = vmatpush1.bf16.msra.mxu0 %v4211
        %4371 = vmatprep.subr.bf16.mxu0 0
        %4372 = vmatpush1.bf16.msra.mxu0 %v4212
        %4373 = vmatprep.subr.bf16.mxu0 0
        %4374 = vmatpush1.bf16.msra.mxu0 %v4213
        %4375 = vmatprep.mubr.bf16.mxu0 %v3954
        %4376 = vmatmul.mubr.bf16.gmra.mrb[0].mxu0 %v3953
        %v4377 = vpop.f32.mrb[0].mxu0
        %v4378 = vadd.f32 %v4281, %v4377
        %v4379 = vpop.f32.mrb[0].mxu0
        %v4380 = vpop.f32.mrb[0].mxu0
        %v4381 = vadd.f32 %v4284, %v4380
        %v4382 = vpop.f32.mrb[0].mxu0
        %4383 = vmatprep.mubr.bf16.mxu0 %v3958
        %4384 = vmatmul.mubr.bf16.gmra.mrb[0].mxu0 %v3957
        %v4385 = vpop.f32.mrb[0].mxu0
        %v4386 = vadd.f32 %v4289, %v4385
        %v4387 = vpop.f32.mrb[0].mxu0
        %v4388 = vpop.f32.mrb[0].mxu0
        %v4389 = vadd.f32 %v4292, %v4388
        %v4390 = vpop.f32.mrb[0].mxu0
        %4391 = vmatprep.mubr.bf16.mxu0 %v3962
        %4392 = vmatmul.mubr.bf16.gmra.mrb[0].mxu0 %v3961
        %v4393 = vpop.f32.mrb[0].mxu0
        %v4394 = vadd.f32 %v4297, %v4393
        %v4395 = vpop.f32.mrb[0].mxu0
        %v4396 = vpop.f32.mrb[0].mxu0
        %v4397 = vadd.f32 %v4300, %v4396
        %v4398 = vpop.f32.mrb[0].mxu0
        %4399 = vmatprep.mubr.bf16.mxu0 %v3966
        %4400 = vmatmul.mubr.bf16.gmra.mrb[0].mxu0 %v3965
        %v4401 = vpop.f32.mrb[0].mxu0
        %v4402 = vadd.f32 %v4305, %v4401
        %v4403 = vpop.f32.mrb[0].mxu0
        %v4404 = vpop.f32.mrb[0].mxu0
        %v4405 = vadd.f32 %v4308, %v4404
        %v4406 = vpop.f32.mrb[0].mxu0
        %4407 = vmatprep.mubr.bf16.mxu0 %v3970
        %4408 = vmatmul.mubr.bf16.gmra.mrb[0].mxu0 %v3969
        %v4409 = vpop.f32.mrb[0].mxu0
        %v4410 = vadd.f32 %v4313, %v4409
        %v4411 = vpop.f32.mrb[0].mxu0
        %v4412 = vpop.f32.mrb[0].mxu0
        %v4413 = vadd.f32 %v4316, %v4412
        %v4414 = vpop.f32.mrb[0].mxu0
        %4415 = vmatprep.mubr.bf16.mxu0 %v3974
        %4416 = vmatmul.mubr.bf16.gmra.mrb[0].mxu0 %v3973
        %v4417 = vpop.f32.mrb[0].mxu0
        %v4418 = vadd.f32 %v4321, %v4417
        %v4419 = vpop.f32.mrb[0].mxu0
        %v4420 = vpop.f32.mrb[0].mxu0
        %v4421 = vadd.f32 %v4324, %v4420
        %v4422 = vpop.f32.mrb[0].mxu0
        %4423 = vmatprep.mubr.bf16.mxu0 %v3978
        %4424 = vmatmul.mubr.bf16.gmra.mrb[0].mxu0 %v3977
        %v4425 = vpop.f32.mrb[0].mxu0
        %v4426 = vadd.f32 %v4329, %v4425
        %v4427 = vpop.f32.mrb[0].mxu0
        %v4428 = vpop.f32.mrb[0].mxu0
        %v4429 = vadd.f32 %v4332, %v4428
        %v4430 = vpop.f32.mrb[0].mxu0
        %4431 = vmatprep.mubr.bf16.mxu0 %v3982
        %4432 = vmatmul.mubr.bf16.gmra.mrb[0].mxu0 %v3981
        %v4433 = vpop.f32.mrb[0].mxu0
        %v4434 = vadd.f32 %v4337, %v4433
        %v4435 = vpop.f32.mrb[0].mxu0
        %v4436 = vpop.f32.mrb[0].mxu0
        %v4437 = vadd.f32 %v4340, %v4436
        %v4438 = vpop.f32.mrb[0].mxu0
        %4439 = vdwg.mxu0
        %v4440 = vadd.f32 %v2911, %v4378
        %v4441 = vadd.f32 %v2912, %v4381
        %v4442 = vadd.f32 %v2913, %v4386
        %v4443 = vadd.f32 %v2914, %v4389
        %v4444 = vadd.f32 %v2915, %v4394
        %v4445 = vadd.f32 %v2916, %v4397
        %v4446 = vadd.f32 %v2917, %v4402
        %v4447 = vadd.f32 %v2918, %v4405
        %v4448 = vadd.f32 %v2919, %v4410
        %v4449 = vadd.f32 %v2920, %v4413
        %v4450 = vadd.f32 %v2921, %v4418
        %v4451 = vadd.f32 %v2922, %v4421
        %v4452 = vadd.f32 %v2923, %v4426
        %v4453 = vadd.f32 %v2924, %v4429
        %v4454 = vadd.f32 %v2925, %v4434
        %v4455 = vadd.f32 %v2926, %v4437
        %v4456 = vld [vmem:[%s793] sm:$0x1]
        %v4457 = vld [vmem:[%s796] sm:$0x1]
        %4458 = vadd.xlane.f32.xlu0 %v4440
        %v4459 = vpop.xlane.xlu0 %4458
        %4460 = vadd.xlane.f32.xlu0 %v4441
        %v4461 = vpop.xlane.xlu0 %4460
        %4462 = vadd.xlane.f32.xlu0 %v4442
        %v4463 = vpop.xlane.xlu0 %4462
        %4464 = vadd.xlane.f32.xlu0 %v4443
        %v4465 = vpop.xlane.xlu0 %4464
        %4466 = vadd.xlane.f32.xlu0 %v4444
        %v4467 = vpop.xlane.xlu0 %4466
        %4468 = vadd.xlane.f32.xlu0 %v4445
        %v4469 = vpop.xlane.xlu0 %4468
        %4470 = vadd.xlane.f32.xlu0 %v4446
        %v4471 = vpop.xlane.xlu0 %4470
        %4472 = vadd.xlane.f32.xlu0 %v4447
        %v4473 = vpop.xlane.xlu0 %4472
        %4474 = vadd.xlane.f32.xlu0 %v4448
        %v4475 = vpop.xlane.xlu0 %4474
        %4476 = vadd.xlane.f32.xlu0 %v4449
        %v4477 = vpop.xlane.xlu0 %4476
        %4478 = vadd.xlane.f32.xlu0 %v4450
        %v4479 = vpop.xlane.xlu0 %4478
        %4480 = vadd.xlane.f32.xlu0 %v4451
        %v4481 = vpop.xlane.xlu0 %4480
        %4482 = vadd.xlane.f32.xlu0 %v4452
        %v4483 = vpop.xlane.xlu0 %4482
        %4484 = vadd.xlane.f32.xlu0 %v4453
        %v4485 = vpop.xlane.xlu0 %4484
        %4486 = vadd.xlane.f32.xlu0 %v4454
        %v4487 = vpop.xlane.xlu0 %4486
        %4488 = vadd.xlane.f32.xlu0 %v4455
        %v4489 = vpop.xlane.xlu0 %4488
        %v4490 = vmul.f32 %v4459, %v2738
        %v4491 = vmul.f32 %v4461, %v2738
        %v4492 = vmul.f32 %v4463, %v2738
        %v4493 = vmul.f32 %v4465, %v2738
        %v4494 = vmul.f32 %v4467, %v2738
        %v4495 = vmul.f32 %v4469, %v2738
        %v4496 = vmul.f32 %v4471, %v2738
        %v4497 = vmul.f32 %v4473, %v2738
        %v4498 = vmul.f32 %v4475, %v2738
        %v4499 = vmul.f32 %v4477, %v2738
        %v4500 = vmul.f32 %v4479, %v2738
        %v4501 = vmul.f32 %v4481, %v2738
        %v4502 = vmul.f32 %v4483, %v2738
        %v4503 = vmul.f32 %v4485, %v2738
        %v4504 = vmul.f32 %v4487, %v2738
        %v4505 = vmul.f32 %v4489, %v2738
        %v4506 = vsub.f32 %v4440, %v4490
        %v4507 = vsub.f32 %v4441, %v4491
        %v4508 = vsub.f32 %v4442, %v4492
        %v4509 = vsub.f32 %v4443, %v4493
        %v4510 = vsub.f32 %v4444, %v4494
        %v4511 = vsub.f32 %v4445, %v4495
        %v4512 = vsub.f32 %v4446, %v4496
        %v4513 = vsub.f32 %v4447, %v4497
        %v4514 = vsub.f32 %v4448, %v4498
        %v4515 = vsub.f32 %v4449, %v4499
        %v4516 = vsub.f32 %v4450, %v4500
        %v4517 = vsub.f32 %v4451, %v4501
        %v4518 = vsub.f32 %v4452, %v4502
        %v4519 = vsub.f32 %v4453, %v4503
        %v4520 = vsub.f32 %v4454, %v4504
        %v4521 = vsub.f32 %v4455, %v4505
        %v4522 = vmul.f32 %v4506, %v4506
        %v4523 = vmul.f32 %v4507, %v4507
        %v4524 = vmul.f32 %v4508, %v4508
        %v4525 = vmul.f32 %v4509, %v4509
        %v4526 = vmul.f32 %v4510, %v4510
        %v4527 = vmul.f32 %v4511, %v4511
        %v4528 = vmul.f32 %v4512, %v4512
        %v4529 = vmul.f32 %v4513, %v4513
        %v4530 = vmul.f32 %v4514, %v4514
        %v4531 = vmul.f32 %v4515, %v4515
        %v4532 = vmul.f32 %v4516, %v4516
        %v4533 = vmul.f32 %v4517, %v4517
        %v4534 = vmul.f32 %v4518, %v4518
        %v4535 = vmul.f32 %v4519, %v4519
        %v4536 = vmul.f32 %v4520, %v4520
        %v4537 = vmul.f32 %v4521, %v4521
        %4538 = vadd.xlane.f32.xlu0 %v4522
        %v4539 = vpop.xlane.xlu0 %4538
        %4540 = vadd.xlane.f32.xlu0 %v4523
        %v4541 = vpop.xlane.xlu0 %4540
        %4542 = vadd.xlane.f32.xlu0 %v4524
        %v4543 = vpop.xlane.xlu0 %4542
        %4544 = vadd.xlane.f32.xlu0 %v4525
        %v4545 = vpop.xlane.xlu0 %4544
        %4546 = vadd.xlane.f32.xlu0 %v4526
        %v4547 = vpop.xlane.xlu0 %4546
        %4548 = vadd.xlane.f32.xlu0 %v4527
        %v4549 = vpop.xlane.xlu0 %4548
        %4550 = vadd.xlane.f32.xlu0 %v4528
        %v4551 = vpop.xlane.xlu0 %4550
        %4552 = vadd.xlane.f32.xlu0 %v4529
        %v4553 = vpop.xlane.xlu0 %4552
        %4554 = vadd.xlane.f32.xlu0 %v4530
        %v4555 = vpop.xlane.xlu0 %4554
        %4556 = vadd.xlane.f32.xlu0 %v4531
        %v4557 = vpop.xlane.xlu0 %4556
        %4558 = vadd.xlane.f32.xlu0 %v4532
        %v4559 = vpop.xlane.xlu0 %4558
        %4560 = vadd.xlane.f32.xlu0 %v4533
        %v4561 = vpop.xlane.xlu0 %4560
        %4562 = vadd.xlane.f32.xlu0 %v4534
        %v4563 = vpop.xlane.xlu0 %4562
        %4564 = vadd.xlane.f32.xlu0 %v4535
        %v4565 = vpop.xlane.xlu0 %4564
        %4566 = vadd.xlane.f32.xlu0 %v4536
        %v4567 = vpop.xlane.xlu0 %4566
        %4568 = vadd.xlane.f32.xlu0 %v4537
        %v4569 = vpop.xlane.xlu0 %4568
        %v4570 = vmul.f32 %v4539, %v2738
        %v4571 = vmul.f32 %v4541, %v2738
        %v4572 = vmul.f32 %v4543, %v2738
        %v4573 = vmul.f32 %v4545, %v2738
        %v4574 = vmul.f32 %v4547, %v2738
        %v4575 = vmul.f32 %v4549, %v2738
        %v4576 = vmul.f32 %v4551, %v2738
        %v4577 = vmul.f32 %v4553, %v2738
        %v4578 = vmul.f32 %v4555, %v2738
        %v4579 = vmul.f32 %v4557, %v2738
        %v4580 = vmul.f32 %v4559, %v2738
        %v4581 = vmul.f32 %v4561, %v2738
        %v4582 = vmul.f32 %v4563, %v2738
        %v4583 = vmul.f32 %v4565, %v2738
        %v4584 = vmul.f32 %v4567, %v2738
        %v4585 = vmul.f32 %v4569, %v2738
        %v4586 = vadd.f32 %v4570, 1e-12
        %v4587 = vadd.f32 %v4571, 1e-12
        %v4588 = vadd.f32 %v4572, 1e-12
        %v4589 = vadd.f32 %v4573, 1e-12
        %v4590 = vadd.f32 %v4574, 1e-12
        %v4591 = vadd.f32 %v4575, 1e-12
        %v4592 = vadd.f32 %v4576, 1e-12
        %v4593 = vadd.f32 %v4577, 1e-12
        %v4594 = vadd.f32 %v4578, 1e-12
        %v4595 = vadd.f32 %v4579, 1e-12
        %v4596 = vadd.f32 %v4580, 1e-12
        %v4597 = vadd.f32 %v4581, 1e-12
        %v4598 = vadd.f32 %v4582, 1e-12
        %v4599 = vadd.f32 %v4583, 1e-12
        %v4600 = vadd.f32 %v4584, 1e-12
        %v4601 = vadd.f32 %v4585, 1e-12
        %v4602 = vrsqrt.pop %v4586
        %v4603 = vrsqrt.pop %v4587
        %v4604 = vrsqrt.pop %v4588
        %v4605 = vrsqrt.pop %v4589
        %v4606 = vrsqrt.pop %v4590
        %v4607 = vrsqrt.pop %v4591
        %v4608 = vrsqrt.pop %v4592
        %v4609 = vrsqrt.pop %v4593
        %v4610 = vrsqrt.pop %v4594
        %v4611 = vrsqrt.pop %v4595
        %v4612 = vrsqrt.pop %v4596
        %v4613 = vrsqrt.pop %v4597
        %v4614 = vrsqrt.pop %v4598
        %v4615 = vrsqrt.pop %v4599
        %v4616 = vrsqrt.pop %v4600
        %v4617 = vrsqrt.pop %v4601
        %v4618 = vmul.f32 %v4506, %v4602
        %v4619 = vmul.f32 %v4507, %v4603
        %v4620 = vmul.f32 %v4508, %v4604
        %v4621 = vmul.f32 %v4509, %v4605
        %v4622 = vmul.f32 %v4510, %v4606
        %v4623 = vmul.f32 %v4511, %v4607
        %v4624 = vmul.f32 %v4512, %v4608
        %v4625 = vmul.f32 %v4513, %v4609
        %v4626 = vmul.f32 %v4514, %v4610
        %v4627 = vmul.f32 %v4515, %v4611
        %v4628 = vmul.f32 %v4516, %v4612
        %v4629 = vmul.f32 %v4517, %v4613
        %v4630 = vmul.f32 %v4518, %v4614
        %v4631 = vmul.f32 %v4519, %v4615
        %v4632 = vmul.f32 %v4520, %v4616
        %v4633 = vmul.f32 %v4521, %v4617
        %v4635 = vlaneseq
        %v4636 = vshrl.u32 %v4635, 7
        %v4637 = vsub.s32 0, %v4636
        %v4638 = vrot.slane %v4456, %v4637
        %v4640 = vmul.f32 %v4618, %v4638
        %v4641 = vmul.f32 %v4619, %v4638
        %v4642 = vmul.f32 %v4620, %v4638
        %v4643 = vmul.f32 %v4621, %v4638
        %v4644 = vmul.f32 %v4622, %v4638
        %v4645 = vmul.f32 %v4623, %v4638
        %v4646 = vmul.f32 %v4624, %v4638
        %v4647 = vmul.f32 %v4625, %v4638
        %v4648 = vmul.f32 %v4626, %v4638
        %v4649 = vmul.f32 %v4627, %v4638
        %v4650 = vmul.f32 %v4628, %v4638
        %v4651 = vmul.f32 %v4629, %v4638
        %v4652 = vmul.f32 %v4630, %v4638
        %v4653 = vmul.f32 %v4631, %v4638
        %v4654 = vmul.f32 %v4632, %v4638
        %v4655 = vmul.f32 %v4633, %v4638
        %v4657 = vlaneseq
        %v4658 = vshrl.u32 %v4657, 7
        %v4659 = vsub.s32 0, %v4658
        %v4660 = vrot.slane %v4457, %v4659
        %v4662 = vadd.f32 %v4640, %v4660
        %v4663 = vadd.f32 %v4641, %v4660
        %v4664 = vadd.f32 %v4642, %v4660
        %v4665 = vadd.f32 %v4643, %v4660
        %v4666 = vadd.f32 %v4644, %v4660
        %v4667 = vadd.f32 %v4645, %v4660
        %v4668 = vadd.f32 %v4646, %v4660
        %v4669 = vadd.f32 %v4647, %v4660
        %v4670 = vadd.f32 %v4648, %v4660
        %v4671 = vadd.f32 %v4649, %v4660
        %v4672 = vadd.f32 %v4650, %v4660
        %v4673 = vadd.f32 %v4651, %v4660
        %v4674 = vadd.f32 %v4652, %v4660
        %v4675 = vadd.f32 %v4653, %v4660
        %v4676 = vadd.f32 %v4654, %v4660
        %v4677 = vadd.f32 %v4655, %v4660
        %4678 = vst [vmem:[#allocation2] sm:$0xff] %v4662
        %4679 = vst [vmem:[#allocation2 + $0x8] sm:$0xff] %v4663
        %4680 = vst [vmem:[#allocation2 + $0x10] sm:$0xff] %v4664
        %4681 = vst [vmem:[#allocation2 + $0x18] sm:$0xff] %v4665
        %4682 = vst [vmem:[#allocation2 + $0x20] sm:$0xff] %v4666
        %4683 = vst [vmem:[#allocation2 + $0x28] sm:$0xff] %v4667
        %4684 = vst [vmem:[#allocation2 + $0x30] sm:$0xff] %v4668
        %4685 = vst [vmem:[#allocation2 + $0x38] sm:$0xff] %v4669
        %4686 = vst [vmem:[#allocation2 + $0x40] sm:$0xff] %v4670
        %4687 = vst [vmem:[#allocation2 + $0x48] sm:$0xff] %v4671
        %4688 = vst [vmem:[#allocation2 + $0x50] sm:$0xff] %v4672
        %4689 = vst [vmem:[#allocation2 + $0x58] sm:$0xff] %v4673
        %4690 = vst [vmem:[#allocation2 + $0x60] sm:$0xff] %v4674
        %4691 = vst [vmem:[#allocation2 + $0x68] sm:$0xff] %v4675
        %4692 = vst [vmem:[#allocation2 + $0x70] sm:$0xff] %v4676
        %4693 = vst [vmem:[#allocation2 + $0x78] sm:$0xff] %v4677
        %p4694 = scmp.eq.s32.totalorder %s37, 1
        // Predicated region
        $region97: #{sent_bert_forward.1} parent=91 // pred_check
          %p4695 = pneg %p4694
        $region98: #{sent_bert_forward.1} parent=91 // pred_check_branch
          %4697 = sbr.rel (%p4695) target = $region100
        $region99: #{sent_bert_forward.1} parent=91 // pred_region
          %v4698 = vpack.c.bf16 %v4662, %v4662
          %v4699 = vld [vmem:[%s16] sm:$0xf]
          %v4700 = vld [vmem:[%s16 + $0x4] sm:$0xf]
          %v4701 = vld [vmem:[%s16 + $0x8] sm:$0xf]
          %v4702 = vld [vmem:[%s16 + $0xc] sm:$0xf]
          %v4703 = vld [vmem:[%s16 + $0x10] sm:$0xf]
          %v4704 = vld [vmem:[%s16 + $0x14] sm:$0xf]
          %v4705 = vld [vmem:[%s16 + $0x18] sm:$0xf]
          %v4706 = vld [vmem:[%s16 + $0x1c] sm:$0xf]
          %v4707 = vld [vmem:[%s16 + $0x20] sm:$0xf]
          %v4708 = vld [vmem:[%s16 + $0x24] sm:$0xf]
          %v4709 = vld [vmem:[%s16 + $0x28] sm:$0xf]
          %v4710 = vld [vmem:[%s16 + $0x2c] sm:$0xf]
          %v4711 = vld [vmem:[%s16 + $0x30] sm:$0xf]
          %v4712 = vld [vmem:[%s16 + $0x34] sm:$0xf]
          %v4713 = vld [vmem:[%s16 + $0x38] sm:$0xf]
          %v4714 = vld [vmem:[%s16 + $0x3c] sm:$0xf]
          %v4715 = vld [vmem:[%s17] sm:$0x1]
          %v4732 = vunpack.c.l.b16 %v4699
          %v4733 = vunpack.c.l.b16 %v4700
          %v4734 = vunpack.c.l.b16 %v4701
          %v4735 = vunpack.c.l.b16 %v4702
          %v4736 = vunpack.c.l.b16 %v4703
          %v4737 = vunpack.c.l.b16 %v4704
          %v4738 = vunpack.c.l.b16 %v4705
          %v4739 = vunpack.c.l.b16 %v4706
          %v4740 = vunpack.c.l.b16 %v4707
          %v4741 = vunpack.c.l.b16 %v4708
          %v4742 = vunpack.c.l.b16 %v4709
          %v4743 = vunpack.c.l.b16 %v4710
          %v4744 = vunpack.c.l.b16 %v4711
          %v4745 = vunpack.c.l.b16 %v4712
          %v4746 = vunpack.c.l.b16 %v4713
          %v4747 = vunpack.c.l.b16 %v4714
          %v4748 = vpack.c.b16 %v4733, %v4732
          %v4749 = vpack.c.b16 %v4735, %v4734
          %v4750 = vpack.c.b16 %v4737, %v4736
          %v4751 = vpack.c.b16 %v4739, %v4738
          %v4752 = vpack.c.b16 %v4741, %v4740
          %v4753 = vpack.c.b16 %v4743, %v4742
          %v4754 = vpack.c.b16 %v4745, %v4744
          %v4755 = vpack.c.b16 %v4747, %v4746
          %4764 = vmatprep.subr.bf16.mxu0 0
          %4765 = vmatpush1.bf16.msra.mxu0 %v4748
          %4766 = vmatprep.subr.bf16.mxu0 0
          %4767 = vmatpush1.bf16.msra.mxu0 %v4749
          %4768 = vmatprep.subr.bf16.mxu0 0
          %4769 = vmatpush1.bf16.msra.mxu0 %v4750
          %4770 = vmatprep.subr.bf16.mxu0 0
          %4771 = vmatpush1.bf16.msra.mxu0 %v4751
          %4772 = vmatprep.subr.bf16.mxu0 0
          %4773 = vmatpush1.bf16.msra.mxu0 %v4752
          %4774 = vmatprep.subr.bf16.mxu0 0
          %4775 = vmatpush1.bf16.msra.mxu0 %v4753
          %4776 = vmatprep.subr.bf16.mxu0 0
          %4777 = vmatpush1.bf16.msra.mxu0 %v4754
          %4778 = vmatprep.subr.bf16.mxu0 0
          %4779 = vmatpush1.bf16.msra.mxu0 %v4755
          %4780 = vmatprep.subr.bf16.mxu0 0
          %4781 = vmatpush1.bf16.msra.mxu0 0
          %4782 = vmatprep.subr.bf16.mxu0 0
          %4783 = vmatpush1.bf16.msra.mxu0 0
          %4784 = vmatprep.subr.bf16.mxu0 0
          %4785 = vmatpush1.bf16.msra.mxu0 0
          %4786 = vmatprep.subr.bf16.mxu0 0
          %4787 = vmatpush1.bf16.msra.mxu0 0
          %4788 = vmatprep.subr.bf16.mxu0 0
          %4789 = vmatpush1.bf16.msra.mxu0 0
          %4790 = vmatprep.subr.bf16.mxu0 0
          %4791 = vmatpush1.bf16.msra.mxu0 0
          %4792 = vmatprep.subr.bf16.mxu0 0
          %4793 = vmatpush1.bf16.msra.mxu0 0
          %4794 = vmatprep.subr.bf16.mxu0 0
          %4795 = vmatpush1.bf16.msra.mxu0 0
          %4796 = vmatprep.mubr.bf16.mxu0 0
          %4797 = vmatmul.mubr.bf16.gmra.mrb[0].mxu0 %v4698
          %v4798 = vpop.f32.mrb[0].mxu0
          %v4799 = vadd.f32 %v4715, %v4798
          %v4800 = vpop.f32.mrb[0].mxu0
          %v4801 = vpop.f32.mrb[0].mxu0
          %v4802 = vpop.f32.mrb[0].mxu0
          %4803 = vdwg.mxu0
          %v4804 = vtanh.pop %v4799
          %4805 = vst [vmem:[%s742] sm:$0x1] %v4804
        $region100: #{sent_bert_forward.1} parent=91 // pred_fallthru
          _
        %s4806 = sand.u32 %s500, 1
        %s4807 = scalar_lea.sflag [#allocation4], %s4806
        %s4808 = sand.u32 %s500, 1
        %s4809 = scalar_lea.vmem [#allocation3], %s4808
        // Predicated region
        $region101: #{sent_bert_forward.1} parent=91 // pred_check
          %p4810 = pneg %p510
        $region102: #{sent_bert_forward.1} parent=91 // pred_check_branch
          %4812 = sbr.rel (%p4810) target = $region104
        $region103: #{sent_bert_forward.1} parent=91 // pred_region
          %s4814 = ssub.s32 16, 16
          %4815 = vsyncadd %s4807, %s4814
          %s4816 = smul.addr %s36, 16
          %s4817 = scalar_lea.hbm %s18, %s4816
          %s4819 = sshll.u32 %s4809, 4
          %s4820 = int_to_ptr.vmem [resolvable:$true] %s4819
          %4822 = dma.vmem_to_hbm [thread:$0]  %s4820, 16, %s4817, %s4807
        $region104: #{sent_bert_forward.1} parent=91 // pred_fallthru
          _
      $region92: #{sent_bert_forward.1} parent=5 // pred_fallthru
        _
      %p4823 = scmp.le.s32.totalorder 2, %s27
      // Predicated region
      $region105: #{sent_bert_forward.1} parent=5 // pred_check
        %p4824 = pneg %p4823
      $region106: #{sent_bert_forward.1} parent=5 // pred_check_branch
        %4826 = sbr.rel (%p4824) target = $region108
      $region107: #{sent_bert_forward.1} parent=5 // pred_region
        %s4827 = ssub.s32 %s27, 2
        // Predicated region
        $region109: #{sent_bert_forward.1} parent=107 // pred_check
          %p4828 = pneg %p516
        $region110: #{sent_bert_forward.1} parent=107 // pred_check_branch
          %4830 = sbr.rel (%p4828) target = $region112
        $region111: #{sent_bert_forward.1} parent=107 // pred_region
          %s4831 = sand.u32 %s501, 1
          %s4832 = scalar_lea.sflag [#allocation4], %s4831
          %s4833 = sand.u32 %s501, 1
          %s4834 = scalar_lea.vmem [#allocation3], %s4833
          %4835 = dma.done %s4832, 16
        $region112: #{sent_bert_forward.1} parent=107 // pred_fallthru
          _
      $region108: #{sent_bert_forward.1} parent=5 // pred_fallthru
        _
    $region6: #{sent_bert_forward.1} parent=1 // loop_footer
      %s31 = sadd.s32 1, %s27
    $region7: #{sent_bert_forward.1} parent=1 // loop_footer_branch
      %26 = sbr.rel target = $region3
    $region8: #{sent_bert_forward.1} parent=1 // loop_exit
      _
    %4836 = vsyncpa [#allocation4], 1
    %s4837 = scalar_lea.sflag [#allocation4], 1
    %4838 = vsyncpa %s4837, 1

</llo_original>
